<compile_context>
chip_gen: v7x
topology: tpu7x:2x2x1
jax: 0.10.0
libtpu: 0.0.40
codegen_flags: <defaults>
</compile_context>

<pallas_src>
import functools

import jax
import jax.numpy as jnp
from jax.experimental import pallas as pl
from jax.experimental.pallas import tpu as pltpu


def _cat_bn_kernel(*refs, eps, channel_splits):
    """refs = (x_ref_0, ..., x_ref_{k-1}, gamma_ref, beta_ref, out_ref).

    x_ref_j : (C_j, L) block  -- one row per channel of input j
    gamma_ref, beta_ref : (C, 1) resident affine params
    out_ref : (C, L) output (concatenated channel order)
    """
    n_in = len(channel_splits)
    x_refs = refs[:n_in]
    g_ref = refs[n_in]
    b_ref = refs[n_in + 1]
    o_ref = refs[n_in + 2]

    off = 0
    for x_ref, ci in zip(x_refs, channel_splits):
        x = x_ref[...].astype(jnp.float32)                     # (ci, L)
        inv_l = 1.0 / x.shape[1]
        mean = jnp.sum(x, axis=1, keepdims=True) * inv_l       # (ci, 1)
        xc = x - mean
        var = jnp.sum(xc * xc, axis=1, keepdims=True) * inv_l  # biased var
        g = g_ref[off:off + ci, :].astype(jnp.float32)
        b = b_ref[off:off + ci, :].astype(jnp.float32)
        scale = jax.lax.rsqrt(var + eps) * g                   # (ci, 1)
        shift = b - mean * scale                               # (ci, 1)
        o_ref[off:off + ci, :] = (x * scale + shift).astype(o_ref.dtype)
        off += ci


def cat_batchnorm2d_pallas(inputs, gamma, beta, *, eps=1e-5):
    """cat(inputs, dim=1) followed by BatchNorm2d(C) (training-mode stats).

    inputs: list of NCHW tensors sharing N, H, W.
    """
    N, _, H, W = inputs[0].shape
    splits = tuple(int(x.shape[1]) for x in inputs)
    C = sum(splits)
    L = N * H * W
    dtype = inputs[0].dtype

    def to_cl(x):
        ci = x.shape[1]
        if N == 1:
            # (1, ci, H, W) -> (ci, H*W): pure reshape, no data movement.
            return x.reshape(ci, L)
        # General N: real transpose so each channel is one contiguous row.
        return jnp.transpose(x, (1, 0, 2, 3)).reshape(ci, L)

    x_cls = [to_cl(x) for x in inputs]

    in_specs = (
        [pl.BlockSpec((ci, L), lambda i: (0, 0)) for ci in splits]
        + [pl.BlockSpec((C, 1), lambda i: (0, 0)),   # gamma, resident
           pl.BlockSpec((C, 1), lambda i: (0, 0))]   # beta,  resident
    )

    out_cl = pl.pallas_call(
        functools.partial(_cat_bn_kernel, eps=eps, channel_splits=splits),
        out_shape=jax.ShapeDtypeStruct((C, L), dtype),
        grid=(1,),
        in_specs=in_specs,
        out_specs=pl.BlockSpec((C, L), lambda i: (0, 0)),
        compiler_params=pltpu.CompilerParams(
            dimension_semantics=("arbitrary",)),
    )(*x_cls, gamma.reshape(C, 1), beta.reshape(C, 1))

    if N == 1:
        return out_cl.reshape(1, C, H, W)
    return jnp.transpose(out_cl.reshape(C, N, H, W), (1, 0, 2, 3))


def module_m_forward(inputs, gamma, beta):
    """inputs: list of 12 NCHW tensors -> cat(dim=1) -> BatchNorm2d(480).

    The concat is fused into the Pallas kernel (no jnp.concatenate pass).
    """
    return cat_batchnorm2d_pallas(inputs, gamma, beta, eps=1e-5)


def _reference(inputs, gamma, beta, eps=1e-5):
    x = jnp.concatenate(inputs, axis=1)
    mean = jnp.mean(x, axis=(0, 2, 3), keepdims=True)
    var = jnp.mean((x - mean) ** 2, axis=(0, 2, 3), keepdims=True)
    g = gamma.reshape(1, -1, 1, 1)
    b = beta.reshape(1, -1, 1, 1)
    return (x - mean) * jax.lax.rsqrt(var + eps) * g + b


if __name__ == "__main__":
    key = jax.random.PRNGKey(0)
    N, H, W = 1, 28, 28
    # x51 has 128 channels, the other 11 tensors have 32 channels -> 480 total.
    chans = [128] + [32] * 11

    keys = jax.random.split(key, len(chans))
    inputs = [
        jax.random.normal(keys[i], (N, c, H, W), dtype=jnp.float32)
        for i, c in enumerate(chans)
    ]
    C = sum(chans)  # 480
    # Deterministic, non-trivial affine parameters.
    gamma = 1.0 + 0.01 * jnp.arange(C, dtype=jnp.float32)
    beta = 0.05 * jnp.sin(jnp.arange(C, dtype=jnp.float32))

    out = module_m_forward(inputs, gamma, beta)
    out = jax.block_until_ready(out)

    ref = _reference(inputs, gamma, beta)
    assert out.shape == (N, C, H, W), out.shape
    assert jnp.allclose(out, ref, atol=1e-4, rtol=1e-4), float(
        jnp.max(jnp.abs(out - ref)))

    print("KERNEL_OK")
</pallas_src>

<mosaic_0001>
module attributes {stable_mosaic.version = 11 : i64} {
  func.func @_cat_bn_kernel(%arg0: i32, %arg1: memref<128x784xf32, #tpu.memory_space<vmem>>, %arg2: memref<32x784xf32, #tpu.memory_space<vmem>>, %arg3: memref<32x784xf32, #tpu.memory_space<vmem>>, %arg4: memref<32x784xf32, #tpu.memory_space<vmem>>, %arg5: memref<32x784xf32, #tpu.memory_space<vmem>>, %arg6: memref<32x784xf32, #tpu.memory_space<vmem>>, %arg7: memref<32x784xf32, #tpu.memory_space<vmem>>, %arg8: memref<32x784xf32, #tpu.memory_space<vmem>>, %arg9: memref<32x784xf32, #tpu.memory_space<vmem>>, %arg10: memref<32x784xf32, #tpu.memory_space<vmem>>, %arg11: memref<32x784xf32, #tpu.memory_space<vmem>>, %arg12: memref<32x784xf32, #tpu.memory_space<vmem>>, %arg13: memref<480x1xf32, #tpu.memory_space<vmem>>, %arg14: memref<480x1xf32, #tpu.memory_space<vmem>>, %arg15: memref<480x784xf32, #tpu.memory_space<vmem>>) attributes {dimension_semantics = [#tpu.dimension_semantics<arbitrary>], iteration_bounds = array<i64: 1>, scalar_prefetch = 0 : i64, scratch_operands = 0 : i64, tpu.core_type = #tpu.core_type<tc>, window_params = [{pipeline_mode = #tpu.pipeline_mode<synchronous>, transform_indices = @transform_0, window_bounds = array<i64: 128, 784>}, {pipeline_mode = #tpu.pipeline_mode<synchronous>, transform_indices = @transform_1, window_bounds = array<i64: 32, 784>}, {pipeline_mode = #tpu.pipeline_mode<synchronous>, transform_indices = @transform_2, window_bounds = array<i64: 32, 784>}, {pipeline_mode = #tpu.pipeline_mode<synchronous>, transform_indices = @transform_3, window_bounds = array<i64: 32, 784>}, {pipeline_mode = #tpu.pipeline_mode<synchronous>, transform_indices = @transform_4, window_bounds = array<i64: 32, 784>}, {pipeline_mode = #tpu.pipeline_mode<synchronous>, transform_indices = @transform_5, window_bounds = array<i64: 32, 784>}, {pipeline_mode = #tpu.pipeline_mode<synchronous>, transform_indices = @transform_6, window_bounds = array<i64: 32, 784>}, {pipeline_mode = #tpu.pipeline_mode<synchronous>, transform_indices = @transform_7, window_bounds = array<i64: 32, 784>}, {pipeline_mode = #tpu.pipeline_mode<synchronous>, transform_indices = @transform_8, window_bounds = array<i64: 32, 784>}, {pipeline_mode = #tpu.pipeline_mode<synchronous>, transform_indices = @transform_9, window_bounds = array<i64: 32, 784>}, {pipeline_mode = #tpu.pipeline_mode<synchronous>, transform_indices = @transform_10, window_bounds = array<i64: 32, 784>}, {pipeline_mode = #tpu.pipeline_mode<synchronous>, transform_indices = @transform_11, window_bounds = array<i64: 32, 784>}, {pipeline_mode = #tpu.pipeline_mode<synchronous>, transform_indices = @transform_12, window_bounds = array<i64: 480, 1>}, {pipeline_mode = #tpu.pipeline_mode<synchronous>, transform_indices = @transform_13, window_bounds = array<i64: 480, 1>}, {pipeline_mode = #tpu.pipeline_mode<synchronous>, transform_indices = @transform_14, window_bounds = array<i64: 480, 784>}]} {
    %c0 = arith.constant 0 : index
    %c0_0 = arith.constant 0 : index
    %0 = vector.load %arg1[%c0, %c0_0] : memref<128x784xf32, #tpu.memory_space<vmem>>, vector<128x784xf32>
    %cst = arith.constant dense<0.000000e+00> : vector<128xf32>
    %1 = vector.multi_reduction <add>, %0, %cst [1] : vector<128x784xf32> to vector<128xf32>
    %2 = vector.shape_cast %1 : vector<128xf32> to vector<128x1xf32>
    %cst_1 = arith.constant 0.00127551018 : f32
    %3 = vector.broadcast %cst_1 : f32 to vector<128x1xf32>
    %4 = arith.mulf %2, %3 : vector<128x1xf32>
    %5 = vector.broadcast %4 : vector<128x1xf32> to vector<128x784xf32>
    %6 = arith.subf %0, %5 : vector<128x784xf32>
    %7 = arith.mulf %6, %6 : vector<128x784xf32>
    %cst_2 = arith.constant dense<0.000000e+00> : vector<128xf32>
    %8 = vector.multi_reduction <add>, %7, %cst_2 [1] : vector<128x784xf32> to vector<128xf32>
    %9 = vector.shape_cast %8 : vector<128xf32> to vector<128x1xf32>
    %cst_3 = arith.constant 0.00127551018 : f32
    %10 = vector.broadcast %cst_3 : f32 to vector<128x1xf32>
    %11 = arith.mulf %9, %10 : vector<128x1xf32>
    %c0_4 = arith.constant 0 : index
    %c0_5 = arith.constant 0 : index
    %12 = vector.load %arg13[%c0_4, %c0_5] : memref<480x1xf32, #tpu.memory_space<vmem>>, vector<128x1xf32>
    %c0_6 = arith.constant 0 : index
    %c0_7 = arith.constant 0 : index
    %13 = vector.load %arg14[%c0_6, %c0_7] : memref<480x1xf32, #tpu.memory_space<vmem>>, vector<128x1xf32>
    %cst_8 = arith.constant 9.99999974E-6 : f32
    %14 = vector.broadcast %cst_8 : f32 to vector<128x1xf32>
    %15 = arith.addf %11, %14 : vector<128x1xf32>
    %16 = math.rsqrt %15 : vector<128x1xf32>
    %17 = arith.mulf %16, %12 : vector<128x1xf32>
    %18 = arith.mulf %4, %17 : vector<128x1xf32>
    %19 = arith.subf %13, %18 : vector<128x1xf32>
    %20 = vector.broadcast %17 : vector<128x1xf32> to vector<128x784xf32>
    %21 = arith.mulf %0, %20 : vector<128x784xf32>
    %22 = vector.broadcast %19 : vector<128x1xf32> to vector<128x784xf32>
    %23 = arith.addf %21, %22 : vector<128x784xf32>
    %c0_9 = arith.constant 0 : index
    %c0_10 = arith.constant 0 : index
    %24 = vector.load %arg15[%c0_9, %c0_10] : memref<480x784xf32, #tpu.memory_space<vmem>>, vector<128x784xf32>
    tpu.vector_store %arg15[%c0_9, %c0_10], %23 {strides = array<i32>} : memref<480x784xf32, #tpu.memory_space<vmem>>, vector<128x784xf32>,
    %c0_11 = arith.constant 0 : index
    %c0_12 = arith.constant 0 : index
    %25 = vector.load %arg2[%c0_11, %c0_12] : memref<32x784xf32, #tpu.memory_space<vmem>>, vector<32x784xf32>
    %cst_13 = arith.constant dense<0.000000e+00> : vector<32xf32>
    %26 = vector.multi_reduction <add>, %25, %cst_13 [1] : vector<32x784xf32> to vector<32xf32>
    %27 = vector.shape_cast %26 : vector<32xf32> to vector<32x1xf32>
    %cst_14 = arith.constant 0.00127551018 : f32
    %28 = vector.broadcast %cst_14 : f32 to vector<32x1xf32>
    %29 = arith.mulf %27, %28 : vector<32x1xf32>
    %30 = vector.broadcast %29 : vector<32x1xf32> to vector<32x784xf32>
    %31 = arith.subf %25, %30 : vector<32x784xf32>
    %32 = arith.mulf %31, %31 : vector<32x784xf32>
    %cst_15 = arith.constant dense<0.000000e+00> : vector<32xf32>
    %33 = vector.multi_reduction <add>, %32, %cst_15 [1] : vector<32x784xf32> to vector<32xf32>
    %34 = vector.shape_cast %33 : vector<32xf32> to vector<32x1xf32>
    %cst_16 = arith.constant 0.00127551018 : f32
    %35 = vector.broadcast %cst_16 : f32 to vector<32x1xf32>
    %36 = arith.mulf %34, %35 : vector<32x1xf32>
    %c128 = arith.constant 128 : index
    %c0_17 = arith.constant 0 : index
    %37 = vector.load %arg13[%c128, %c0_17] : memref<480x1xf32, #tpu.memory_space<vmem>>, vector<32x1xf32>
    %c128_18 = arith.constant 128 : index
    %c0_19 = arith.constant 0 : index
    %38 = vector.load %arg14[%c128_18, %c0_19] : memref<480x1xf32, #tpu.memory_space<vmem>>, vector<32x1xf32>
    %cst_20 = arith.constant 9.99999974E-6 : f32
    %39 = vector.broadcast %cst_20 : f32 to vector<32x1xf32>
    %40 = arith.addf %36, %39 : vector<32x1xf32>
    %41 = math.rsqrt %40 : vector<32x1xf32>
    %42 = arith.mulf %41, %37 : vector<32x1xf32>
    %43 = arith.mulf %29, %42 : vector<32x1xf32>
    %44 = arith.subf %38, %43 : vector<32x1xf32>
    %45 = vector.broadcast %42 : vector<32x1xf32> to vector<32x784xf32>
    %46 = arith.mulf %25, %45 : vector<32x784xf32>
    %47 = vector.broadcast %44 : vector<32x1xf32> to vector<32x784xf32>
    %48 = arith.addf %46, %47 : vector<32x784xf32>
    %c128_21 = arith.constant 128 : index
    %c0_22 = arith.constant 0 : index
    %49 = vector.load %arg15[%c128_21, %c0_22] : memref<480x784xf32, #tpu.memory_space<vmem>>, vector<32x784xf32>
    tpu.vector_store %arg15[%c128_21, %c0_22], %48 {strides = array<i32>} : memref<480x784xf32, #tpu.memory_space<vmem>>, vector<32x784xf32>,
    %c0_23 = arith.constant 0 : index
    %c0_24 = arith.constant 0 : index
    %50 = vector.load %arg3[%c0_23, %c0_24] : memref<32x784xf32, #tpu.memory_space<vmem>>, vector<32x784xf32>
    %cst_25 = arith.constant dense<0.000000e+00> : vector<32xf32>
    %51 = vector.multi_reduction <add>, %50, %cst_25 [1] : vector<32x784xf32> to vector<32xf32>
    %52 = vector.shape_cast %51 : vector<32xf32> to vector<32x1xf32>
    %cst_26 = arith.constant 0.00127551018 : f32
    %53 = vector.broadcast %cst_26 : f32 to vector<32x1xf32>
    %54 = arith.mulf %52, %53 : vector<32x1xf32>
    %55 = vector.broadcast %54 : vector<32x1xf32> to vector<32x784xf32>
    %56 = arith.subf %50, %55 : vector<32x784xf32>
    %57 = arith.mulf %56, %56 : vector<32x784xf32>
    %cst_27 = arith.constant dense<0.000000e+00> : vector<32xf32>
    %58 = vector.multi_reduction <add>, %57, %cst_27 [1] : vector<32x784xf32> to vector<32xf32>
    %59 = vector.shape_cast %58 : vector<32xf32> to vector<32x1xf32>
    %cst_28 = arith.constant 0.00127551018 : f32
    %60 = vector.broadcast %cst_28 : f32 to vector<32x1xf32>
    %61 = arith.mulf %59, %60 : vector<32x1xf32>
    %c160 = arith.constant 160 : index
    %c0_29 = arith.constant 0 : index
    %62 = vector.load %arg13[%c160, %c0_29] : memref<480x1xf32, #tpu.memory_space<vmem>>, vector<32x1xf32>
    %c160_30 = arith.constant 160 : index
    %c0_31 = arith.constant 0 : index
    %63 = vector.load %arg14[%c160_30, %c0_31] : memref<480x1xf32, #tpu.memory_space<vmem>>, vector<32x1xf32>
    %cst_32 = arith.constant 9.99999974E-6 : f32
    %64 = vector.broadcast %cst_32 : f32 to vector<32x1xf32>
    %65 = arith.addf %61, %64 : vector<32x1xf32>
    %66 = math.rsqrt %65 : vector<32x1xf32>
    %67 = arith.mulf %66, %62 : vector<32x1xf32>
    %68 = arith.mulf %54, %67 : vector<32x1xf32>
    %69 = arith.subf %63, %68 : vector<32x1xf32>
    %70 = vector.broadcast %67 : vector<32x1xf32> to vector<32x784xf32>
    %71 = arith.mulf %50, %70 : vector<32x784xf32>
    %72 = vector.broadcast %69 : vector<32x1xf32> to vector<32x784xf32>
    %73 = arith.addf %71, %72 : vector<32x784xf32>
    %c160_33 = arith.constant 160 : index
    %c0_34 = arith.constant 0 : index
    %74 = vector.load %arg15[%c160_33, %c0_34] : memref<480x784xf32, #tpu.memory_space<vmem>>, vector<32x784xf32>
    tpu.vector_store %arg15[%c160_33, %c0_34], %73 {strides = array<i32>} : memref<480x784xf32, #tpu.memory_space<vmem>>, vector<32x784xf32>,
    %c0_35 = arith.constant 0 : index
    %c0_36 = arith.constant 0 : index
    %75 = vector.load %arg4[%c0_35, %c0_36] : memref<32x784xf32, #tpu.memory_space<vmem>>, vector<32x784xf32>
    %cst_37 = arith.constant dense<0.000000e+00> : vector<32xf32>
    %76 = vector.multi_reduction <add>, %75, %cst_37 [1] : vector<32x784xf32> to vector<32xf32>
    %77 = vector.shape_cast %76 : vector<32xf32> to vector<32x1xf32>
    %cst_38 = arith.constant 0.00127551018 : f32
    %78 = vector.broadcast %cst_38 : f32 to vector<32x1xf32>
    %79 = arith.mulf %77, %78 : vector<32x1xf32>
    %80 = vector.broadcast %79 : vector<32x1xf32> to vector<32x784xf32>
    %81 = arith.subf %75, %80 : vector<32x784xf32>
    %82 = arith.mulf %81, %81 : vector<32x784xf32>
    %cst_39 = arith.constant dense<0.000000e+00> : vector<32xf32>
    %83 = vector.multi_reduction <add>, %82, %cst_39 [1] : vector<32x784xf32> to vector<32xf32>
    %84 = vector.shape_cast %83 : vector<32xf32> to vector<32x1xf32>
    %cst_40 = arith.constant 0.00127551018 : f32
    %85 = vector.broadcast %cst_40 : f32 to vector<32x1xf32>
    %86 = arith.mulf %84, %85 : vector<32x1xf32>
    %c192 = arith.constant 192 : index
    %c0_41 = arith.constant 0 : index
    %87 = vector.load %arg13[%c192, %c0_41] : memref<480x1xf32, #tpu.memory_space<vmem>>, vector<32x1xf32>
    %c192_42 = arith.constant 192 : index
    %c0_43 = arith.constant 0 : index
    %88 = vector.load %arg14[%c192_42, %c0_43] : memref<480x1xf32, #tpu.memory_space<vmem>>, vector<32x1xf32>
    %cst_44 = arith.constant 9.99999974E-6 : f32
    %89 = vector.broadcast %cst_44 : f32 to vector<32x1xf32>
    %90 = arith.addf %86, %89 : vector<32x1xf32>
    %91 = math.rsqrt %90 : vector<32x1xf32>
    %92 = arith.mulf %91, %87 : vector<32x1xf32>
    %93 = arith.mulf %79, %92 : vector<32x1xf32>
    %94 = arith.subf %88, %93 : vector<32x1xf32>
    %95 = vector.broadcast %92 : vector<32x1xf32> to vector<32x784xf32>
    %96 = arith.mulf %75, %95 : vector<32x784xf32>
    %97 = vector.broadcast %94 : vector<32x1xf32> to vector<32x784xf32>
    %98 = arith.addf %96, %97 : vector<32x784xf32>
    %c192_45 = arith.constant 192 : index
    %c0_46 = arith.constant 0 : index
    %99 = vector.load %arg15[%c192_45, %c0_46] : memref<480x784xf32, #tpu.memory_space<vmem>>, vector<32x784xf32>
    tpu.vector_store %arg15[%c192_45, %c0_46], %98 {strides = array<i32>} : memref<480x784xf32, #tpu.memory_space<vmem>>, vector<32x784xf32>,
    %c0_47 = arith.constant 0 : index
    %c0_48 = arith.constant 0 : index
    %100 = vector.load %arg5[%c0_47, %c0_48] : memref<32x784xf32, #tpu.memory_space<vmem>>, vector<32x784xf32>
    %cst_49 = arith.constant dense<0.000000e+00> : vector<32xf32>
    %101 = vector.multi_reduction <add>, %100, %cst_49 [1] : vector<32x784xf32> to vector<32xf32>
    %102 = vector.shape_cast %101 : vector<32xf32> to vector<32x1xf32>
    %cst_50 = arith.constant 0.00127551018 : f32
    %103 = vector.broadcast %cst_50 : f32 to vector<32x1xf32>
    %104 = arith.mulf %102, %103 : vector<32x1xf32>
    %105 = vector.broadcast %104 : vector<32x1xf32> to vector<32x784xf32>
    %106 = arith.subf %100, %105 : vector<32x784xf32>
    %107 = arith.mulf %106, %106 : vector<32x784xf32>
    %cst_51 = arith.constant dense<0.000000e+00> : vector<32xf32>
    %108 = vector.multi_reduction <add>, %107, %cst_51 [1] : vector<32x784xf32> to vector<32xf32>
    %109 = vector.shape_cast %108 : vector<32xf32> to vector<32x1xf32>
    %cst_52 = arith.constant 0.00127551018 : f32
    %110 = vector.broadcast %cst_52 : f32 to vector<32x1xf32>
    %111 = arith.mulf %109, %110 : vector<32x1xf32>
    %c224 = arith.constant 224 : index
    %c0_53 = arith.constant 0 : index
    %112 = vector.load %arg13[%c224, %c0_53] : memref<480x1xf32, #tpu.memory_space<vmem>>, vector<32x1xf32>
    %c224_54 = arith.constant 224 : index
    %c0_55 = arith.constant 0 : index
    %113 = vector.load %arg14[%c224_54, %c0_55] : memref<480x1xf32, #tpu.memory_space<vmem>>, vector<32x1xf32>
    %cst_56 = arith.constant 9.99999974E-6 : f32
    %114 = vector.broadcast %cst_56 : f32 to vector<32x1xf32>
    %115 = arith.addf %111, %114 : vector<32x1xf32>
    %116 = math.rsqrt %115 : vector<32x1xf32>
    %117 = arith.mulf %116, %112 : vector<32x1xf32>
    %118 = arith.mulf %104, %117 : vector<32x1xf32>
    %119 = arith.subf %113, %118 : vector<32x1xf32>
    %120 = vector.broadcast %117 : vector<32x1xf32> to vector<32x784xf32>
    %121 = arith.mulf %100, %120 : vector<32x784xf32>
    %122 = vector.broadcast %119 : vector<32x1xf32> to vector<32x784xf32>
    %123 = arith.addf %121, %122 : vector<32x784xf32>
    %c224_57 = arith.constant 224 : index
    %c0_58 = arith.constant 0 : index
    %124 = vector.load %arg15[%c224_57, %c0_58] : memref<480x784xf32, #tpu.memory_space<vmem>>, vector<32x784xf32>
    tpu.vector_store %arg15[%c224_57, %c0_58], %123 {strides = array<i32>} : memref<480x784xf32, #tpu.memory_space<vmem>>, vector<32x784xf32>,
    %c0_59 = arith.constant 0 : index
    %c0_60 = arith.constant 0 : index
    %125 = vector.load %arg6[%c0_59, %c0_60] : memref<32x784xf32, #tpu.memory_space<vmem>>, vector<32x784xf32>
    %cst_61 = arith.constant dense<0.000000e+00> : vector<32xf32>
    %126 = vector.multi_reduction <add>, %125, %cst_61 [1] : vector<32x784xf32> to vector<32xf32>
    %127 = vector.shape_cast %126 : vector<32xf32> to vector<32x1xf32>
    %cst_62 = arith.constant 0.00127551018 : f32
    %128 = vector.broadcast %cst_62 : f32 to vector<32x1xf32>
    %129 = arith.mulf %127, %128 : vector<32x1xf32>
    %130 = vector.broadcast %129 : vector<32x1xf32> to vector<32x784xf32>
    %131 = arith.subf %125, %130 : vector<32x784xf32>
    %132 = arith.mulf %131, %131 : vector<32x784xf32>
    %cst_63 = arith.constant dense<0.000000e+00> : vector<32xf32>
    %133 = vector.multi_reduction <add>, %132, %cst_63 [1] : vector<32x784xf32> to vector<32xf32>
    %134 = vector.shape_cast %133 : vector<32xf32> to vector<32x1xf32>
    %cst_64 = arith.constant 0.00127551018 : f32
    %135 = vector.broadcast %cst_64 : f32 to vector<32x1xf32>
    %136 = arith.mulf %134, %135 : vector<32x1xf32>
    %c256 = arith.constant 256 : index
    %c0_65 = arith.constant 0 : index
    %137 = vector.load %arg13[%c256, %c0_65] : memref<480x1xf32, #tpu.memory_space<vmem>>, vector<32x1xf32>
    %c256_66 = arith.constant 256 : index
    %c0_67 = arith.constant 0 : index
    %138 = vector.load %arg14[%c256_66, %c0_67] : memref<480x1xf32, #tpu.memory_space<vmem>>, vector<32x1xf32>
    %cst_68 = arith.constant 9.99999974E-6 : f32
    %139 = vector.broadcast %cst_68 : f32 to vector<32x1xf32>
    %140 = arith.addf %136, %139 : vector<32x1xf32>
    %141 = math.rsqrt %140 : vector<32x1xf32>
    %142 = arith.mulf %141, %137 : vector<32x1xf32>
    %143 = arith.mulf %129, %142 : vector<32x1xf32>
    %144 = arith.subf %138, %143 : vector<32x1xf32>
    %145 = vector.broadcast %142 : vector<32x1xf32> to vector<32x784xf32>
    %146 = arith.mulf %125, %145 : vector<32x784xf32>
    %147 = vector.broadcast %144 : vector<32x1xf32> to vector<32x784xf32>
    %148 = arith.addf %146, %147 : vector<32x784xf32>
    %c256_69 = arith.constant 256 : index
    %c0_70 = arith.constant 0 : index
    %149 = vector.load %arg15[%c256_69, %c0_70] : memref<480x784xf32, #tpu.memory_space<vmem>>, vector<32x784xf32>
    tpu.vector_store %arg15[%c256_69, %c0_70], %148 {strides = array<i32>} : memref<480x784xf32, #tpu.memory_space<vmem>>, vector<32x784xf32>,
    %c0_71 = arith.constant 0 : index
    %c0_72 = arith.constant 0 : index
    %150 = vector.load %arg7[%c0_71, %c0_72] : memref<32x784xf32, #tpu.memory_space<vmem>>, vector<32x784xf32>
    %cst_73 = arith.constant dense<0.000000e+00> : vector<32xf32>
    %151 = vector.multi_reduction <add>, %150, %cst_73 [1] : vector<32x784xf32> to vector<32xf32>
    %152 = vector.shape_cast %151 : vector<32xf32> to vector<32x1xf32>
    %cst_74 = arith.constant 0.00127551018 : f32
    %153 = vector.broadcast %cst_74 : f32 to vector<32x1xf32>
    %154 = arith.mulf %152, %153 : vector<32x1xf32>
    %155 = vector.broadcast %154 : vector<32x1xf32> to vector<32x784xf32>
    %156 = arith.subf %150, %155 : vector<32x784xf32>
    %157 = arith.mulf %156, %156 : vector<32x784xf32>
    %cst_75 = arith.constant dense<0.000000e+00> : vector<32xf32>
    %158 = vector.multi_reduction <add>, %157, %cst_75 [1] : vector<32x784xf32> to vector<32xf32>
    %159 = vector.shape_cast %158 : vector<32xf32> to vector<32x1xf32>
    %cst_76 = arith.constant 0.00127551018 : f32
    %160 = vector.broadcast %cst_76 : f32 to vector<32x1xf32>
    %161 = arith.mulf %159, %160 : vector<32x1xf32>
    %c288 = arith.constant 288 : index
    %c0_77 = arith.constant 0 : index
    %162 = vector.load %arg13[%c288, %c0_77] : memref<480x1xf32, #tpu.memory_space<vmem>>, vector<32x1xf32>
    %c288_78 = arith.constant 288 : index
    %c0_79 = arith.constant 0 : index
    %163 = vector.load %arg14[%c288_78, %c0_79] : memref<480x1xf32, #tpu.memory_space<vmem>>, vector<32x1xf32>
    %cst_80 = arith.constant 9.99999974E-6 : f32
    %164 = vector.broadcast %cst_80 : f32 to vector<32x1xf32>
    %165 = arith.addf %161, %164 : vector<32x1xf32>
    %166 = math.rsqrt %165 : vector<32x1xf32>
    %167 = arith.mulf %166, %162 : vector<32x1xf32>
    %168 = arith.mulf %154, %167 : vector<32x1xf32>
    %169 = arith.subf %163, %168 : vector<32x1xf32>
    %170 = vector.broadcast %167 : vector<32x1xf32> to vector<32x784xf32>
    %171 = arith.mulf %150, %170 : vector<32x784xf32>
    %172 = vector.broadcast %169 : vector<32x1xf32> to vector<32x784xf32>
    %173 = arith.addf %171, %172 : vector<32x784xf32>
    %c288_81 = arith.constant 288 : index
    %c0_82 = arith.constant 0 : index
    %174 = vector.load %arg15[%c288_81, %c0_82] : memref<480x784xf32, #tpu.memory_space<vmem>>, vector<32x784xf32>
    tpu.vector_store %arg15[%c288_81, %c0_82], %173 {strides = array<i32>} : memref<480x784xf32, #tpu.memory_space<vmem>>, vector<32x784xf32>,
    %c0_83 = arith.constant 0 : index
    %c0_84 = arith.constant 0 : index
    %175 = vector.load %arg8[%c0_83, %c0_84] : memref<32x784xf32, #tpu.memory_space<vmem>>, vector<32x784xf32>
    %cst_85 = arith.constant dense<0.000000e+00> : vector<32xf32>
    %176 = vector.multi_reduction <add>, %175, %cst_85 [1] : vector<32x784xf32> to vector<32xf32>
    %177 = vector.shape_cast %176 : vector<32xf32> to vector<32x1xf32>
    %cst_86 = arith.constant 0.00127551018 : f32
    %178 = vector.broadcast %cst_86 : f32 to vector<32x1xf32>
    %179 = arith.mulf %177, %178 : vector<32x1xf32>
    %180 = vector.broadcast %179 : vector<32x1xf32> to vector<32x784xf32>
    %181 = arith.subf %175, %180 : vector<32x784xf32>
    %182 = arith.mulf %181, %181 : vector<32x784xf32>
    %cst_87 = arith.constant dense<0.000000e+00> : vector<32xf32>
    %183 = vector.multi_reduction <add>, %182, %cst_87 [1] : vector<32x784xf32> to vector<32xf32>
    %184 = vector.shape_cast %183 : vector<32xf32> to vector<32x1xf32>
    %cst_88 = arith.constant 0.00127551018 : f32
    %185 = vector.broadcast %cst_88 : f32 to vector<32x1xf32>
    %186 = arith.mulf %184, %185 : vector<32x1xf32>
    %c320 = arith.constant 320 : index
    %c0_89 = arith.constant 0 : index
    %187 = vector.load %arg13[%c320, %c0_89] : memref<480x1xf32, #tpu.memory_space<vmem>>, vector<32x1xf32>
    %c320_90 = arith.constant 320 : index
    %c0_91 = arith.constant 0 : index
    %188 = vector.load %arg14[%c320_90, %c0_91] : memref<480x1xf32, #tpu.memory_space<vmem>>, vector<32x1xf32>
    %cst_92 = arith.constant 9.99999974E-6 : f32
    %189 = vector.broadcast %cst_92 : f32 to vector<32x1xf32>
    %190 = arith.addf %186, %189 : vector<32x1xf32>
    %191 = math.rsqrt %190 : vector<32x1xf32>
    %192 = arith.mulf %191, %187 : vector<32x1xf32>
    %193 = arith.mulf %179, %192 : vector<32x1xf32>
    %194 = arith.subf %188, %193 : vector<32x1xf32>
    %195 = vector.broadcast %192 : vector<32x1xf32> to vector<32x784xf32>
    %196 = arith.mulf %175, %195 : vector<32x784xf32>
    %197 = vector.broadcast %194 : vector<32x1xf32> to vector<32x784xf32>
    %198 = arith.addf %196, %197 : vector<32x784xf32>
    %c320_93 = arith.constant 320 : index
    %c0_94 = arith.constant 0 : index
    %199 = vector.load %arg15[%c320_93, %c0_94] : memref<480x784xf32, #tpu.memory_space<vmem>>, vector<32x784xf32>
    tpu.vector_store %arg15[%c320_93, %c0_94], %198 {strides = array<i32>} : memref<480x784xf32, #tpu.memory_space<vmem>>, vector<32x784xf32>,
    %c0_95 = arith.constant 0 : index
    %c0_96 = arith.constant 0 : index
    %200 = vector.load %arg9[%c0_95, %c0_96] : memref<32x784xf32, #tpu.memory_space<vmem>>, vector<32x784xf32>
    %cst_97 = arith.constant dense<0.000000e+00> : vector<32xf32>
    %201 = vector.multi_reduction <add>, %200, %cst_97 [1] : vector<32x784xf32> to vector<32xf32>
    %202 = vector.shape_cast %201 : vector<32xf32> to vector<32x1xf32>
    %cst_98 = arith.constant 0.00127551018 : f32
    %203 = vector.broadcast %cst_98 : f32 to vector<32x1xf32>
    %204 = arith.mulf %202, %203 : vector<32x1xf32>
    %205 = vector.broadcast %204 : vector<32x1xf32> to vector<32x784xf32>
    %206 = arith.subf %200, %205 : vector<32x784xf32>
    %207 = arith.mulf %206, %206 : vector<32x784xf32>
    %cst_99 = arith.constant dense<0.000000e+00> : vector<32xf32>
    %208 = vector.multi_reduction <add>, %207, %cst_99 [1] : vector<32x784xf32> to vector<32xf32>
    %209 = vector.shape_cast %208 : vector<32xf32> to vector<32x1xf32>
    %cst_100 = arith.constant 0.00127551018 : f32
    %210 = vector.broadcast %cst_100 : f32 to vector<32x1xf32>
    %211 = arith.mulf %209, %210 : vector<32x1xf32>
    %c352 = arith.constant 352 : index
    %c0_101 = arith.constant 0 : index
    %212 = vector.load %arg13[%c352, %c0_101] : memref<480x1xf32, #tpu.memory_space<vmem>>, vector<32x1xf32>
    %c352_102 = arith.constant 352 : index
    %c0_103 = arith.constant 0 : index
    %213 = vector.load %arg14[%c352_102, %c0_103] : memref<480x1xf32, #tpu.memory_space<vmem>>, vector<32x1xf32>
    %cst_104 = arith.constant 9.99999974E-6 : f32
    %214 = vector.broadcast %cst_104 : f32 to vector<32x1xf32>
    %215 = arith.addf %211, %214 : vector<32x1xf32>
    %216 = math.rsqrt %215 : vector<32x1xf32>
    %217 = arith.mulf %216, %212 : vector<32x1xf32>
    %218 = arith.mulf %204, %217 : vector<32x1xf32>
    %219 = arith.subf %213, %218 : vector<32x1xf32>
    %220 = vector.broadcast %217 : vector<32x1xf32> to vector<32x784xf32>
    %221 = arith.mulf %200, %220 : vector<32x784xf32>
    %222 = vector.broadcast %219 : vector<32x1xf32> to vector<32x784xf32>
    %223 = arith.addf %221, %222 : vector<32x784xf32>
    %c352_105 = arith.constant 352 : index
    %c0_106 = arith.constant 0 : index
    %224 = vector.load %arg15[%c352_105, %c0_106] : memref<480x784xf32, #tpu.memory_space<vmem>>, vector<32x784xf32>
    tpu.vector_store %arg15[%c352_105, %c0_106], %223 {strides = array<i32>} : memref<480x784xf32, #tpu.memory_space<vmem>>, vector<32x784xf32>,
    %c0_107 = arith.constant 0 : index
    %c0_108 = arith.constant 0 : index
    %225 = vector.load %arg10[%c0_107, %c0_108] : memref<32x784xf32, #tpu.memory_space<vmem>>, vector<32x784xf32>
    %cst_109 = arith.constant dense<0.000000e+00> : vector<32xf32>
    %226 = vector.multi_reduction <add>, %225, %cst_109 [1] : vector<32x784xf32> to vector<32xf32>
    %227 = vector.shape_cast %226 : vector<32xf32> to vector<32x1xf32>
    %cst_110 = arith.constant 0.00127551018 : f32
    %228 = vector.broadcast %cst_110 : f32 to vector<32x1xf32>
    %229 = arith.mulf %227, %228 : vector<32x1xf32>
    %230 = vector.broadcast %229 : vector<32x1xf32> to vector<32x784xf32>
    %231 = arith.subf %225, %230 : vector<32x784xf32>
    %232 = arith.mulf %231, %231 : vector<32x784xf32>
    %cst_111 = arith.constant dense<0.000000e+00> : vector<32xf32>
    %233 = vector.multi_reduction <add>, %232, %cst_111 [1] : vector<32x784xf32> to vector<32xf32>
    %234 = vector.shape_cast %233 : vector<32xf32> to vector<32x1xf32>
    %cst_112 = arith.constant 0.00127551018 : f32
    %235 = vector.broadcast %cst_112 : f32 to vector<32x1xf32>
    %236 = arith.mulf %234, %235 : vector<32x1xf32>
    %c384 = arith.constant 384 : index
    %c0_113 = arith.constant 0 : index
    %237 = vector.load %arg13[%c384, %c0_113] : memref<480x1xf32, #tpu.memory_space<vmem>>, vector<32x1xf32>
    %c384_114 = arith.constant 384 : index
    %c0_115 = arith.constant 0 : index
    %238 = vector.load %arg14[%c384_114, %c0_115] : memref<480x1xf32, #tpu.memory_space<vmem>>, vector<32x1xf32>
    %cst_116 = arith.constant 9.99999974E-6 : f32
    %239 = vector.broadcast %cst_116 : f32 to vector<32x1xf32>
    %240 = arith.addf %236, %239 : vector<32x1xf32>
    %241 = math.rsqrt %240 : vector<32x1xf32>
    %242 = arith.mulf %241, %237 : vector<32x1xf32>
    %243 = arith.mulf %229, %242 : vector<32x1xf32>
    %244 = arith.subf %238, %243 : vector<32x1xf32>
    %245 = vector.broadcast %242 : vector<32x1xf32> to vector<32x784xf32>
    %246 = arith.mulf %225, %245 : vector<32x784xf32>
    %247 = vector.broadcast %244 : vector<32x1xf32> to vector<32x784xf32>
    %248 = arith.addf %246, %247 : vector<32x784xf32>
    %c384_117 = arith.constant 384 : index
    %c0_118 = arith.constant 0 : index
    %249 = vector.load %arg15[%c384_117, %c0_118] : memref<480x784xf32, #tpu.memory_space<vmem>>, vector<32x784xf32>
    tpu.vector_store %arg15[%c384_117, %c0_118], %248 {strides = array<i32>} : memref<480x784xf32, #tpu.memory_space<vmem>>, vector<32x784xf32>,
    %c0_119 = arith.constant 0 : index
    %c0_120 = arith.constant 0 : index
    %250 = vector.load %arg11[%c0_119, %c0_120] : memref<32x784xf32, #tpu.memory_space<vmem>>, vector<32x784xf32>
    %cst_121 = arith.constant dense<0.000000e+00> : vector<32xf32>
    %251 = vector.multi_reduction <add>, %250, %cst_121 [1] : vector<32x784xf32> to vector<32xf32>
    %252 = vector.shape_cast %251 : vector<32xf32> to vector<32x1xf32>
    %cst_122 = arith.constant 0.00127551018 : f32
    %253 = vector.broadcast %cst_122 : f32 to vector<32x1xf32>
    %254 = arith.mulf %252, %253 : vector<32x1xf32>
    %255 = vector.broadcast %254 : vector<32x1xf32> to vector<32x784xf32>
    %256 = arith.subf %250, %255 : vector<32x784xf32>
    %257 = arith.mulf %256, %256 : vector<32x784xf32>
    %cst_123 = arith.constant dense<0.000000e+00> : vector<32xf32>
    %258 = vector.multi_reduction <add>, %257, %cst_123 [1] : vector<32x784xf32> to vector<32xf32>
    %259 = vector.shape_cast %258 : vector<32xf32> to vector<32x1xf32>
    %cst_124 = arith.constant 0.00127551018 : f32
    %260 = vector.broadcast %cst_124 : f32 to vector<32x1xf32>
    %261 = arith.mulf %259, %260 : vector<32x1xf32>
    %c416 = arith.constant 416 : index
    %c0_125 = arith.constant 0 : index
    %262 = vector.load %arg13[%c416, %c0_125] : memref<480x1xf32, #tpu.memory_space<vmem>>, vector<32x1xf32>
    %c416_126 = arith.constant 416 : index
    %c0_127 = arith.constant 0 : index
    %263 = vector.load %arg14[%c416_126, %c0_127] : memref<480x1xf32, #tpu.memory_space<vmem>>, vector<32x1xf32>
    %cst_128 = arith.constant 9.99999974E-6 : f32
    %264 = vector.broadcast %cst_128 : f32 to vector<32x1xf32>
    %265 = arith.addf %261, %264 : vector<32x1xf32>
    %266 = math.rsqrt %265 : vector<32x1xf32>
    %267 = arith.mulf %266, %262 : vector<32x1xf32>
    %268 = arith.mulf %254, %267 : vector<32x1xf32>
    %269 = arith.subf %263, %268 : vector<32x1xf32>
    %270 = vector.broadcast %267 : vector<32x1xf32> to vector<32x784xf32>
    %271 = arith.mulf %250, %270 : vector<32x784xf32>
    %272 = vector.broadcast %269 : vector<32x1xf32> to vector<32x784xf32>
    %273 = arith.addf %271, %272 : vector<32x784xf32>
    %c416_129 = arith.constant 416 : index
    %c0_130 = arith.constant 0 : index
    %274 = vector.load %arg15[%c416_129, %c0_130] : memref<480x784xf32, #tpu.memory_space<vmem>>, vector<32x784xf32>
    tpu.vector_store %arg15[%c416_129, %c0_130], %273 {strides = array<i32>} : memref<480x784xf32, #tpu.memory_space<vmem>>, vector<32x784xf32>,
    %c0_131 = arith.constant 0 : index
    %c0_132 = arith.constant 0 : index
    %275 = vector.load %arg12[%c0_131, %c0_132] : memref<32x784xf32, #tpu.memory_space<vmem>>, vector<32x784xf32>
    %cst_133 = arith.constant dense<0.000000e+00> : vector<32xf32>
    %276 = vector.multi_reduction <add>, %275, %cst_133 [1] : vector<32x784xf32> to vector<32xf32>
    %277 = vector.shape_cast %276 : vector<32xf32> to vector<32x1xf32>
    %cst_134 = arith.constant 0.00127551018 : f32
    %278 = vector.broadcast %cst_134 : f32 to vector<32x1xf32>
    %279 = arith.mulf %277, %278 : vector<32x1xf32>
    %280 = vector.broadcast %279 : vector<32x1xf32> to vector<32x784xf32>
    %281 = arith.subf %275, %280 : vector<32x784xf32>
    %282 = arith.mulf %281, %281 : vector<32x784xf32>
    %cst_135 = arith.constant dense<0.000000e+00> : vector<32xf32>
    %283 = vector.multi_reduction <add>, %282, %cst_135 [1] : vector<32x784xf32> to vector<32xf32>
    %284 = vector.shape_cast %283 : vector<32xf32> to vector<32x1xf32>
    %cst_136 = arith.constant 0.00127551018 : f32
    %285 = vector.broadcast %cst_136 : f32 to vector<32x1xf32>
    %286 = arith.mulf %284, %285 : vector<32x1xf32>
    %c448 = arith.constant 448 : index
    %c0_137 = arith.constant 0 : index
    %287 = vector.load %arg13[%c448, %c0_137] : memref<480x1xf32, #tpu.memory_space<vmem>>, vector<32x1xf32>
    %c448_138 = arith.constant 448 : index
    %c0_139 = arith.constant 0 : index
    %288 = vector.load %arg14[%c448_138, %c0_139] : memref<480x1xf32, #tpu.memory_space<vmem>>, vector<32x1xf32>
    %cst_140 = arith.constant 9.99999974E-6 : f32
    %289 = vector.broadcast %cst_140 : f32 to vector<32x1xf32>
    %290 = arith.addf %286, %289 : vector<32x1xf32>
    %291 = math.rsqrt %290 : vector<32x1xf32>
    %292 = arith.mulf %291, %287 : vector<32x1xf32>
    %293 = arith.mulf %279, %292 : vector<32x1xf32>
    %294 = arith.subf %288, %293 : vector<32x1xf32>
    %295 = vector.broadcast %292 : vector<32x1xf32> to vector<32x784xf32>
    %296 = arith.mulf %275, %295 : vector<32x784xf32>
    %297 = vector.broadcast %294 : vector<32x1xf32> to vector<32x784xf32>
    %298 = arith.addf %296, %297 : vector<32x784xf32>
    %c448_141 = arith.constant 448 : index
    %c0_142 = arith.constant 0 : index
    %299 = vector.load %arg15[%c448_141, %c0_142] : memref<480x784xf32, #tpu.memory_space<vmem>>, vector<32x784xf32>
    tpu.vector_store %arg15[%c448_141, %c0_142], %298 {strides = array<i32>} : memref<480x784xf32, #tpu.memory_space<vmem>>, vector<32x784xf32>,
    return
  }
  func.func @transform_0(%arg0: i32) -> (i32, i32) {
    %c0_i32 = arith.constant 0 : i32
    %c0_i32_0 = arith.constant 0 : i32
    %c0_i32_1 = arith.constant 0 : i32
    return %c0_i32, %c0_i32_0 : i32, i32
  }
  func.func @transform_1(%arg0: i32) -> (i32, i32) {
    %c0_i32 = arith.constant 0 : i32
    %c0_i32_0 = arith.constant 0 : i32
    %c0_i32_1 = arith.constant 0 : i32
    return %c0_i32, %c0_i32_0 : i32, i32
  }
  func.func @transform_2(%arg0: i32) -> (i32, i32) {
    %c0_i32 = arith.constant 0 : i32
    %c0_i32_0 = arith.constant 0 : i32
    %c0_i32_1 = arith.constant 0 : i32
    return %c0_i32, %c0_i32_0 : i32, i32
  }
  func.func @transform_3(%arg0: i32) -> (i32, i32) {
    %c0_i32 = arith.constant 0 : i32
    %c0_i32_0 = arith.constant 0 : i32
    %c0_i32_1 = arith.constant 0 : i32
    return %c0_i32, %c0_i32_0 : i32, i32
  }
  func.func @transform_4(%arg0: i32) -> (i32, i32) {
    %c0_i32 = arith.constant 0 : i32
    %c0_i32_0 = arith.constant 0 : i32
    %c0_i32_1 = arith.constant 0 : i32
    return %c0_i32, %c0_i32_0 : i32, i32
  }
  func.func @transform_5(%arg0: i32) -> (i32, i32) {
    %c0_i32 = arith.constant 0 : i32
    %c0_i32_0 = arith.constant 0 : i32
    %c0_i32_1 = arith.constant 0 : i32
    return %c0_i32, %c0_i32_0 : i32, i32
  }
  func.func @transform_6(%arg0: i32) -> (i32, i32) {
    %c0_i32 = arith.constant 0 : i32
    %c0_i32_0 = arith.constant 0 : i32
    %c0_i32_1 = arith.constant 0 : i32
    return %c0_i32, %c0_i32_0 : i32, i32
  }
  func.func @transform_7(%arg0: i32) -> (i32, i32) {
    %c0_i32 = arith.constant 0 : i32
    %c0_i32_0 = arith.constant 0 : i32
    %c0_i32_1 = arith.constant 0 : i32
    return %c0_i32, %c0_i32_0 : i32, i32
  }
  func.func @transform_8(%arg0: i32) -> (i32, i32) {
    %c0_i32 = arith.constant 0 : i32
    %c0_i32_0 = arith.constant 0 : i32
    %c0_i32_1 = arith.constant 0 : i32
    return %c0_i32, %c0_i32_0 : i32, i32
  }
  func.func @transform_9(%arg0: i32) -> (i32, i32) {
    %c0_i32 = arith.constant 0 : i32
    %c0_i32_0 = arith.constant 0 : i32
    %c0_i32_1 = arith.constant 0 : i32
    return %c0_i32, %c0_i32_0 : i32, i32
  }
  func.func @transform_10(%arg0: i32) -> (i32, i32) {
    %c0_i32 = arith.constant 0 : i32
    %c0_i32_0 = arith.constant 0 : i32
    %c0_i32_1 = arith.constant 0 : i32
    return %c0_i32, %c0_i32_0 : i32, i32
  }
  func.func @transform_11(%arg0: i32) -> (i32, i32) {
    %c0_i32 = arith.constant 0 : i32
    %c0_i32_0 = arith.constant 0 : i32
    %c0_i32_1 = arith.constant 0 : i32
    return %c0_i32, %c0_i32_0 : i32, i32
  }
  func.func @transform_12(%arg0: i32) -> (i32, i32) {
    %c0_i32 = arith.constant 0 : i32
    %c0_i32_0 = arith.constant 0 : i32
    %c0_i32_1 = arith.constant 0 : i32
    return %c0_i32, %c0_i32_0 : i32, i32
  }
  func.func @transform_13(%arg0: i32) -> (i32, i32) {
    %c0_i32 = arith.constant 0 : i32
    %c0_i32_0 = arith.constant 0 : i32
    %c0_i32_1 = arith.constant 0 : i32
    return %c0_i32, %c0_i32_0 : i32, i32
  }
  func.func @transform_14(%arg0: i32) -> (i32, i32) {
    %c0_i32 = arith.constant 0 : i32
    %c0_i32_0 = arith.constant 0 : i32
    %c0_i32_1 = arith.constant 0 : i32
    return %c0_i32, %c0_i32_0 : i32, i32
  }
}

</mosaic_0001>

<llo_original>
// kernel: tpu_custom_call.1
$region0: #{tpu_custom_call.1}
  #allocation0 [shape = 'u32[]', space=smem, size = 0x4, offset = 0x4, fixed_abs, tag = 'smem constant byte address 0x4 - core index']
  #allocation1 [shape = 'u32[144,128]{1,0:T(1,128)}', space=vmem, size = 0x12000, scoped, tag = 'internal scratch']
  %s0 = inlined_call_operand.vmem [shape: f32[128,784], index: 0, kind: input, shape index: {}]
  %s1 = inlined_call_operand.hbm [shape: f32[32,784], index: 1, kind: input, shape index: {}]
  %s2 = inlined_call_operand.hbm [shape: f32[32,784], index: 2, kind: input, shape index: {}]
  %s3 = inlined_call_operand.hbm [shape: f32[32,784], index: 3, kind: input, shape index: {}]
  %s4 = inlined_call_operand.hbm [shape: f32[32,784], index: 4, kind: input, shape index: {}]
  %s5 = inlined_call_operand.hbm [shape: f32[32,784], index: 5, kind: input, shape index: {}]
  %s6 = inlined_call_operand.hbm [shape: f32[32,784], index: 6, kind: input, shape index: {}]
  %s7 = inlined_call_operand.hbm [shape: f32[32,784], index: 7, kind: input, shape index: {}]
  %s8 = inlined_call_operand.hbm [shape: f32[32,784], index: 8, kind: input, shape index: {}]
  %s9 = inlined_call_operand.hbm [shape: f32[32,784], index: 9, kind: input, shape index: {}]
  %s10 = inlined_call_operand.hbm [shape: f32[32,784], index: 10, kind: input, shape index: {}]
  %s11 = inlined_call_operand.hbm [shape: f32[32,784], index: 11, kind: input, shape index: {}]
  %s12 = inlined_call_operand.vmem [shape: f32[480,1], index: 12, kind: input, shape index: {}]
  %s13 = inlined_call_operand.vmem [shape: f32[480,1], index: 13, kind: input, shape index: {}]
  %s14 = inlined_call_operand.vmem [shape: f32[480,784], index: 14, kind: output, shape index: {}]
  %s15 = sld [smem:[#allocation0]]
  $region110: #{tpu_custom_call.1} parent=0
    _
  %s17 = ssub.s32 1, %s15
  %s18 = scalar_select 0, %s17, %s15
  $region1: #{tpu_custom_call.1} parent=0
    #allocation2 [shape = 'u8[114688]{0}', space=vmem, size = 0x1c000, scoped, tag = 'input window, operand 1, single buffered']
    #allocation3 [shape = 's32[1]{0}', space=sflag, size = 0x4, scoped, tag = 'scoped memory for tpu_custom_call.1']
    #allocation4 [shape = 'u8[114688]{0}', space=vmem, size = 0x1c000, scoped, tag = 'input window, operand 2, single buffered']
    #allocation5 [shape = 's32[1]{0}', space=sflag, size = 0x4, scoped, tag = 'scoped memory for tpu_custom_call.1']
    #allocation6 [shape = 'u8[114688]{0}', space=vmem, size = 0x1c000, scoped, tag = 'input window, operand 3, single buffered']
    #allocation7 [shape = 'u8[114688]{0}', space=vmem, size = 0x1c000, scoped, tag = 'input window, operand 4, single buffered']
    #allocation8 [shape = 's32[1]{0}', space=sflag, size = 0x4, scoped, tag = 'scoped memory for tpu_custom_call.1']
    #allocation9 [shape = 'u8[114688]{0}', space=vmem, size = 0x1c000, scoped, tag = 'input window, operand 5, single buffered']
    #allocation10 [shape = 'u8[114688]{0}', space=vmem, size = 0x1c000, scoped, tag = 'input window, operand 6, single buffered']
    #allocation11 [shape = 's32[1]{0}', space=sflag, size = 0x4, scoped, tag = 'scoped memory for tpu_custom_call.1']
    #allocation12 [shape = 'u8[114688]{0}', space=vmem, size = 0x1c000, scoped, tag = 'input window, operand 7, single buffered']
    #allocation13 [shape = 'u8[114688]{0}', space=vmem, size = 0x1c000, scoped, tag = 'input window, operand 8, single buffered']
    #allocation14 [shape = 's32[1]{0}', space=sflag, size = 0x4, scoped, tag = 'scoped memory for tpu_custom_call.1']
    #allocation15 [shape = 'u8[114688]{0}', space=vmem, size = 0x1c000, scoped, tag = 'input window, operand 9, single buffered']
    #allocation16 [shape = 'u8[114688]{0}', space=vmem, size = 0x1c000, scoped, tag = 'input window, operand 10, single buffered']
    #allocation17 [shape = 's32[1]{0}', space=sflag, size = 0x4, scoped, tag = 'scoped memory for tpu_custom_call.1']
    #allocation18 [shape = 'u8[114688]{0}', space=vmem, size = 0x1c000, scoped, tag = 'input window, operand 11, single buffered']
    %19 = vsyncpa [#allocation3], 0
    %20 = vsyncpa [#allocation5], 0
    %21 = vsyncpa [#allocation8], 0
    %22 = vsyncpa [#allocation11], 0
    %23 = vsyncpa [#allocation14], 0
    %24 = vsyncpa [#allocation17], 0
    // Predicated region
    $region2: #{tpu_custom_call.1} parent=1 // pred_check
      _
    $region3: #{tpu_custom_call.1} parent=1 // pred_check_branch
      %26 = sbr.rel (0) target = $region5
    $region4: #{tpu_custom_call.1} parent=1 // pred_region
      _
    $region5: #{tpu_custom_call.1} parent=1 // pred_fallthru
      _
    // Predicated region
    $region6: #{tpu_custom_call.1} parent=1 // pred_check
      _
    $region7: #{tpu_custom_call.1} parent=1 // pred_check_branch
      %28 = sbr.rel (0) target = $region9
    $region8: #{tpu_custom_call.1} parent=1 // pred_region
      %s30 = ssub.s32 3584, 3584
      %31 = vsyncadd [#allocation3], %s30
      %s32 = sshll.u32 [#allocation2], 4
      %s33 = int_to_ptr.vmem [resolvable:$true] %s32
      %38 = dma.hbm_to_vmem [thread:$0]  %s1, 3584, %s33, [#allocation3], 896, 896, 56
    $region9: #{tpu_custom_call.1} parent=1 // pred_fallthru
      _
    // Predicated region
    $region10: #{tpu_custom_call.1} parent=1 // pred_check
      _
    $region11: #{tpu_custom_call.1} parent=1 // pred_check_branch
      %40 = sbr.rel (0) target = $region13
    $region12: #{tpu_custom_call.1} parent=1 // pred_region
      %s42 = ssub.s32 3584, 3584
      %43 = vsyncadd [#allocation5], %s42
      %s44 = sshll.u32 [#allocation4], 4
      %s45 = int_to_ptr.vmem [resolvable:$true] %s44
      %50 = dma.hbm_to_vmem [thread:$0]  %s2, 3584, %s45, [#allocation5], 896, 896, 56
    $region13: #{tpu_custom_call.1} parent=1 // pred_fallthru
      _
    // Predicated region
    $region14: #{tpu_custom_call.1} parent=1 // pred_check
      _
    $region15: #{tpu_custom_call.1} parent=1 // pred_check_branch
      %52 = sbr.rel (0) target = $region17
    $region16: #{tpu_custom_call.1} parent=1 // pred_region
      %s54 = ssub.s32 3584, 3584
      %55 = vsyncadd [#allocation5], %s54
      %s56 = sshll.u32 [#allocation6], 4
      %s57 = int_to_ptr.vmem [resolvable:$true] %s56
      %62 = dma.hbm_to_vmem [thread:$0]  %s3, 3584, %s57, [#allocation5], 896, 896, 56
    $region17: #{tpu_custom_call.1} parent=1 // pred_fallthru
      _
    // Predicated region
    $region18: #{tpu_custom_call.1} parent=1 // pred_check
      _
    $region19: #{tpu_custom_call.1} parent=1 // pred_check_branch
      %64 = sbr.rel (0) target = $region21
    $region20: #{tpu_custom_call.1} parent=1 // pred_region
      %s66 = ssub.s32 3584, 3584
      %67 = vsyncadd [#allocation8], %s66
      %s68 = sshll.u32 [#allocation7], 4
      %s69 = int_to_ptr.vmem [resolvable:$true] %s68
      %74 = dma.hbm_to_vmem [thread:$0]  %s4, 3584, %s69, [#allocation8], 896, 896, 56
    $region21: #{tpu_custom_call.1} parent=1 // pred_fallthru
      _
    // Predicated region
    $region22: #{tpu_custom_call.1} parent=1 // pred_check
      _
    $region23: #{tpu_custom_call.1} parent=1 // pred_check_branch
      %76 = sbr.rel (0) target = $region25
    $region24: #{tpu_custom_call.1} parent=1 // pred_region
      %s78 = ssub.s32 3584, 3584
      %79 = vsyncadd [#allocation8], %s78
      %s80 = sshll.u32 [#allocation9], 4
      %s81 = int_to_ptr.vmem [resolvable:$true] %s80
      %86 = dma.hbm_to_vmem [thread:$0]  %s5, 3584, %s81, [#allocation8], 896, 896, 56
    $region25: #{tpu_custom_call.1} parent=1 // pred_fallthru
      _
    // Predicated region
    $region26: #{tpu_custom_call.1} parent=1 // pred_check
      _
    $region27: #{tpu_custom_call.1} parent=1 // pred_check_branch
      %88 = sbr.rel (0) target = $region29
    $region28: #{tpu_custom_call.1} parent=1 // pred_region
      %s90 = ssub.s32 3584, 3584
      %91 = vsyncadd [#allocation11], %s90
      %s92 = sshll.u32 [#allocation10], 4
      %s93 = int_to_ptr.vmem [resolvable:$true] %s92
      %98 = dma.hbm_to_vmem [thread:$0]  %s6, 3584, %s93, [#allocation11], 896, 896, 56
    $region29: #{tpu_custom_call.1} parent=1 // pred_fallthru
      _
    // Predicated region
    $region30: #{tpu_custom_call.1} parent=1 // pred_check
      _
    $region31: #{tpu_custom_call.1} parent=1 // pred_check_branch
      %100 = sbr.rel (0) target = $region33
    $region32: #{tpu_custom_call.1} parent=1 // pred_region
      %s102 = ssub.s32 3584, 3584
      %103 = vsyncadd [#allocation11], %s102
      %s104 = sshll.u32 [#allocation12], 4
      %s105 = int_to_ptr.vmem [resolvable:$true] %s104
      %110 = dma.hbm_to_vmem [thread:$0]  %s7, 3584, %s105, [#allocation11], 896, 896, 56
    $region33: #{tpu_custom_call.1} parent=1 // pred_fallthru
      _
    // Predicated region
    $region34: #{tpu_custom_call.1} parent=1 // pred_check
      _
    $region35: #{tpu_custom_call.1} parent=1 // pred_check_branch
      %112 = sbr.rel (0) target = $region37
    $region36: #{tpu_custom_call.1} parent=1 // pred_region
      %s114 = ssub.s32 3584, 3584
      %115 = vsyncadd [#allocation14], %s114
      %s116 = sshll.u32 [#allocation13], 4
      %s117 = int_to_ptr.vmem [resolvable:$true] %s116
      %122 = dma.hbm_to_vmem [thread:$0]  %s8, 3584, %s117, [#allocation14], 896, 896, 56
    $region37: #{tpu_custom_call.1} parent=1 // pred_fallthru
      _
    // Predicated region
    $region38: #{tpu_custom_call.1} parent=1 // pred_check
      _
    $region39: #{tpu_custom_call.1} parent=1 // pred_check_branch
      %124 = sbr.rel (0) target = $region41
    $region40: #{tpu_custom_call.1} parent=1 // pred_region
      %s126 = ssub.s32 3584, 3584
      %127 = vsyncadd [#allocation14], %s126
      %s128 = sshll.u32 [#allocation15], 4
      %s129 = int_to_ptr.vmem [resolvable:$true] %s128
      %134 = dma.hbm_to_vmem [thread:$0]  %s9, 3584, %s129, [#allocation14], 896, 896, 56
    $region41: #{tpu_custom_call.1} parent=1 // pred_fallthru
      _
    // Predicated region
    $region42: #{tpu_custom_call.1} parent=1 // pred_check
      _
    $region43: #{tpu_custom_call.1} parent=1 // pred_check_branch
      %136 = sbr.rel (0) target = $region45
    $region44: #{tpu_custom_call.1} parent=1 // pred_region
      %s138 = ssub.s32 3584, 3584
      %139 = vsyncadd [#allocation17], %s138
      %s140 = sshll.u32 [#allocation16], 4
      %s141 = int_to_ptr.vmem [resolvable:$true] %s140
      %146 = dma.hbm_to_vmem [thread:$0]  %s10, 3584, %s141, [#allocation17], 896, 896, 56
    $region45: #{tpu_custom_call.1} parent=1 // pred_fallthru
      _
    // Predicated region
    $region46: #{tpu_custom_call.1} parent=1 // pred_check
      _
    $region47: #{tpu_custom_call.1} parent=1 // pred_check_branch
      %148 = sbr.rel (0) target = $region49
    $region48: #{tpu_custom_call.1} parent=1 // pred_region
      %s150 = ssub.s32 3584, 3584
      %151 = vsyncadd [#allocation17], %s150
      %s152 = sshll.u32 [#allocation18], 4
      %s153 = int_to_ptr.vmem [resolvable:$true] %s152
      %158 = dma.hbm_to_vmem [thread:$0]  %s11, 3584, %s153, [#allocation17], 896, 896, 56
    $region49: #{tpu_custom_call.1} parent=1 // pred_fallthru
      _
    // Predicated region
    $region50: #{tpu_custom_call.1} parent=1 // pred_check
      _
    $region51: #{tpu_custom_call.1} parent=1 // pred_check_branch
      %160 = sbr.rel (0) target = $region53
    $region52: #{tpu_custom_call.1} parent=1 // pred_region
      _
    $region53: #{tpu_custom_call.1} parent=1 // pred_fallthru
      _
    // Predicated region
    $region54: #{tpu_custom_call.1} parent=1 // pred_check
      _
    $region55: #{tpu_custom_call.1} parent=1 // pred_check_branch
      %162 = sbr.rel (0) target = $region57
    $region56: #{tpu_custom_call.1} parent=1 // pred_region
      _
    $region57: #{tpu_custom_call.1} parent=1 // pred_fallthru
      _
    // Predicated region
    $region58: #{tpu_custom_call.1} parent=1 // pred_check
      _
    $region59: #{tpu_custom_call.1} parent=1 // pred_check_branch
      %164 = sbr.rel (0) target = $region61
    $region60: #{tpu_custom_call.1} parent=1 // pred_region
      %165 = dma.done [#allocation3], 3584
    $region61: #{tpu_custom_call.1} parent=1 // pred_fallthru
      _
    // Predicated region
    $region62: #{tpu_custom_call.1} parent=1 // pred_check
      _
    $region63: #{tpu_custom_call.1} parent=1 // pred_check_branch
      %167 = sbr.rel (0) target = $region65
    $region64: #{tpu_custom_call.1} parent=1 // pred_region
      %168 = dma.done [#allocation5], 3584
    $region65: #{tpu_custom_call.1} parent=1 // pred_fallthru
      _
    // Predicated region
    $region66: #{tpu_custom_call.1} parent=1 // pred_check
      _
    $region67: #{tpu_custom_call.1} parent=1 // pred_check_branch
      %170 = sbr.rel (0) target = $region69
    $region68: #{tpu_custom_call.1} parent=1 // pred_region
      %171 = dma.done [#allocation5], 3584
    $region69: #{tpu_custom_call.1} parent=1 // pred_fallthru
      _
    // Predicated region
    $region70: #{tpu_custom_call.1} parent=1 // pred_check
      _
    $region71: #{tpu_custom_call.1} parent=1 // pred_check_branch
      %173 = sbr.rel (0) target = $region73
    $region72: #{tpu_custom_call.1} parent=1 // pred_region
      %174 = dma.done [#allocation8], 3584
    $region73: #{tpu_custom_call.1} parent=1 // pred_fallthru
      _
    // Predicated region
    $region74: #{tpu_custom_call.1} parent=1 // pred_check
      _
    $region75: #{tpu_custom_call.1} parent=1 // pred_check_branch
      %176 = sbr.rel (0) target = $region77
    $region76: #{tpu_custom_call.1} parent=1 // pred_region
      %177 = dma.done [#allocation8], 3584
    $region77: #{tpu_custom_call.1} parent=1 // pred_fallthru
      _
    // Predicated region
    $region78: #{tpu_custom_call.1} parent=1 // pred_check
      _
    $region79: #{tpu_custom_call.1} parent=1 // pred_check_branch
      %179 = sbr.rel (0) target = $region81
    $region80: #{tpu_custom_call.1} parent=1 // pred_region
      %180 = dma.done [#allocation11], 3584
    $region81: #{tpu_custom_call.1} parent=1 // pred_fallthru
      _
    // Predicated region
    $region82: #{tpu_custom_call.1} parent=1 // pred_check
      _
    $region83: #{tpu_custom_call.1} parent=1 // pred_check_branch
      %182 = sbr.rel (0) target = $region85
    $region84: #{tpu_custom_call.1} parent=1 // pred_region
      %183 = dma.done [#allocation11], 3584
    $region85: #{tpu_custom_call.1} parent=1 // pred_fallthru
      _
    // Predicated region
    $region86: #{tpu_custom_call.1} parent=1 // pred_check
      _
    $region87: #{tpu_custom_call.1} parent=1 // pred_check_branch
      %185 = sbr.rel (0) target = $region89
    $region88: #{tpu_custom_call.1} parent=1 // pred_region
      %186 = dma.done [#allocation14], 3584
    $region89: #{tpu_custom_call.1} parent=1 // pred_fallthru
      _
    // Predicated region
    $region90: #{tpu_custom_call.1} parent=1 // pred_check
      _
    $region91: #{tpu_custom_call.1} parent=1 // pred_check_branch
      %188 = sbr.rel (0) target = $region93
    $region92: #{tpu_custom_call.1} parent=1 // pred_region
      %189 = dma.done [#allocation14], 3584
    $region93: #{tpu_custom_call.1} parent=1 // pred_fallthru
      _
    // Predicated region
    $region94: #{tpu_custom_call.1} parent=1 // pred_check
      _
    $region95: #{tpu_custom_call.1} parent=1 // pred_check_branch
      %191 = sbr.rel (0) target = $region97
    $region96: #{tpu_custom_call.1} parent=1 // pred_region
      %192 = dma.done [#allocation17], 3584
    $region97: #{tpu_custom_call.1} parent=1 // pred_fallthru
      _
    // Predicated region
    $region98: #{tpu_custom_call.1} parent=1 // pred_check
      _
    $region99: #{tpu_custom_call.1} parent=1 // pred_check_branch
      %194 = sbr.rel (0) target = $region101
    $region100: #{tpu_custom_call.1} parent=1 // pred_region
      %195 = dma.done [#allocation17], 3584
    $region101: #{tpu_custom_call.1} parent=1 // pred_fallthru
      _
    %v196 = vld [vmem:[%s0] sm:$0xff]
    %v197 = vld [vmem:[%s0 + $0x8] sm:$0xff]
    %v198 = vld [vmem:[%s0 + $0x10] sm:$0xff]
    %v199 = vld [vmem:[%s0 + $0x18] sm:$0xff]
    %v200 = vld [vmem:[%s0 + $0x20] sm:$0xff]
    %v201 = vld [vmem:[%s0 + $0x28] sm:$0xff]
    %v202 = vld [vmem:[%s0 + $0x30] sm:$0xff]
    %v203 = vld [vmem:[%s0 + $0x38] sm:$0xff]
    %v204 = vld [vmem:[%s0 + $0x40] sm:$0xff]
    %v205 = vld [vmem:[%s0 + $0x48] sm:$0xff]
    %v206 = vld [vmem:[%s0 + $0x50] sm:$0xff]
    %v207 = vld [vmem:[%s0 + $0x58] sm:$0xff]
    %v208 = vld [vmem:[%s0 + $0x60] sm:$0xff]
    %v209 = vld [vmem:[%s0 + $0x68] sm:$0xff]
    %v210 = vld [vmem:[%s0 + $0x70] sm:$0xff]
    %v211 = vld [vmem:[%s0 + $0x78] sm:$0xff]
    %v212 = vld [vmem:[%s0 + $0x80] sm:$0xff]
    %v213 = vld [vmem:[%s0 + $0x88] sm:$0xff]
    %v214 = vld [vmem:[%s0 + $0x90] sm:$0xff]
    %v215 = vld [vmem:[%s0 + $0x98] sm:$0xff]
    %v216 = vld [vmem:[%s0 + $0xa0] sm:$0xff]
    %v217 = vld [vmem:[%s0 + $0xa8] sm:$0xff]
    %v218 = vld [vmem:[%s0 + $0xb0] sm:$0xff]
    %v219 = vld [vmem:[%s0 + $0xb8] sm:$0xff]
    %v220 = vld [vmem:[%s0 + $0xc0] sm:$0xff]
    %v221 = vld [vmem:[%s0 + $0xc8] sm:$0xff]
    %v222 = vld [vmem:[%s0 + $0xd0] sm:$0xff]
    %v223 = vld [vmem:[%s0 + $0xd8] sm:$0xff]
    %v224 = vld [vmem:[%s0 + $0xe0] sm:$0xff]
    %v225 = vld [vmem:[%s0 + $0xe8] sm:$0xff]
    %v226 = vld [vmem:[%s0 + $0xf0] sm:$0xff]
    %v227 = vld [vmem:[%s0 + $0xf8] sm:$0xff]
    %v228 = vld [vmem:[%s0 + $0x100] sm:$0xff]
    %v229 = vld [vmem:[%s0 + $0x108] sm:$0xff]
    %v230 = vld [vmem:[%s0 + $0x110] sm:$0xff]
    %v231 = vld [vmem:[%s0 + $0x118] sm:$0xff]
    %v232 = vld [vmem:[%s0 + $0x120] sm:$0xff]
    %v233 = vld [vmem:[%s0 + $0x128] sm:$0xff]
    %v234 = vld [vmem:[%s0 + $0x130] sm:$0xff]
    %v235 = vld [vmem:[%s0 + $0x138] sm:$0xff]
    %v236 = vld [vmem:[%s0 + $0x140] sm:$0xff]
    %v237 = vld [vmem:[%s0 + $0x148] sm:$0xff]
    %v238 = vld [vmem:[%s0 + $0x150] sm:$0xff]
    %v239 = vld [vmem:[%s0 + $0x158] sm:$0xff]
    %v240 = vld [vmem:[%s0 + $0x160] sm:$0xff]
    %v241 = vld [vmem:[%s0 + $0x168] sm:$0xff]
    %v242 = vld [vmem:[%s0 + $0x170] sm:$0xff]
    %v243 = vld [vmem:[%s0 + $0x178] sm:$0xff]
    %v244 = vld [vmem:[%s0 + $0x180] sm:$0xff]
    %v245 = vld [vmem:[%s0 + $0x188] sm:$0xff]
    %v246 = vld [vmem:[%s0 + $0x190] sm:$0xff]
    %v247 = vld [vmem:[%s0 + $0x198] sm:$0xff]
    %v248 = vld [vmem:[%s0 + $0x1a0] sm:$0xff]
    %v249 = vld [vmem:[%s0 + $0x1a8] sm:$0xff]
    %v250 = vld [vmem:[%s0 + $0x1b0] sm:$0xff]
    %v251 = vld [vmem:[%s0 + $0x1b8] sm:$0xff]
    %v252 = vld [vmem:[%s0 + $0x1c0] sm:$0xff]
    %v253 = vld [vmem:[%s0 + $0x1c8] sm:$0xff]
    %v254 = vld [vmem:[%s0 + $0x1d0] sm:$0xff]
    %v255 = vld [vmem:[%s0 + $0x1d8] sm:$0xff]
    %v256 = vld [vmem:[%s0 + $0x1e0] sm:$0xff]
    %v257 = vld [vmem:[%s0 + $0x1e8] sm:$0xff]
    %v258 = vld [vmem:[%s0 + $0x1f0] sm:$0xff]
    %v259 = vld [vmem:[%s0 + $0x1f8] sm:$0xff]
    %v260 = vld [vmem:[%s0 + $0x200] sm:$0xff]
    %v261 = vld [vmem:[%s0 + $0x208] sm:$0xff]
    %v262 = vld [vmem:[%s0 + $0x210] sm:$0xff]
    %v263 = vld [vmem:[%s0 + $0x218] sm:$0xff]
    %v264 = vld [vmem:[%s0 + $0x220] sm:$0xff]
    %v265 = vld [vmem:[%s0 + $0x228] sm:$0xff]
    %v266 = vld [vmem:[%s0 + $0x230] sm:$0xff]
    %v267 = vld [vmem:[%s0 + $0x238] sm:$0xff]
    %v268 = vld [vmem:[%s0 + $0x240] sm:$0xff]
    %v269 = vld [vmem:[%s0 + $0x248] sm:$0xff]
    %v270 = vld [vmem:[%s0 + $0x250] sm:$0xff]
    %v271 = vld [vmem:[%s0 + $0x258] sm:$0xff]
    %v272 = vld [vmem:[%s0 + $0x260] sm:$0xff]
    %v273 = vld [vmem:[%s0 + $0x268] sm:$0xff]
    %v274 = vld [vmem:[%s0 + $0x270] sm:$0xff]
    %v275 = vld [vmem:[%s0 + $0x278] sm:$0xff]
    %v276 = vld [vmem:[%s0 + $0x280] sm:$0xff]
    %v277 = vld [vmem:[%s0 + $0x288] sm:$0xff]
    %v278 = vld [vmem:[%s0 + $0x290] sm:$0xff]
    %v279 = vld [vmem:[%s0 + $0x298] sm:$0xff]
    %v280 = vld [vmem:[%s0 + $0x2a0] sm:$0xff]
    %v281 = vld [vmem:[%s0 + $0x2a8] sm:$0xff]
    %v282 = vld [vmem:[%s0 + $0x2b0] sm:$0xff]
    %v283 = vld [vmem:[%s0 + $0x2b8] sm:$0xff]
    %v284 = vld [vmem:[%s0 + $0x2c0] sm:$0xff]
    %v285 = vld [vmem:[%s0 + $0x2c8] sm:$0xff]
    %v286 = vld [vmem:[%s0 + $0x2d0] sm:$0xff]
    %v287 = vld [vmem:[%s0 + $0x2d8] sm:$0xff]
    %v288 = vld [vmem:[%s0 + $0x2e0] sm:$0xff]
    %v289 = vld [vmem:[%s0 + $0x2e8] sm:$0xff]
    %v290 = vld [vmem:[%s0 + $0x2f0] sm:$0xff]
    %v291 = vld [vmem:[%s0 + $0x2f8] sm:$0xff]
    %v292 = vld [vmem:[%s0 + $0x300] sm:$0xff]
    %v293 = vld [vmem:[%s0 + $0x308] sm:$0xff]
    %v294 = vld [vmem:[%s0 + $0x310] sm:$0xff]
    %v295 = vld [vmem:[%s0 + $0x318] sm:$0xff]
    %v296 = vld [vmem:[%s0 + $0x320] sm:$0xff]
    %v297 = vld [vmem:[%s0 + $0x328] sm:$0xff]
    %v298 = vld [vmem:[%s0 + $0x330] sm:$0xff]
    %v299 = vld [vmem:[%s0 + $0x338] sm:$0xff]
    %v300 = vld [vmem:[%s0 + $0x340] sm:$0xff]
    %v301 = vld [vmem:[%s0 + $0x348] sm:$0xff]
    %v302 = vld [vmem:[%s0 + $0x350] sm:$0xff]
    %v303 = vld [vmem:[%s0 + $0x358] sm:$0xff]
    %v304 = vld [vmem:[%s0 + $0x360] sm:$0xff]
    %v305 = vld [vmem:[%s0 + $0x368] sm:$0xff]
    %v306 = vld [vmem:[%s0 + $0x370] sm:$0xff]
    %v307 = vld [vmem:[%s0 + $0x378] sm:$0xff]
    %v308 = vadd.f32 %v196, %v197
    %v309 = vadd.f32 %v308, %v198
    %v310 = vadd.f32 %v309, %v199
    %v311 = vadd.f32 %v310, %v200
    %v312 = vadd.f32 %v311, %v201
    %vm313 = vcmask 130048
    %v314 = vsel %vm313, %v202, 0.0
    %v315 = vadd.f32 %v312, %v314
    %316 = vadd.xlane.f32.xlu0 %v315
    %v317 = vpop.xlane.xlu0 %316
    %v318 = vadd.f32 %v203, %v204
    %v319 = vadd.f32 %v318, %v205
    %v320 = vadd.f32 %v319, %v206
    %v321 = vadd.f32 %v320, %v207
    %v322 = vadd.f32 %v321, %v208
    %v323 = vsel %vm313, %v209, 0.0
    %v324 = vadd.f32 %v322, %v323
    %325 = vadd.xlane.f32.xlu0 %v324
    %v326 = vpop.xlane.xlu0 %325
    %v327 = vadd.f32 %v210, %v211
    %v328 = vadd.f32 %v327, %v212
    %v329 = vadd.f32 %v328, %v213
    %v330 = vadd.f32 %v329, %v214
    %v331 = vadd.f32 %v330, %v215
    %v332 = vsel %vm313, %v216, 0.0
    %v333 = vadd.f32 %v331, %v332
    %334 = vadd.xlane.f32.xlu0 %v333
    %v335 = vpop.xlane.xlu0 %334
    %v336 = vadd.f32 %v217, %v218
    %v337 = vadd.f32 %v336, %v219
    %v338 = vadd.f32 %v337, %v220
    %v339 = vadd.f32 %v338, %v221
    %v340 = vadd.f32 %v339, %v222
    %v341 = vsel %vm313, %v223, 0.0
    %v342 = vadd.f32 %v340, %v341
    %343 = vadd.xlane.f32.xlu0 %v342
    %v344 = vpop.xlane.xlu0 %343
    %v345 = vadd.f32 %v224, %v225
    %v346 = vadd.f32 %v345, %v226
    %v347 = vadd.f32 %v346, %v227
    %v348 = vadd.f32 %v347, %v228
    %v349 = vadd.f32 %v348, %v229
    %v350 = vsel %vm313, %v230, 0.0
    %v351 = vadd.f32 %v349, %v350
    %352 = vadd.xlane.f32.xlu0 %v351
    %v353 = vpop.xlane.xlu0 %352
    %v354 = vadd.f32 %v231, %v232
    %v355 = vadd.f32 %v354, %v233
    %v356 = vadd.f32 %v355, %v234
    %v357 = vadd.f32 %v356, %v235
    %v358 = vadd.f32 %v357, %v236
    %v359 = vsel %vm313, %v237, 0.0
    %v360 = vadd.f32 %v358, %v359
    %361 = vadd.xlane.f32.xlu0 %v360
    %v362 = vpop.xlane.xlu0 %361
    %v363 = vadd.f32 %v238, %v239
    %v364 = vadd.f32 %v363, %v240
    %v365 = vadd.f32 %v364, %v241
    %v366 = vadd.f32 %v365, %v242
    %v367 = vadd.f32 %v366, %v243
    %v368 = vsel %vm313, %v244, 0.0
    %v369 = vadd.f32 %v367, %v368
    %370 = vadd.xlane.f32.xlu0 %v369
    %v371 = vpop.xlane.xlu0 %370
    %v372 = vadd.f32 %v245, %v246
    %v373 = vadd.f32 %v372, %v247
    %v374 = vadd.f32 %v373, %v248
    %v375 = vadd.f32 %v374, %v249
    %v376 = vadd.f32 %v375, %v250
    %v377 = vsel %vm313, %v251, 0.0
    %v378 = vadd.f32 %v376, %v377
    %379 = vadd.xlane.f32.xlu0 %v378
    %v380 = vpop.xlane.xlu0 %379
    %v381 = vadd.f32 %v252, %v253
    %v382 = vadd.f32 %v381, %v254
    %v383 = vadd.f32 %v382, %v255
    %v384 = vadd.f32 %v383, %v256
    %v385 = vadd.f32 %v384, %v257
    %v386 = vsel %vm313, %v258, 0.0
    %v387 = vadd.f32 %v385, %v386
    %388 = vadd.xlane.f32.xlu0 %v387
    %v389 = vpop.xlane.xlu0 %388
    %v390 = vadd.f32 %v259, %v260
    %v391 = vadd.f32 %v390, %v261
    %v392 = vadd.f32 %v391, %v262
    %v393 = vadd.f32 %v392, %v263
    %v394 = vadd.f32 %v393, %v264
    %v395 = vsel %vm313, %v265, 0.0
    %v396 = vadd.f32 %v394, %v395
    %397 = vadd.xlane.f32.xlu0 %v396
    %v398 = vpop.xlane.xlu0 %397
    %v399 = vadd.f32 %v266, %v267
    %v400 = vadd.f32 %v399, %v268
    %v401 = vadd.f32 %v400, %v269
    %v402 = vadd.f32 %v401, %v270
    %v403 = vadd.f32 %v402, %v271
    %v404 = vsel %vm313, %v272, 0.0
    %v405 = vadd.f32 %v403, %v404
    %406 = vadd.xlane.f32.xlu0 %v405
    %v407 = vpop.xlane.xlu0 %406
    %v408 = vadd.f32 %v273, %v274
    %v409 = vadd.f32 %v408, %v275
    %v410 = vadd.f32 %v409, %v276
    %v411 = vadd.f32 %v410, %v277
    %v412 = vadd.f32 %v411, %v278
    %v413 = vsel %vm313, %v279, 0.0
    %v414 = vadd.f32 %v412, %v413
    %415 = vadd.xlane.f32.xlu0 %v414
    %v416 = vpop.xlane.xlu0 %415
    %v417 = vadd.f32 %v280, %v281
    %v418 = vadd.f32 %v417, %v282
    %v419 = vadd.f32 %v418, %v283
    %v420 = vadd.f32 %v419, %v284
    %v421 = vadd.f32 %v420, %v285
    %v422 = vsel %vm313, %v286, 0.0
    %v423 = vadd.f32 %v421, %v422
    %424 = vadd.xlane.f32.xlu0 %v423
    %v425 = vpop.xlane.xlu0 %424
    %v426 = vadd.f32 %v287, %v288
    %v427 = vadd.f32 %v426, %v289
    %v428 = vadd.f32 %v427, %v290
    %v429 = vadd.f32 %v428, %v291
    %v430 = vadd.f32 %v429, %v292
    %v431 = vsel %vm313, %v293, 0.0
    %v432 = vadd.f32 %v430, %v431
    %433 = vadd.xlane.f32.xlu0 %v432
    %v434 = vpop.xlane.xlu0 %433
    %v435 = vadd.f32 %v294, %v295
    %v436 = vadd.f32 %v435, %v296
    %v437 = vadd.f32 %v436, %v297
    %v438 = vadd.f32 %v437, %v298
    %v439 = vadd.f32 %v438, %v299
    %v440 = vsel %vm313, %v300, 0.0
    %v441 = vadd.f32 %v439, %v440
    %442 = vadd.xlane.f32.xlu0 %v441
    %v443 = vpop.xlane.xlu0 %442
    %v444 = vadd.f32 %v301, %v302
    %v445 = vadd.f32 %v444, %v303
    %v446 = vadd.f32 %v445, %v304
    %v447 = vadd.f32 %v446, %v305
    %v448 = vadd.f32 %v447, %v306
    %v449 = vsel %vm313, %v307, 0.0
    %v450 = vadd.f32 %v448, %v449
    %451 = vadd.xlane.f32.xlu0 %v450
    %v452 = vpop.xlane.xlu0 %451
    %v453 = vmul.f32 %v317, 0.0012755102
    %v454 = vmul.f32 %v326, 0.0012755102
    %v455 = vmul.f32 %v335, 0.0012755102
    %v456 = vmul.f32 %v344, 0.0012755102
    %v457 = vmul.f32 %v353, 0.0012755102
    %v458 = vmul.f32 %v362, 0.0012755102
    %v459 = vmul.f32 %v371, 0.0012755102
    %v460 = vmul.f32 %v380, 0.0012755102
    %v461 = vmul.f32 %v389, 0.0012755102
    %v462 = vmul.f32 %v398, 0.0012755102
    %v463 = vmul.f32 %v407, 0.0012755102
    %v464 = vmul.f32 %v416, 0.0012755102
    %v465 = vmul.f32 %v425, 0.0012755102
    %v466 = vmul.f32 %v434, 0.0012755102
    %v467 = vmul.f32 %v443, 0.0012755102
    %v468 = vmul.f32 %v452, 0.0012755102
    %v469 = vsub.f32 %v196, %v453
    %v470 = vsub.f32 %v197, %v453
    %v471 = vsub.f32 %v198, %v453
    %v472 = vsub.f32 %v199, %v453
    %v473 = vsub.f32 %v200, %v453
    %v474 = vsub.f32 %v201, %v453
    %v475 = vsub.f32 %v202, %v453
    %v476 = vsub.f32 %v203, %v454
    %v477 = vsub.f32 %v204, %v454
    %v478 = vsub.f32 %v205, %v454
    %v479 = vsub.f32 %v206, %v454
    %v480 = vsub.f32 %v207, %v454
    %v481 = vsub.f32 %v208, %v454
    %v482 = vsub.f32 %v209, %v454
    %v483 = vsub.f32 %v210, %v455
    %v484 = vsub.f32 %v211, %v455
    %v485 = vsub.f32 %v212, %v455
    %v486 = vsub.f32 %v213, %v455
    %v487 = vsub.f32 %v214, %v455
    %v488 = vsub.f32 %v215, %v455
    %v489 = vsub.f32 %v216, %v455
    %v490 = vsub.f32 %v217, %v456
    %v491 = vsub.f32 %v218, %v456
    %v492 = vsub.f32 %v219, %v456
    %v493 = vsub.f32 %v220, %v456
    %v494 = vsub.f32 %v221, %v456
    %v495 = vsub.f32 %v222, %v456
    %v496 = vsub.f32 %v223, %v456
    %v497 = vsub.f32 %v224, %v457
    %v498 = vsub.f32 %v225, %v457
    %v499 = vsub.f32 %v226, %v457
    %v500 = vsub.f32 %v227, %v457
    %v501 = vsub.f32 %v228, %v457
    %v502 = vsub.f32 %v229, %v457
    %v503 = vsub.f32 %v230, %v457
    %v504 = vsub.f32 %v231, %v458
    %v505 = vsub.f32 %v232, %v458
    %v506 = vsub.f32 %v233, %v458
    %v507 = vsub.f32 %v234, %v458
    %v508 = vsub.f32 %v235, %v458
    %v509 = vsub.f32 %v236, %v458
    %v510 = vsub.f32 %v237, %v458
    %v511 = vsub.f32 %v238, %v459
    %v512 = vsub.f32 %v239, %v459
    %v513 = vsub.f32 %v240, %v459
    %v514 = vsub.f32 %v241, %v459
    %v515 = vsub.f32 %v242, %v459
    %v516 = vsub.f32 %v243, %v459
    %v517 = vsub.f32 %v244, %v459
    %v518 = vsub.f32 %v245, %v460
    %v519 = vsub.f32 %v246, %v460
    %v520 = vsub.f32 %v247, %v460
    %v521 = vsub.f32 %v248, %v460
    %v522 = vsub.f32 %v249, %v460
    %v523 = vsub.f32 %v250, %v460
    %v524 = vsub.f32 %v251, %v460
    %v525 = vsub.f32 %v252, %v461
    %v526 = vsub.f32 %v253, %v461
    %v527 = vsub.f32 %v254, %v461
    %v528 = vsub.f32 %v255, %v461
    %v529 = vsub.f32 %v256, %v461
    %v530 = vsub.f32 %v257, %v461
    %v531 = vsub.f32 %v258, %v461
    %v532 = vsub.f32 %v259, %v462
    %v533 = vsub.f32 %v260, %v462
    %v534 = vsub.f32 %v261, %v462
    %v535 = vsub.f32 %v262, %v462
    %v536 = vsub.f32 %v263, %v462
    %v537 = vsub.f32 %v264, %v462
    %v538 = vsub.f32 %v265, %v462
    %v539 = vsub.f32 %v266, %v463
    %v540 = vsub.f32 %v267, %v463
    %v541 = vsub.f32 %v268, %v463
    %v542 = vsub.f32 %v269, %v463
    %v543 = vsub.f32 %v270, %v463
    %v544 = vsub.f32 %v271, %v463
    %v545 = vsub.f32 %v272, %v463
    %v546 = vsub.f32 %v273, %v464
    %v547 = vsub.f32 %v274, %v464
    %v548 = vsub.f32 %v275, %v464
    %v549 = vsub.f32 %v276, %v464
    %v550 = vsub.f32 %v277, %v464
    %v551 = vsub.f32 %v278, %v464
    %v552 = vsub.f32 %v279, %v464
    %v553 = vsub.f32 %v280, %v465
    %v554 = vsub.f32 %v281, %v465
    %v555 = vsub.f32 %v282, %v465
    %v556 = vsub.f32 %v283, %v465
    %v557 = vsub.f32 %v284, %v465
    %v558 = vsub.f32 %v285, %v465
    %v559 = vsub.f32 %v286, %v465
    %v560 = vsub.f32 %v287, %v466
    %v561 = vsub.f32 %v288, %v466
    %v562 = vsub.f32 %v289, %v466
    %v563 = vsub.f32 %v290, %v466
    %v564 = vsub.f32 %v291, %v466
    %v565 = vsub.f32 %v292, %v466
    %v566 = vsub.f32 %v293, %v466
    %v567 = vsub.f32 %v294, %v467
    %v568 = vsub.f32 %v295, %v467
    %v569 = vsub.f32 %v296, %v467
    %v570 = vsub.f32 %v297, %v467
    %v571 = vsub.f32 %v298, %v467
    %v572 = vsub.f32 %v299, %v467
    %v573 = vsub.f32 %v300, %v467
    %v574 = vsub.f32 %v301, %v468
    %v575 = vsub.f32 %v302, %v468
    %v576 = vsub.f32 %v303, %v468
    %v577 = vsub.f32 %v304, %v468
    %v578 = vsub.f32 %v305, %v468
    %v579 = vsub.f32 %v306, %v468
    %v580 = vsub.f32 %v307, %v468
    %v581 = vmul.f32 %v469, %v469
    %v582 = vmul.f32 %v470, %v470
    %v583 = vmul.f32 %v471, %v471
    %v584 = vmul.f32 %v472, %v472
    %v585 = vmul.f32 %v473, %v473
    %v586 = vmul.f32 %v474, %v474
    %v587 = vmul.f32 %v475, %v475
    %v588 = vmul.f32 %v476, %v476
    %v589 = vmul.f32 %v477, %v477
    %v590 = vmul.f32 %v478, %v478
    %v591 = vmul.f32 %v479, %v479
    %v592 = vmul.f32 %v480, %v480
    %v593 = vmul.f32 %v481, %v481
    %v594 = vmul.f32 %v482, %v482
    %v595 = vmul.f32 %v483, %v483
    %v596 = vmul.f32 %v484, %v484
    %v597 = vmul.f32 %v485, %v485
    %v598 = vmul.f32 %v486, %v486
    %v599 = vmul.f32 %v487, %v487
    %v600 = vmul.f32 %v488, %v488
    %v601 = vmul.f32 %v489, %v489
    %v602 = vmul.f32 %v490, %v490
    %v603 = vmul.f32 %v491, %v491
    %v604 = vmul.f32 %v492, %v492
    %v605 = vmul.f32 %v493, %v493
    %v606 = vmul.f32 %v494, %v494
    %v607 = vmul.f32 %v495, %v495
    %v608 = vmul.f32 %v496, %v496
    %v609 = vmul.f32 %v497, %v497
    %v610 = vmul.f32 %v498, %v498
    %v611 = vmul.f32 %v499, %v499
    %v612 = vmul.f32 %v500, %v500
    %v613 = vmul.f32 %v501, %v501
    %v614 = vmul.f32 %v502, %v502
    %v615 = vmul.f32 %v503, %v503
    %v616 = vmul.f32 %v504, %v504
    %v617 = vmul.f32 %v505, %v505
    %v618 = vmul.f32 %v506, %v506
    %v619 = vmul.f32 %v507, %v507
    %v620 = vmul.f32 %v508, %v508
    %v621 = vmul.f32 %v509, %v509
    %v622 = vmul.f32 %v510, %v510
    %v623 = vmul.f32 %v511, %v511
    %v624 = vmul.f32 %v512, %v512
    %v625 = vmul.f32 %v513, %v513
    %v626 = vmul.f32 %v514, %v514
    %v627 = vmul.f32 %v515, %v515
    %v628 = vmul.f32 %v516, %v516
    %v629 = vmul.f32 %v517, %v517
    %v630 = vmul.f32 %v518, %v518
    %v631 = vmul.f32 %v519, %v519
    %v632 = vmul.f32 %v520, %v520
    %v633 = vmul.f32 %v521, %v521
    %v634 = vmul.f32 %v522, %v522
    %v635 = vmul.f32 %v523, %v523
    %v636 = vmul.f32 %v524, %v524
    %v637 = vmul.f32 %v525, %v525
    %v638 = vmul.f32 %v526, %v526
    %v639 = vmul.f32 %v527, %v527
    %v640 = vmul.f32 %v528, %v528
    %v641 = vmul.f32 %v529, %v529
    %v642 = vmul.f32 %v530, %v530
    %v643 = vmul.f32 %v531, %v531
    %v644 = vmul.f32 %v532, %v532
    %v645 = vmul.f32 %v533, %v533
    %v646 = vmul.f32 %v534, %v534
    %v647 = vmul.f32 %v535, %v535
    %v648 = vmul.f32 %v536, %v536
    %v649 = vmul.f32 %v537, %v537
    %v650 = vmul.f32 %v538, %v538
    %v651 = vmul.f32 %v539, %v539
    %v652 = vmul.f32 %v540, %v540
    %v653 = vmul.f32 %v541, %v541
    %v654 = vmul.f32 %v542, %v542
    %v655 = vmul.f32 %v543, %v543
    %v656 = vmul.f32 %v544, %v544
    %v657 = vmul.f32 %v545, %v545
    %v658 = vmul.f32 %v546, %v546
    %v659 = vmul.f32 %v547, %v547
    %v660 = vmul.f32 %v548, %v548
    %v661 = vmul.f32 %v549, %v549
    %v662 = vmul.f32 %v550, %v550
    %v663 = vmul.f32 %v551, %v551
    %v664 = vmul.f32 %v552, %v552
    %v665 = vmul.f32 %v553, %v553
    %v666 = vmul.f32 %v554, %v554
    %v667 = vmul.f32 %v555, %v555
    %v668 = vmul.f32 %v556, %v556
    %v669 = vmul.f32 %v557, %v557
    %v670 = vmul.f32 %v558, %v558
    %v671 = vmul.f32 %v559, %v559
    %v672 = vmul.f32 %v560, %v560
    %v673 = vmul.f32 %v561, %v561
    %v674 = vmul.f32 %v562, %v562
    %v675 = vmul.f32 %v563, %v563
    %v676 = vmul.f32 %v564, %v564
    %v677 = vmul.f32 %v565, %v565
    %v678 = vmul.f32 %v566, %v566
    %v679 = vmul.f32 %v567, %v567
    %v680 = vmul.f32 %v568, %v568
    %v681 = vmul.f32 %v569, %v569
    %v682 = vmul.f32 %v570, %v570
    %v683 = vmul.f32 %v571, %v571
    %v684 = vmul.f32 %v572, %v572
    %v685 = vmul.f32 %v573, %v573
    %v686 = vmul.f32 %v574, %v574
    %v687 = vmul.f32 %v575, %v575
    %v688 = vmul.f32 %v576, %v576
    %v689 = vmul.f32 %v577, %v577
    %v690 = vmul.f32 %v578, %v578
    %v691 = vmul.f32 %v579, %v579
    %v692 = vmul.f32 %v580, %v580
    %v693 = vadd.f32 %v581, %v582
    %v694 = vadd.f32 %v693, %v583
    %v695 = vadd.f32 %v694, %v584
    %v696 = vadd.f32 %v695, %v585
    %v697 = vadd.f32 %v696, %v586
    %v698 = vsel %vm313, %v587, 0.0
    %v699 = vadd.f32 %v697, %v698
    %700 = vadd.xlane.f32.xlu0 %v699
    %v701 = vpop.xlane.xlu0 %700
    %v702 = vadd.f32 %v588, %v589
    %v703 = vadd.f32 %v702, %v590
    %v704 = vadd.f32 %v703, %v591
    %v705 = vadd.f32 %v704, %v592
    %v706 = vadd.f32 %v705, %v593
    %v707 = vsel %vm313, %v594, 0.0
    %v708 = vadd.f32 %v706, %v707
    %709 = vadd.xlane.f32.xlu0 %v708
    %v710 = vpop.xlane.xlu0 %709
    %v711 = vadd.f32 %v595, %v596
    %v712 = vadd.f32 %v711, %v597
    %v713 = vadd.f32 %v712, %v598
    %v714 = vadd.f32 %v713, %v599
    %v715 = vadd.f32 %v714, %v600
    %v716 = vsel %vm313, %v601, 0.0
    %v717 = vadd.f32 %v715, %v716
    %718 = vadd.xlane.f32.xlu0 %v717
    %v719 = vpop.xlane.xlu0 %718
    %v720 = vadd.f32 %v602, %v603
    %v721 = vadd.f32 %v720, %v604
    %v722 = vadd.f32 %v721, %v605
    %v723 = vadd.f32 %v722, %v606
    %v724 = vadd.f32 %v723, %v607
    %v725 = vsel %vm313, %v608, 0.0
    %v726 = vadd.f32 %v724, %v725
    %727 = vadd.xlane.f32.xlu0 %v726
    %v728 = vpop.xlane.xlu0 %727
    %v729 = vadd.f32 %v609, %v610
    %v730 = vadd.f32 %v729, %v611
    %v731 = vadd.f32 %v730, %v612
    %v732 = vadd.f32 %v731, %v613
    %v733 = vadd.f32 %v732, %v614
    %v734 = vsel %vm313, %v615, 0.0
    %v735 = vadd.f32 %v733, %v734
    %736 = vadd.xlane.f32.xlu0 %v735
    %v737 = vpop.xlane.xlu0 %736
    %v738 = vadd.f32 %v616, %v617
    %v739 = vadd.f32 %v738, %v618
    %v740 = vadd.f32 %v739, %v619
    %v741 = vadd.f32 %v740, %v620
    %v742 = vadd.f32 %v741, %v621
    %v743 = vsel %vm313, %v622, 0.0
    %v744 = vadd.f32 %v742, %v743
    %745 = vadd.xlane.f32.xlu0 %v744
    %v746 = vpop.xlane.xlu0 %745
    %v747 = vadd.f32 %v623, %v624
    %v748 = vadd.f32 %v747, %v625
    %v749 = vadd.f32 %v748, %v626
    %v750 = vadd.f32 %v749, %v627
    %v751 = vadd.f32 %v750, %v628
    %v752 = vsel %vm313, %v629, 0.0
    %v753 = vadd.f32 %v751, %v752
    %754 = vadd.xlane.f32.xlu0 %v753
    %v755 = vpop.xlane.xlu0 %754
    %v756 = vadd.f32 %v630, %v631
    %v757 = vadd.f32 %v756, %v632
    %v758 = vadd.f32 %v757, %v633
    %v759 = vadd.f32 %v758, %v634
    %v760 = vadd.f32 %v759, %v635
    %v761 = vsel %vm313, %v636, 0.0
    %v762 = vadd.f32 %v760, %v761
    %763 = vadd.xlane.f32.xlu0 %v762
    %v764 = vpop.xlane.xlu0 %763
    %v765 = vadd.f32 %v637, %v638
    %v766 = vadd.f32 %v765, %v639
    %v767 = vadd.f32 %v766, %v640
    %v768 = vadd.f32 %v767, %v641
    %v769 = vadd.f32 %v768, %v642
    %v770 = vsel %vm313, %v643, 0.0
    %v771 = vadd.f32 %v769, %v770
    %772 = vadd.xlane.f32.xlu0 %v771
    %v773 = vpop.xlane.xlu0 %772
    %v774 = vadd.f32 %v644, %v645
    %v775 = vadd.f32 %v774, %v646
    %v776 = vadd.f32 %v775, %v647
    %v777 = vadd.f32 %v776, %v648
    %v778 = vadd.f32 %v777, %v649
    %v779 = vsel %vm313, %v650, 0.0
    %v780 = vadd.f32 %v778, %v779
    %781 = vadd.xlane.f32.xlu0 %v780
    %v782 = vpop.xlane.xlu0 %781
    %v783 = vadd.f32 %v651, %v652
    %v784 = vadd.f32 %v783, %v653
    %v785 = vadd.f32 %v784, %v654
    %v786 = vadd.f32 %v785, %v655
    %v787 = vadd.f32 %v786, %v656
    %v788 = vsel %vm313, %v657, 0.0
    %v789 = vadd.f32 %v787, %v788
    %790 = vadd.xlane.f32.xlu0 %v789
    %v791 = vpop.xlane.xlu0 %790
    %v792 = vadd.f32 %v658, %v659
    %v793 = vadd.f32 %v792, %v660
    %v794 = vadd.f32 %v793, %v661
    %v795 = vadd.f32 %v794, %v662
    %v796 = vadd.f32 %v795, %v663
    %v797 = vsel %vm313, %v664, 0.0
    %v798 = vadd.f32 %v796, %v797
    %799 = vadd.xlane.f32.xlu0 %v798
    %v800 = vpop.xlane.xlu0 %799
    %v801 = vadd.f32 %v665, %v666
    %v802 = vadd.f32 %v801, %v667
    %v803 = vadd.f32 %v802, %v668
    %v804 = vadd.f32 %v803, %v669
    %v805 = vadd.f32 %v804, %v670
    %v806 = vsel %vm313, %v671, 0.0
    %v807 = vadd.f32 %v805, %v806
    %808 = vadd.xlane.f32.xlu0 %v807
    %v809 = vpop.xlane.xlu0 %808
    %v810 = vadd.f32 %v672, %v673
    %v811 = vadd.f32 %v810, %v674
    %v812 = vadd.f32 %v811, %v675
    %v813 = vadd.f32 %v812, %v676
    %v814 = vadd.f32 %v813, %v677
    %v815 = vsel %vm313, %v678, 0.0
    %v816 = vadd.f32 %v814, %v815
    %817 = vadd.xlane.f32.xlu0 %v816
    %v818 = vpop.xlane.xlu0 %817
    %v819 = vadd.f32 %v679, %v680
    %v820 = vadd.f32 %v819, %v681
    %v821 = vadd.f32 %v820, %v682
    %v822 = vadd.f32 %v821, %v683
    %v823 = vadd.f32 %v822, %v684
    %v824 = vsel %vm313, %v685, 0.0
    %v825 = vadd.f32 %v823, %v824
    %826 = vadd.xlane.f32.xlu0 %v825
    %v827 = vpop.xlane.xlu0 %826
    %v828 = vadd.f32 %v686, %v687
    %v829 = vadd.f32 %v828, %v688
    %v830 = vadd.f32 %v829, %v689
    %v831 = vadd.f32 %v830, %v690
    %v832 = vadd.f32 %v831, %v691
    %v833 = vsel %vm313, %v692, 0.0
    %v834 = vadd.f32 %v832, %v833
    %835 = vadd.xlane.f32.xlu0 %v834
    %v836 = vpop.xlane.xlu0 %835
    %v837 = vmul.f32 %v701, 0.0012755102
    %v838 = vmul.f32 %v710, 0.0012755102
    %v839 = vmul.f32 %v719, 0.0012755102
    %v840 = vmul.f32 %v728, 0.0012755102
    %v841 = vmul.f32 %v737, 0.0012755102
    %v842 = vmul.f32 %v746, 0.0012755102
    %v843 = vmul.f32 %v755, 0.0012755102
    %v844 = vmul.f32 %v764, 0.0012755102
    %v845 = vmul.f32 %v773, 0.0012755102
    %v846 = vmul.f32 %v782, 0.0012755102
    %v847 = vmul.f32 %v791, 0.0012755102
    %v848 = vmul.f32 %v800, 0.0012755102
    %v849 = vmul.f32 %v809, 0.0012755102
    %v850 = vmul.f32 %v818, 0.0012755102
    %v851 = vmul.f32 %v827, 0.0012755102
    %v852 = vmul.f32 %v836, 0.0012755102
    %v853 = vld [vmem:[%s12] sm:$0xff]
    %v854 = vld [vmem:[%s12 + $0x8] sm:$0xff]
    %v855 = vld [vmem:[%s12 + $0x10] sm:$0xff]
    %v856 = vld [vmem:[%s12 + $0x18] sm:$0xff]
    %v857 = vld [vmem:[%s12 + $0x20] sm:$0xff]
    %v858 = vld [vmem:[%s12 + $0x28] sm:$0xff]
    %v859 = vld [vmem:[%s12 + $0x30] sm:$0xff]
    %v860 = vld [vmem:[%s12 + $0x38] sm:$0xff]
    %v861 = vld [vmem:[%s12 + $0x40] sm:$0xff]
    %v862 = vld [vmem:[%s12 + $0x48] sm:$0xff]
    %v863 = vld [vmem:[%s12 + $0x50] sm:$0xff]
    %v864 = vld [vmem:[%s12 + $0x58] sm:$0xff]
    %v865 = vld [vmem:[%s12 + $0x60] sm:$0xff]
    %v866 = vld [vmem:[%s12 + $0x68] sm:$0xff]
    %v867 = vld [vmem:[%s12 + $0x70] sm:$0xff]
    %v868 = vld [vmem:[%s12 + $0x78] sm:$0xff]
    %v869 = vld [vmem:[%s13] sm:$0xff]
    %v870 = vld [vmem:[%s13 + $0x8] sm:$0xff]
    %v871 = vld [vmem:[%s13 + $0x10] sm:$0xff]
    %v872 = vld [vmem:[%s13 + $0x18] sm:$0xff]
    %v873 = vld [vmem:[%s13 + $0x20] sm:$0xff]
    %v874 = vld [vmem:[%s13 + $0x28] sm:$0xff]
    %v875 = vld [vmem:[%s13 + $0x30] sm:$0xff]
    %v876 = vld [vmem:[%s13 + $0x38] sm:$0xff]
    %v877 = vld [vmem:[%s13 + $0x40] sm:$0xff]
    %v878 = vld [vmem:[%s13 + $0x48] sm:$0xff]
    %v879 = vld [vmem:[%s13 + $0x50] sm:$0xff]
    %v880 = vld [vmem:[%s13 + $0x58] sm:$0xff]
    %v881 = vld [vmem:[%s13 + $0x60] sm:$0xff]
    %v882 = vld [vmem:[%s13 + $0x68] sm:$0xff]
    %v883 = vld [vmem:[%s13 + $0x70] sm:$0xff]
    %v884 = vld [vmem:[%s13 + $0x78] sm:$0xff]
    %v885 = vadd.f32 %v837, 1e-05
    %v886 = vadd.f32 %v838, 1e-05
    %v887 = vadd.f32 %v839, 1e-05
    %v888 = vadd.f32 %v840, 1e-05
    %v889 = vadd.f32 %v841, 1e-05
    %v890 = vadd.f32 %v842, 1e-05
    %v891 = vadd.f32 %v843, 1e-05
    %v892 = vadd.f32 %v844, 1e-05
    %v893 = vadd.f32 %v845, 1e-05
    %v894 = vadd.f32 %v846, 1e-05
    %v895 = vadd.f32 %v847, 1e-05
    %v896 = vadd.f32 %v848, 1e-05
    %v897 = vadd.f32 %v849, 1e-05
    %v898 = vadd.f32 %v850, 1e-05
    %v899 = vadd.f32 %v851, 1e-05
    %v900 = vadd.f32 %v852, 1e-05
    %v901 = vrsqrt.pop %v885
    %v902 = vrsqrt.pop %v886
    %v903 = vrsqrt.pop %v887
    %v904 = vrsqrt.pop %v888
    %v905 = vrsqrt.pop %v889
    %v906 = vrsqrt.pop %v890
    %v907 = vrsqrt.pop %v891
    %v908 = vrsqrt.pop %v892
    %v909 = vrsqrt.pop %v893
    %v910 = vrsqrt.pop %v894
    %v911 = vrsqrt.pop %v895
    %v912 = vrsqrt.pop %v896
    %v913 = vrsqrt.pop %v897
    %v914 = vrsqrt.pop %v898
    %v915 = vrsqrt.pop %v899
    %v916 = vrsqrt.pop %v900
    %v917 = vmul.f32 %v901, %v853
    %v918 = vmul.f32 %v902, %v854
    %v919 = vmul.f32 %v903, %v855
    %v920 = vmul.f32 %v904, %v856
    %v921 = vmul.f32 %v905, %v857
    %v922 = vmul.f32 %v906, %v858
    %v923 = vmul.f32 %v907, %v859
    %v924 = vmul.f32 %v908, %v860
    %v925 = vmul.f32 %v909, %v861
    %v926 = vmul.f32 %v910, %v862
    %v927 = vmul.f32 %v911, %v863
    %v928 = vmul.f32 %v912, %v864
    %v929 = vmul.f32 %v913, %v865
    %v930 = vmul.f32 %v914, %v866
    %v931 = vmul.f32 %v915, %v867
    %v932 = vmul.f32 %v916, %v868
    %v933 = vmul.f32 %v453, %v917
    %v934 = vmul.f32 %v454, %v918
    %v935 = vmul.f32 %v455, %v919
    %v936 = vmul.f32 %v456, %v920
    %v937 = vmul.f32 %v457, %v921
    %v938 = vmul.f32 %v458, %v922
    %v939 = vmul.f32 %v459, %v923
    %v940 = vmul.f32 %v460, %v924
    %v941 = vmul.f32 %v461, %v925
    %v942 = vmul.f32 %v462, %v926
    %v943 = vmul.f32 %v463, %v927
    %v944 = vmul.f32 %v464, %v928
    %v945 = vmul.f32 %v465, %v929
    %v946 = vmul.f32 %v466, %v930
    %v947 = vmul.f32 %v467, %v931
    %v948 = vmul.f32 %v468, %v932
    %v949 = vsub.f32 %v869, %v933
    %v950 = vsub.f32 %v870, %v934
    %v951 = vsub.f32 %v871, %v935
    %v952 = vsub.f32 %v872, %v936
    %v953 = vsub.f32 %v873, %v937
    %v954 = vsub.f32 %v874, %v938
    %v955 = vsub.f32 %v875, %v939
    %v956 = vsub.f32 %v876, %v940
    %v957 = vsub.f32 %v877, %v941
    %v958 = vsub.f32 %v878, %v942
    %v959 = vsub.f32 %v879, %v943
    %v960 = vsub.f32 %v880, %v944
    %v961 = vsub.f32 %v881, %v945
    %v962 = vsub.f32 %v882, %v946
    %v963 = vsub.f32 %v883, %v947
    %v964 = vsub.f32 %v884, %v948
    %966 = vset.pattern.permute.xlu0 0
    %967 = vperm.xlu0 %966, %v917
    %v968 = vpop.permute.xlu0 %967
    %971 = vset.pattern.permute.xlu0 0
    %972 = vperm.xlu0 %971, %v918
    %v973 = vpop.permute.xlu0 %972
    %976 = vset.pattern.permute.xlu0 0
    %977 = vperm.xlu0 %976, %v919
    %v978 = vpop.permute.xlu0 %977
    %981 = vset.pattern.permute.xlu0 0
    %982 = vperm.xlu0 %981, %v920
    %v983 = vpop.permute.xlu0 %982
    %986 = vset.pattern.permute.xlu0 0
    %987 = vperm.xlu0 %986, %v921
    %v988 = vpop.permute.xlu0 %987
    %991 = vset.pattern.permute.xlu0 0
    %992 = vperm.xlu0 %991, %v922
    %v993 = vpop.permute.xlu0 %992
    %996 = vset.pattern.permute.xlu0 0
    %997 = vperm.xlu0 %996, %v923
    %v998 = vpop.permute.xlu0 %997
    %1001 = vset.pattern.permute.xlu0 0
    %1002 = vperm.xlu0 %1001, %v924
    %v1003 = vpop.permute.xlu0 %1002
    %1006 = vset.pattern.permute.xlu0 0
    %1007 = vperm.xlu0 %1006, %v925
    %v1008 = vpop.permute.xlu0 %1007
    %1011 = vset.pattern.permute.xlu0 0
    %1012 = vperm.xlu0 %1011, %v926
    %v1013 = vpop.permute.xlu0 %1012
    %1016 = vset.pattern.permute.xlu0 0
    %1017 = vperm.xlu0 %1016, %v927
    %v1018 = vpop.permute.xlu0 %1017
    %1021 = vset.pattern.permute.xlu0 0
    %1022 = vperm.xlu0 %1021, %v928
    %v1023 = vpop.permute.xlu0 %1022
    %1026 = vset.pattern.permute.xlu0 0
    %1027 = vperm.xlu0 %1026, %v929
    %v1028 = vpop.permute.xlu0 %1027
    %1031 = vset.pattern.permute.xlu0 0
    %1032 = vperm.xlu0 %1031, %v930
    %v1033 = vpop.permute.xlu0 %1032
    %1036 = vset.pattern.permute.xlu0 0
    %1037 = vperm.xlu0 %1036, %v931
    %v1038 = vpop.permute.xlu0 %1037
    %1041 = vset.pattern.permute.xlu0 0
    %1042 = vperm.xlu0 %1041, %v932
    %v1043 = vpop.permute.xlu0 %1042
    %v1045 = vmul.f32 %v196, %v968
    %v1046 = vmul.f32 %v197, %v968
    %v1047 = vmul.f32 %v198, %v968
    %v1048 = vmul.f32 %v199, %v968
    %v1049 = vmul.f32 %v200, %v968
    %v1050 = vmul.f32 %v201, %v968
    %v1051 = vmul.f32 %v202, %v968
    %v1052 = vmul.f32 %v203, %v973
    %v1053 = vmul.f32 %v204, %v973
    %v1054 = vmul.f32 %v205, %v973
    %v1055 = vmul.f32 %v206, %v973
    %v1056 = vmul.f32 %v207, %v973
    %v1057 = vmul.f32 %v208, %v973
    %v1058 = vmul.f32 %v209, %v973
    %v1059 = vmul.f32 %v210, %v978
    %v1060 = vmul.f32 %v211, %v978
    %v1061 = vmul.f32 %v212, %v978
    %v1062 = vmul.f32 %v213, %v978
    %v1063 = vmul.f32 %v214, %v978
    %v1064 = vmul.f32 %v215, %v978
    %v1065 = vmul.f32 %v216, %v978
    %v1066 = vmul.f32 %v217, %v983
    %v1067 = vmul.f32 %v218, %v983
    %v1068 = vmul.f32 %v219, %v983
    %v1069 = vmul.f32 %v220, %v983
    %v1070 = vmul.f32 %v221, %v983
    %v1071 = vmul.f32 %v222, %v983
    %v1072 = vmul.f32 %v223, %v983
    %v1073 = vmul.f32 %v224, %v988
    %v1074 = vmul.f32 %v225, %v988
    %v1075 = vmul.f32 %v226, %v988
    %v1076 = vmul.f32 %v227, %v988
    %v1077 = vmul.f32 %v228, %v988
    %v1078 = vmul.f32 %v229, %v988
    %v1079 = vmul.f32 %v230, %v988
    %v1080 = vmul.f32 %v231, %v993
    %v1081 = vmul.f32 %v232, %v993
    %v1082 = vmul.f32 %v233, %v993
    %v1083 = vmul.f32 %v234, %v993
    %v1084 = vmul.f32 %v235, %v993
    %v1085 = vmul.f32 %v236, %v993
    %v1086 = vmul.f32 %v237, %v993
    %v1087 = vmul.f32 %v238, %v998
    %v1088 = vmul.f32 %v239, %v998
    %v1089 = vmul.f32 %v240, %v998
    %v1090 = vmul.f32 %v241, %v998
    %v1091 = vmul.f32 %v242, %v998
    %v1092 = vmul.f32 %v243, %v998
    %v1093 = vmul.f32 %v244, %v998
    %v1094 = vmul.f32 %v245, %v1003
    %v1095 = vmul.f32 %v246, %v1003
    %v1096 = vmul.f32 %v247, %v1003
    %v1097 = vmul.f32 %v248, %v1003
    %v1098 = vmul.f32 %v249, %v1003
    %v1099 = vmul.f32 %v250, %v1003
    %v1100 = vmul.f32 %v251, %v1003
    %v1101 = vmul.f32 %v252, %v1008
    %v1102 = vmul.f32 %v253, %v1008
    %v1103 = vmul.f32 %v254, %v1008
    %v1104 = vmul.f32 %v255, %v1008
    %v1105 = vmul.f32 %v256, %v1008
    %v1106 = vmul.f32 %v257, %v1008
    %v1107 = vmul.f32 %v258, %v1008
    %v1108 = vmul.f32 %v259, %v1013
    %v1109 = vmul.f32 %v260, %v1013
    %v1110 = vmul.f32 %v261, %v1013
    %v1111 = vmul.f32 %v262, %v1013
    %v1112 = vmul.f32 %v263, %v1013
    %v1113 = vmul.f32 %v264, %v1013
    %v1114 = vmul.f32 %v265, %v1013
    %v1115 = vmul.f32 %v266, %v1018
    %v1116 = vmul.f32 %v267, %v1018
    %v1117 = vmul.f32 %v268, %v1018
    %v1118 = vmul.f32 %v269, %v1018
    %v1119 = vmul.f32 %v270, %v1018
    %v1120 = vmul.f32 %v271, %v1018
    %v1121 = vmul.f32 %v272, %v1018
    %v1122 = vmul.f32 %v273, %v1023
    %v1123 = vmul.f32 %v274, %v1023
    %v1124 = vmul.f32 %v275, %v1023
    %v1125 = vmul.f32 %v276, %v1023
    %v1126 = vmul.f32 %v277, %v1023
    %v1127 = vmul.f32 %v278, %v1023
    %v1128 = vmul.f32 %v279, %v1023
    %v1129 = vmul.f32 %v280, %v1028
    %v1130 = vmul.f32 %v281, %v1028
    %v1131 = vmul.f32 %v282, %v1028
    %v1132 = vmul.f32 %v283, %v1028
    %v1133 = vmul.f32 %v284, %v1028
    %v1134 = vmul.f32 %v285, %v1028
    %v1135 = vmul.f32 %v286, %v1028
    %v1136 = vmul.f32 %v287, %v1033
    %v1137 = vmul.f32 %v288, %v1033
    %v1138 = vmul.f32 %v289, %v1033
    %v1139 = vmul.f32 %v290, %v1033
    %v1140 = vmul.f32 %v291, %v1033
    %v1141 = vmul.f32 %v292, %v1033
    %v1142 = vmul.f32 %v293, %v1033
    %v1143 = vmul.f32 %v294, %v1038
    %v1144 = vmul.f32 %v295, %v1038
    %v1145 = vmul.f32 %v296, %v1038
    %v1146 = vmul.f32 %v297, %v1038
    %v1147 = vmul.f32 %v298, %v1038
    %v1148 = vmul.f32 %v299, %v1038
    %v1149 = vmul.f32 %v300, %v1038
    %v1150 = vmul.f32 %v301, %v1043
    %v1151 = vmul.f32 %v302, %v1043
    %v1152 = vmul.f32 %v303, %v1043
    %v1153 = vmul.f32 %v304, %v1043
    %v1154 = vmul.f32 %v305, %v1043
    %v1155 = vmul.f32 %v306, %v1043
    %v1156 = vmul.f32 %v307, %v1043
    %1158 = vset.pattern.permute.xlu0 0
    %1159 = vperm.xlu0 %1158, %v949
    %v1160 = vpop.permute.xlu0 %1159
    %1163 = vset.pattern.permute.xlu0 0
    %1164 = vperm.xlu0 %1163, %v950
    %v1165 = vpop.permute.xlu0 %1164
    %1168 = vset.pattern.permute.xlu0 0
    %1169 = vperm.xlu0 %1168, %v951
    %v1170 = vpop.permute.xlu0 %1169
    %1173 = vset.pattern.permute.xlu0 0
    %1174 = vperm.xlu0 %1173, %v952
    %v1175 = vpop.permute.xlu0 %1174
    %1178 = vset.pattern.permute.xlu0 0
    %1179 = vperm.xlu0 %1178, %v953
    %v1180 = vpop.permute.xlu0 %1179
    %1183 = vset.pattern.permute.xlu0 0
    %1184 = vperm.xlu0 %1183, %v954
    %v1185 = vpop.permute.xlu0 %1184
    %1188 = vset.pattern.permute.xlu0 0
    %1189 = vperm.xlu0 %1188, %v955
    %v1190 = vpop.permute.xlu0 %1189
    %1193 = vset.pattern.permute.xlu0 0
    %1194 = vperm.xlu0 %1193, %v956
    %v1195 = vpop.permute.xlu0 %1194
    %1198 = vset.pattern.permute.xlu0 0
    %1199 = vperm.xlu0 %1198, %v957
    %v1200 = vpop.permute.xlu0 %1199
    %1203 = vset.pattern.permute.xlu0 0
    %1204 = vperm.xlu0 %1203, %v958
    %v1205 = vpop.permute.xlu0 %1204
    %1208 = vset.pattern.permute.xlu0 0
    %1209 = vperm.xlu0 %1208, %v959
    %v1210 = vpop.permute.xlu0 %1209
    %1213 = vset.pattern.permute.xlu0 0
    %1214 = vperm.xlu0 %1213, %v960
    %v1215 = vpop.permute.xlu0 %1214
    %1218 = vset.pattern.permute.xlu0 0
    %1219 = vperm.xlu0 %1218, %v961
    %v1220 = vpop.permute.xlu0 %1219
    %1223 = vset.pattern.permute.xlu0 0
    %1224 = vperm.xlu0 %1223, %v962
    %v1225 = vpop.permute.xlu0 %1224
    %1228 = vset.pattern.permute.xlu0 0
    %1229 = vperm.xlu0 %1228, %v963
    %v1230 = vpop.permute.xlu0 %1229
    %1233 = vset.pattern.permute.xlu0 0
    %1234 = vperm.xlu0 %1233, %v964
    %v1235 = vpop.permute.xlu0 %1234
    %v1237 = vadd.f32 %v1045, %v1160
    %v1238 = vadd.f32 %v1046, %v1160
    %v1239 = vadd.f32 %v1047, %v1160
    %v1240 = vadd.f32 %v1048, %v1160
    %v1241 = vadd.f32 %v1049, %v1160
    %v1242 = vadd.f32 %v1050, %v1160
    %v1243 = vadd.f32 %v1051, %v1160
    %v1244 = vadd.f32 %v1052, %v1165
    %v1245 = vadd.f32 %v1053, %v1165
    %v1246 = vadd.f32 %v1054, %v1165
    %v1247 = vadd.f32 %v1055, %v1165
    %v1248 = vadd.f32 %v1056, %v1165
    %v1249 = vadd.f32 %v1057, %v1165
    %v1250 = vadd.f32 %v1058, %v1165
    %v1251 = vadd.f32 %v1059, %v1170
    %v1252 = vadd.f32 %v1060, %v1170
    %v1253 = vadd.f32 %v1061, %v1170
    %v1254 = vadd.f32 %v1062, %v1170
    %v1255 = vadd.f32 %v1063, %v1170
    %v1256 = vadd.f32 %v1064, %v1170
    %v1257 = vadd.f32 %v1065, %v1170
    %v1258 = vadd.f32 %v1066, %v1175
    %v1259 = vadd.f32 %v1067, %v1175
    %v1260 = vadd.f32 %v1068, %v1175
    %v1261 = vadd.f32 %v1069, %v1175
    %v1262 = vadd.f32 %v1070, %v1175
    %v1263 = vadd.f32 %v1071, %v1175
    %v1264 = vadd.f32 %v1072, %v1175
    %v1265 = vadd.f32 %v1073, %v1180
    %v1266 = vadd.f32 %v1074, %v1180
    %v1267 = vadd.f32 %v1075, %v1180
    %v1268 = vadd.f32 %v1076, %v1180
    %v1269 = vadd.f32 %v1077, %v1180
    %v1270 = vadd.f32 %v1078, %v1180
    %v1271 = vadd.f32 %v1079, %v1180
    %v1272 = vadd.f32 %v1080, %v1185
    %v1273 = vadd.f32 %v1081, %v1185
    %v1274 = vadd.f32 %v1082, %v1185
    %v1275 = vadd.f32 %v1083, %v1185
    %v1276 = vadd.f32 %v1084, %v1185
    %v1277 = vadd.f32 %v1085, %v1185
    %v1278 = vadd.f32 %v1086, %v1185
    %v1279 = vadd.f32 %v1087, %v1190
    %v1280 = vadd.f32 %v1088, %v1190
    %v1281 = vadd.f32 %v1089, %v1190
    %v1282 = vadd.f32 %v1090, %v1190
    %v1283 = vadd.f32 %v1091, %v1190
    %v1284 = vadd.f32 %v1092, %v1190
    %v1285 = vadd.f32 %v1093, %v1190
    %v1286 = vadd.f32 %v1094, %v1195
    %v1287 = vadd.f32 %v1095, %v1195
    %v1288 = vadd.f32 %v1096, %v1195
    %v1289 = vadd.f32 %v1097, %v1195
    %v1290 = vadd.f32 %v1098, %v1195
    %v1291 = vadd.f32 %v1099, %v1195
    %v1292 = vadd.f32 %v1100, %v1195
    %v1293 = vadd.f32 %v1101, %v1200
    %v1294 = vadd.f32 %v1102, %v1200
    %v1295 = vadd.f32 %v1103, %v1200
    %v1296 = vadd.f32 %v1104, %v1200
    %v1297 = vadd.f32 %v1105, %v1200
    %v1298 = vadd.f32 %v1106, %v1200
    %v1299 = vadd.f32 %v1107, %v1200
    %v1300 = vadd.f32 %v1108, %v1205
    %v1301 = vadd.f32 %v1109, %v1205
    %v1302 = vadd.f32 %v1110, %v1205
    %v1303 = vadd.f32 %v1111, %v1205
    %v1304 = vadd.f32 %v1112, %v1205
    %v1305 = vadd.f32 %v1113, %v1205
    %v1306 = vadd.f32 %v1114, %v1205
    %v1307 = vadd.f32 %v1115, %v1210
    %v1308 = vadd.f32 %v1116, %v1210
    %v1309 = vadd.f32 %v1117, %v1210
    %v1310 = vadd.f32 %v1118, %v1210
    %v1311 = vadd.f32 %v1119, %v1210
    %v1312 = vadd.f32 %v1120, %v1210
    %v1313 = vadd.f32 %v1121, %v1210
    %v1314 = vadd.f32 %v1122, %v1215
    %v1315 = vadd.f32 %v1123, %v1215
    %v1316 = vadd.f32 %v1124, %v1215
    %v1317 = vadd.f32 %v1125, %v1215
    %v1318 = vadd.f32 %v1126, %v1215
    %v1319 = vadd.f32 %v1127, %v1215
    %v1320 = vadd.f32 %v1128, %v1215
    %v1321 = vadd.f32 %v1129, %v1220
    %v1322 = vadd.f32 %v1130, %v1220
    %v1323 = vadd.f32 %v1131, %v1220
    %v1324 = vadd.f32 %v1132, %v1220
    %v1325 = vadd.f32 %v1133, %v1220
    %v1326 = vadd.f32 %v1134, %v1220
    %v1327 = vadd.f32 %v1135, %v1220
    %v1328 = vadd.f32 %v1136, %v1225
    %v1329 = vadd.f32 %v1137, %v1225
    %v1330 = vadd.f32 %v1138, %v1225
    %v1331 = vadd.f32 %v1139, %v1225
    %v1332 = vadd.f32 %v1140, %v1225
    %v1333 = vadd.f32 %v1141, %v1225
    %v1334 = vadd.f32 %v1142, %v1225
    %v1335 = vadd.f32 %v1143, %v1230
    %v1336 = vadd.f32 %v1144, %v1230
    %v1337 = vadd.f32 %v1145, %v1230
    %v1338 = vadd.f32 %v1146, %v1230
    %v1339 = vadd.f32 %v1147, %v1230
    %v1340 = vadd.f32 %v1148, %v1230
    %v1341 = vadd.f32 %v1149, %v1230
    %v1342 = vadd.f32 %v1150, %v1235
    %v1343 = vadd.f32 %v1151, %v1235
    %v1344 = vadd.f32 %v1152, %v1235
    %v1345 = vadd.f32 %v1153, %v1235
    %v1346 = vadd.f32 %v1154, %v1235
    %v1347 = vadd.f32 %v1155, %v1235
    %v1348 = vadd.f32 %v1156, %v1235
    %1349 = vst [vmem:[%s14] sm:$0xff] %v1237
    %1350 = vst [vmem:[%s14 + $0x8] sm:$0xff] %v1238
    %1351 = vst [vmem:[%s14 + $0x10] sm:$0xff] %v1239
    %1352 = vst [vmem:[%s14 + $0x18] sm:$0xff] %v1240
    %1353 = vst [vmem:[%s14 + $0x20] sm:$0xff] %v1241
    %1354 = vst [vmem:[%s14 + $0x28] sm:$0xff] %v1242
    %1355 = vst.msk [vmem:[%s14 + $0x30] sm:$0xff] %vm313, %v1243
    %1356 = vst [vmem:[%s14 + $0x38] sm:$0xff] %v1244
    %1357 = vst [vmem:[%s14 + $0x40] sm:$0xff] %v1245
    %1358 = vst [vmem:[%s14 + $0x48] sm:$0xff] %v1246
    %1359 = vst [vmem:[%s14 + $0x50] sm:$0xff] %v1247
    %1360 = vst [vmem:[%s14 + $0x58] sm:$0xff] %v1248
    %1361 = vst [vmem:[%s14 + $0x60] sm:$0xff] %v1249
    %1362 = vst.msk [vmem:[%s14 + $0x68] sm:$0xff] %vm313, %v1250
    %1363 = vst [vmem:[%s14 + $0x70] sm:$0xff] %v1251
    %1364 = vst [vmem:[%s14 + $0x78] sm:$0xff] %v1252
    %1365 = vst [vmem:[%s14 + $0x80] sm:$0xff] %v1253
    %1366 = vst [vmem:[%s14 + $0x88] sm:$0xff] %v1254
    %1367 = vst [vmem:[%s14 + $0x90] sm:$0xff] %v1255
    %1368 = vst [vmem:[%s14 + $0x98] sm:$0xff] %v1256
    %1369 = vst.msk [vmem:[%s14 + $0xa0] sm:$0xff] %vm313, %v1257
    %1370 = vst [vmem:[%s14 + $0xa8] sm:$0xff] %v1258
    %1371 = vst [vmem:[%s14 + $0xb0] sm:$0xff] %v1259
    %1372 = vst [vmem:[%s14 + $0xb8] sm:$0xff] %v1260
    %1373 = vst [vmem:[%s14 + $0xc0] sm:$0xff] %v1261
    %1374 = vst [vmem:[%s14 + $0xc8] sm:$0xff] %v1262
    %1375 = vst [vmem:[%s14 + $0xd0] sm:$0xff] %v1263
    %1376 = vst.msk [vmem:[%s14 + $0xd8] sm:$0xff] %vm313, %v1264
    %1377 = vst [vmem:[%s14 + $0xe0] sm:$0xff] %v1265
    %1378 = vst [vmem:[%s14 + $0xe8] sm:$0xff] %v1266
    %1379 = vst [vmem:[%s14 + $0xf0] sm:$0xff] %v1267
    %1380 = vst [vmem:[%s14 + $0xf8] sm:$0xff] %v1268
    %1381 = vst [vmem:[%s14 + $0x100] sm:$0xff] %v1269
    %1382 = vst [vmem:[%s14 + $0x108] sm:$0xff] %v1270
    %1383 = vst.msk [vmem:[%s14 + $0x110] sm:$0xff] %vm313, %v1271
    %1384 = vst [vmem:[%s14 + $0x118] sm:$0xff] %v1272
    %1385 = vst [vmem:[%s14 + $0x120] sm:$0xff] %v1273
    %1386 = vst [vmem:[%s14 + $0x128] sm:$0xff] %v1274
    %1387 = vst [vmem:[%s14 + $0x130] sm:$0xff] %v1275
    %1388 = vst [vmem:[%s14 + $0x138] sm:$0xff] %v1276
    %1389 = vst [vmem:[%s14 + $0x140] sm:$0xff] %v1277
    %1390 = vst.msk [vmem:[%s14 + $0x148] sm:$0xff] %vm313, %v1278
    %1391 = vst [vmem:[%s14 + $0x150] sm:$0xff] %v1279
    %1392 = vst [vmem:[%s14 + $0x158] sm:$0xff] %v1280
    %1393 = vst [vmem:[%s14 + $0x160] sm:$0xff] %v1281
    %1394 = vst [vmem:[%s14 + $0x168] sm:$0xff] %v1282
    %1395 = vst [vmem:[%s14 + $0x170] sm:$0xff] %v1283
    %1396 = vst [vmem:[%s14 + $0x178] sm:$0xff] %v1284
    %1397 = vst.msk [vmem:[%s14 + $0x180] sm:$0xff] %vm313, %v1285
    %1398 = vst [vmem:[%s14 + $0x188] sm:$0xff] %v1286
    %1399 = vst [vmem:[%s14 + $0x190] sm:$0xff] %v1287
    %1400 = vst [vmem:[%s14 + $0x198] sm:$0xff] %v1288
    %1401 = vst [vmem:[%s14 + $0x1a0] sm:$0xff] %v1289
    %1402 = vst [vmem:[%s14 + $0x1a8] sm:$0xff] %v1290
    %1403 = vst [vmem:[%s14 + $0x1b0] sm:$0xff] %v1291
    %1404 = vst.msk [vmem:[%s14 + $0x1b8] sm:$0xff] %vm313, %v1292
    %1405 = vst [vmem:[%s14 + $0x1c0] sm:$0xff] %v1293
    %1406 = vst [vmem:[%s14 + $0x1c8] sm:$0xff] %v1294
    %1407 = vst [vmem:[%s14 + $0x1d0] sm:$0xff] %v1295
    %1408 = vst [vmem:[%s14 + $0x1d8] sm:$0xff] %v1296
    %1409 = vst [vmem:[%s14 + $0x1e0] sm:$0xff] %v1297
    %1410 = vst [vmem:[%s14 + $0x1e8] sm:$0xff] %v1298
    %1411 = vst.msk [vmem:[%s14 + $0x1f0] sm:$0xff] %vm313, %v1299
    %1412 = vst [vmem:[%s14 + $0x1f8] sm:$0xff] %v1300
    %1413 = vst [vmem:[%s14 + $0x200] sm:$0xff] %v1301
    %1414 = vst [vmem:[%s14 + $0x208] sm:$0xff] %v1302
    %1415 = vst [vmem:[%s14 + $0x210] sm:$0xff] %v1303
    %1416 = vst [vmem:[%s14 + $0x218] sm:$0xff] %v1304
    %1417 = vst [vmem:[%s14 + $0x220] sm:$0xff] %v1305
    %1418 = vst.msk [vmem:[%s14 + $0x228] sm:$0xff] %vm313, %v1306
    %1419 = vst [vmem:[%s14 + $0x230] sm:$0xff] %v1307
    %1420 = vst [vmem:[%s14 + $0x238] sm:$0xff] %v1308
    %1421 = vst [vmem:[%s14 + $0x240] sm:$0xff] %v1309
    %1422 = vst [vmem:[%s14 + $0x248] sm:$0xff] %v1310
    %1423 = vst [vmem:[%s14 + $0x250] sm:$0xff] %v1311
    %1424 = vst [vmem:[%s14 + $0x258] sm:$0xff] %v1312
    %1425 = vst.msk [vmem:[%s14 + $0x260] sm:$0xff] %vm313, %v1313
    %1426 = vst [vmem:[%s14 + $0x268] sm:$0xff] %v1314
    %1427 = vst [vmem:[%s14 + $0x270] sm:$0xff] %v1315
    %1428 = vst [vmem:[%s14 + $0x278] sm:$0xff] %v1316
    %1429 = vst [vmem:[%s14 + $0x280] sm:$0xff] %v1317
    %1430 = vst [vmem:[%s14 + $0x288] sm:$0xff] %v1318
    %1431 = vst [vmem:[%s14 + $0x290] sm:$0xff] %v1319
    %1432 = vst.msk [vmem:[%s14 + $0x298] sm:$0xff] %vm313, %v1320
    %1433 = vst [vmem:[%s14 + $0x2a0] sm:$0xff] %v1321
    %1434 = vst [vmem:[%s14 + $0x2a8] sm:$0xff] %v1322
    %1435 = vst [vmem:[%s14 + $0x2b0] sm:$0xff] %v1323
    %1436 = vst [vmem:[%s14 + $0x2b8] sm:$0xff] %v1324
    %1437 = vst [vmem:[%s14 + $0x2c0] sm:$0xff] %v1325
    %1438 = vst [vmem:[%s14 + $0x2c8] sm:$0xff] %v1326
    %1439 = vst.msk [vmem:[%s14 + $0x2d0] sm:$0xff] %vm313, %v1327
    %1440 = vst [vmem:[%s14 + $0x2d8] sm:$0xff] %v1328
    %1441 = vst [vmem:[%s14 + $0x2e0] sm:$0xff] %v1329
    %1442 = vst [vmem:[%s14 + $0x2e8] sm:$0xff] %v1330
    %1443 = vst [vmem:[%s14 + $0x2f0] sm:$0xff] %v1331
    %1444 = vst [vmem:[%s14 + $0x2f8] sm:$0xff] %v1332
    %1445 = vst [vmem:[%s14 + $0x300] sm:$0xff] %v1333
    %1446 = vst.msk [vmem:[%s14 + $0x308] sm:$0xff] %vm313, %v1334
    %1447 = vst [vmem:[%s14 + $0x310] sm:$0xff] %v1335
    %1448 = vst [vmem:[%s14 + $0x318] sm:$0xff] %v1336
    %1449 = vst [vmem:[%s14 + $0x320] sm:$0xff] %v1337
    %1450 = vst [vmem:[%s14 + $0x328] sm:$0xff] %v1338
    %1451 = vst [vmem:[%s14 + $0x330] sm:$0xff] %v1339
    %1452 = vst [vmem:[%s14 + $0x338] sm:$0xff] %v1340
    %1453 = vst.msk [vmem:[%s14 + $0x340] sm:$0xff] %vm313, %v1341
    %1454 = vst [vmem:[%s14 + $0x348] sm:$0xff] %v1342
    %1455 = vst [vmem:[%s14 + $0x350] sm:$0xff] %v1343
    %1456 = vst [vmem:[%s14 + $0x358] sm:$0xff] %v1344
    %1457 = vst [vmem:[%s14 + $0x360] sm:$0xff] %v1345
    %1458 = vst [vmem:[%s14 + $0x368] sm:$0xff] %v1346
    %1459 = vst [vmem:[%s14 + $0x370] sm:$0xff] %v1347
    %1460 = vst.msk [vmem:[%s14 + $0x378] sm:$0xff] %vm313, %v1348
    %v1461 = vld [vmem:[#allocation2] sm:$0xff]
    %v1462 = vld [vmem:[#allocation2 + $0x8] sm:$0xff]
    %v1463 = vld [vmem:[#allocation2 + $0x10] sm:$0xff]
    %v1464 = vld [vmem:[#allocation2 + $0x18] sm:$0xff]
    %v1465 = vld [vmem:[#allocation2 + $0x20] sm:$0xff]
    %v1466 = vld [vmem:[#allocation2 + $0x28] sm:$0xff]
    %v1467 = vld [vmem:[#allocation2 + $0x30] sm:$0xff]
    %v1468 = vld [vmem:[#allocation2 + $0x38] sm:$0xff]
    %v1469 = vld [vmem:[#allocation2 + $0x40] sm:$0xff]
    %v1470 = vld [vmem:[#allocation2 + $0x48] sm:$0xff]
    %v1471 = vld [vmem:[#allocation2 + $0x50] sm:$0xff]
    %v1472 = vld [vmem:[#allocation2 + $0x58] sm:$0xff]
    %v1473 = vld [vmem:[#allocation2 + $0x60] sm:$0xff]
    %v1474 = vld [vmem:[#allocation2 + $0x68] sm:$0xff]
    %v1475 = vld [vmem:[#allocation2 + $0x70] sm:$0xff]
    %v1476 = vld [vmem:[#allocation2 + $0x78] sm:$0xff]
    %v1477 = vld [vmem:[#allocation2 + $0x80] sm:$0xff]
    %v1478 = vld [vmem:[#allocation2 + $0x88] sm:$0xff]
    %v1479 = vld [vmem:[#allocation2 + $0x90] sm:$0xff]
    %v1480 = vld [vmem:[#allocation2 + $0x98] sm:$0xff]
    %v1481 = vld [vmem:[#allocation2 + $0xa0] sm:$0xff]
    %v1482 = vld [vmem:[#allocation2 + $0xa8] sm:$0xff]
    %v1483 = vld [vmem:[#allocation2 + $0xb0] sm:$0xff]
    %v1484 = vld [vmem:[#allocation2 + $0xb8] sm:$0xff]
    %v1485 = vld [vmem:[#allocation2 + $0xc0] sm:$0xff]
    %v1486 = vld [vmem:[#allocation2 + $0xc8] sm:$0xff]
    %v1487 = vld [vmem:[#allocation2 + $0xd0] sm:$0xff]
    %v1488 = vld [vmem:[#allocation2 + $0xd8] sm:$0xff]
    %v1489 = vadd.f32 %v1461, %v1462
    %v1490 = vadd.f32 %v1489, %v1463
    %v1491 = vadd.f32 %v1490, %v1464
    %v1492 = vadd.f32 %v1491, %v1465
    %v1493 = vadd.f32 %v1492, %v1466
    %v1494 = vsel %vm313, %v1467, 0.0
    %v1495 = vadd.f32 %v1493, %v1494
    %1496 = vadd.xlane.f32.xlu0 %v1495
    %v1497 = vpop.xlane.xlu0 %1496
    %v1498 = vadd.f32 %v1468, %v1469
    %v1499 = vadd.f32 %v1498, %v1470
    %v1500 = vadd.f32 %v1499, %v1471
    %v1501 = vadd.f32 %v1500, %v1472
    %v1502 = vadd.f32 %v1501, %v1473
    %v1503 = vsel %vm313, %v1474, 0.0
    %v1504 = vadd.f32 %v1502, %v1503
    %1505 = vadd.xlane.f32.xlu0 %v1504
    %v1506 = vpop.xlane.xlu0 %1505
    %v1507 = vadd.f32 %v1475, %v1476
    %v1508 = vadd.f32 %v1507, %v1477
    %v1509 = vadd.f32 %v1508, %v1478
    %v1510 = vadd.f32 %v1509, %v1479
    %v1511 = vadd.f32 %v1510, %v1480
    %v1512 = vsel %vm313, %v1481, 0.0
    %v1513 = vadd.f32 %v1511, %v1512
    %1514 = vadd.xlane.f32.xlu0 %v1513
    %v1515 = vpop.xlane.xlu0 %1514
    %v1516 = vadd.f32 %v1482, %v1483
    %v1517 = vadd.f32 %v1516, %v1484
    %v1518 = vadd.f32 %v1517, %v1485
    %v1519 = vadd.f32 %v1518, %v1486
    %v1520 = vadd.f32 %v1519, %v1487
    %v1521 = vsel %vm313, %v1488, 0.0
    %v1522 = vadd.f32 %v1520, %v1521
    %1523 = vadd.xlane.f32.xlu0 %v1522
    %v1524 = vpop.xlane.xlu0 %1523
    %v1525 = vmul.f32 %v1497, 0.0012755102
    %v1526 = vmul.f32 %v1506, 0.0012755102
    %v1527 = vmul.f32 %v1515, 0.0012755102
    %v1528 = vmul.f32 %v1524, 0.0012755102
    %v1529 = vsub.f32 %v1461, %v1525
    %v1530 = vsub.f32 %v1462, %v1525
    %v1531 = vsub.f32 %v1463, %v1525
    %v1532 = vsub.f32 %v1464, %v1525
    %v1533 = vsub.f32 %v1465, %v1525
    %v1534 = vsub.f32 %v1466, %v1525
    %v1535 = vsub.f32 %v1467, %v1525
    %v1536 = vsub.f32 %v1468, %v1526
    %v1537 = vsub.f32 %v1469, %v1526
    %v1538 = vsub.f32 %v1470, %v1526
    %v1539 = vsub.f32 %v1471, %v1526
    %v1540 = vsub.f32 %v1472, %v1526
    %v1541 = vsub.f32 %v1473, %v1526
    %v1542 = vsub.f32 %v1474, %v1526
    %v1543 = vsub.f32 %v1475, %v1527
    %v1544 = vsub.f32 %v1476, %v1527
    %v1545 = vsub.f32 %v1477, %v1527
    %v1546 = vsub.f32 %v1478, %v1527
    %v1547 = vsub.f32 %v1479, %v1527
    %v1548 = vsub.f32 %v1480, %v1527
    %v1549 = vsub.f32 %v1481, %v1527
    %v1550 = vsub.f32 %v1482, %v1528
    %v1551 = vsub.f32 %v1483, %v1528
    %v1552 = vsub.f32 %v1484, %v1528
    %v1553 = vsub.f32 %v1485, %v1528
    %v1554 = vsub.f32 %v1486, %v1528
    %v1555 = vsub.f32 %v1487, %v1528
    %v1556 = vsub.f32 %v1488, %v1528
    %v1557 = vmul.f32 %v1529, %v1529
    %v1558 = vmul.f32 %v1530, %v1530
    %v1559 = vmul.f32 %v1531, %v1531
    %v1560 = vmul.f32 %v1532, %v1532
    %v1561 = vmul.f32 %v1533, %v1533
    %v1562 = vmul.f32 %v1534, %v1534
    %v1563 = vmul.f32 %v1535, %v1535
    %v1564 = vmul.f32 %v1536, %v1536
    %v1565 = vmul.f32 %v1537, %v1537
    %v1566 = vmul.f32 %v1538, %v1538
    %v1567 = vmul.f32 %v1539, %v1539
    %v1568 = vmul.f32 %v1540, %v1540
    %v1569 = vmul.f32 %v1541, %v1541
    %v1570 = vmul.f32 %v1542, %v1542
    %v1571 = vmul.f32 %v1543, %v1543
    %v1572 = vmul.f32 %v1544, %v1544
    %v1573 = vmul.f32 %v1545, %v1545
    %v1574 = vmul.f32 %v1546, %v1546
    %v1575 = vmul.f32 %v1547, %v1547
    %v1576 = vmul.f32 %v1548, %v1548
    %v1577 = vmul.f32 %v1549, %v1549
    %v1578 = vmul.f32 %v1550, %v1550
    %v1579 = vmul.f32 %v1551, %v1551
    %v1580 = vmul.f32 %v1552, %v1552
    %v1581 = vmul.f32 %v1553, %v1553
    %v1582 = vmul.f32 %v1554, %v1554
    %v1583 = vmul.f32 %v1555, %v1555
    %v1584 = vmul.f32 %v1556, %v1556
    %v1585 = vadd.f32 %v1557, %v1558
    %v1586 = vadd.f32 %v1585, %v1559
    %v1587 = vadd.f32 %v1586, %v1560
    %v1588 = vadd.f32 %v1587, %v1561
    %v1589 = vadd.f32 %v1588, %v1562
    %v1590 = vsel %vm313, %v1563, 0.0
    %v1591 = vadd.f32 %v1589, %v1590
    %1592 = vadd.xlane.f32.xlu0 %v1591
    %v1593 = vpop.xlane.xlu0 %1592
    %v1594 = vadd.f32 %v1564, %v1565
    %v1595 = vadd.f32 %v1594, %v1566
    %v1596 = vadd.f32 %v1595, %v1567
    %v1597 = vadd.f32 %v1596, %v1568
    %v1598 = vadd.f32 %v1597, %v1569
    %v1599 = vsel %vm313, %v1570, 0.0
    %v1600 = vadd.f32 %v1598, %v1599
    %1601 = vadd.xlane.f32.xlu0 %v1600
    %v1602 = vpop.xlane.xlu0 %1601
    %v1603 = vadd.f32 %v1571, %v1572
    %v1604 = vadd.f32 %v1603, %v1573
    %v1605 = vadd.f32 %v1604, %v1574
    %v1606 = vadd.f32 %v1605, %v1575
    %v1607 = vadd.f32 %v1606, %v1576
    %v1608 = vsel %vm313, %v1577, 0.0
    %v1609 = vadd.f32 %v1607, %v1608
    %1610 = vadd.xlane.f32.xlu0 %v1609
    %v1611 = vpop.xlane.xlu0 %1610
    %v1612 = vadd.f32 %v1578, %v1579
    %v1613 = vadd.f32 %v1612, %v1580
    %v1614 = vadd.f32 %v1613, %v1581
    %v1615 = vadd.f32 %v1614, %v1582
    %v1616 = vadd.f32 %v1615, %v1583
    %v1617 = vsel %vm313, %v1584, 0.0
    %v1618 = vadd.f32 %v1616, %v1617
    %1619 = vadd.xlane.f32.xlu0 %v1618
    %v1620 = vpop.xlane.xlu0 %1619
    %v1621 = vmul.f32 %v1593, 0.0012755102
    %v1622 = vmul.f32 %v1602, 0.0012755102
    %v1623 = vmul.f32 %v1611, 0.0012755102
    %v1624 = vmul.f32 %v1620, 0.0012755102
    %v1625 = vld [vmem:[%s12 + $0x80] sm:$0xff]
    %v1626 = vld [vmem:[%s12 + $0x88] sm:$0xff]
    %v1627 = vld [vmem:[%s12 + $0x90] sm:$0xff]
    %v1628 = vld [vmem:[%s12 + $0x98] sm:$0xff]
    %v1629 = vld [vmem:[%s13 + $0x80] sm:$0xff]
    %v1630 = vld [vmem:[%s13 + $0x88] sm:$0xff]
    %v1631 = vld [vmem:[%s13 + $0x90] sm:$0xff]
    %v1632 = vld [vmem:[%s13 + $0x98] sm:$0xff]
    %v1633 = vadd.f32 %v1621, 1e-05
    %v1634 = vadd.f32 %v1622, 1e-05
    %v1635 = vadd.f32 %v1623, 1e-05
    %v1636 = vadd.f32 %v1624, 1e-05
    %v1637 = vrsqrt.pop %v1633
    %v1638 = vrsqrt.pop %v1634
    %v1639 = vrsqrt.pop %v1635
    %v1640 = vrsqrt.pop %v1636
    %v1641 = vmul.f32 %v1637, %v1625
    %v1642 = vmul.f32 %v1638, %v1626
    %v1643 = vmul.f32 %v1639, %v1627
    %v1644 = vmul.f32 %v1640, %v1628
    %v1645 = vmul.f32 %v1525, %v1641
    %v1646 = vmul.f32 %v1526, %v1642
    %v1647 = vmul.f32 %v1527, %v1643
    %v1648 = vmul.f32 %v1528, %v1644
    %v1649 = vsub.f32 %v1629, %v1645
    %v1650 = vsub.f32 %v1630, %v1646
    %v1651 = vsub.f32 %v1631, %v1647
    %v1652 = vsub.f32 %v1632, %v1648
    %1654 = vset.pattern.permute.xlu0 0
    %1655 = vperm.xlu0 %1654, %v1641
    %v1656 = vpop.permute.xlu0 %1655
    %1659 = vset.pattern.permute.xlu0 0
    %1660 = vperm.xlu0 %1659, %v1642
    %v1661 = vpop.permute.xlu0 %1660
    %1664 = vset.pattern.permute.xlu0 0
    %1665 = vperm.xlu0 %1664, %v1643
    %v1666 = vpop.permute.xlu0 %1665
    %1669 = vset.pattern.permute.xlu0 0
    %1670 = vperm.xlu0 %1669, %v1644
    %v1671 = vpop.permute.xlu0 %1670
    %v1673 = vmul.f32 %v1461, %v1656
    %v1674 = vmul.f32 %v1462, %v1656
    %v1675 = vmul.f32 %v1463, %v1656
    %v1676 = vmul.f32 %v1464, %v1656
    %v1677 = vmul.f32 %v1465, %v1656
    %v1678 = vmul.f32 %v1466, %v1656
    %v1679 = vmul.f32 %v1467, %v1656
    %v1680 = vmul.f32 %v1468, %v1661
    %v1681 = vmul.f32 %v1469, %v1661
    %v1682 = vmul.f32 %v1470, %v1661
    %v1683 = vmul.f32 %v1471, %v1661
    %v1684 = vmul.f32 %v1472, %v1661
    %v1685 = vmul.f32 %v1473, %v1661
    %v1686 = vmul.f32 %v1474, %v1661
    %v1687 = vmul.f32 %v1475, %v1666
    %v1688 = vmul.f32 %v1476, %v1666
    %v1689 = vmul.f32 %v1477, %v1666
    %v1690 = vmul.f32 %v1478, %v1666
    %v1691 = vmul.f32 %v1479, %v1666
    %v1692 = vmul.f32 %v1480, %v1666
    %v1693 = vmul.f32 %v1481, %v1666
    %v1694 = vmul.f32 %v1482, %v1671
    %v1695 = vmul.f32 %v1483, %v1671
    %v1696 = vmul.f32 %v1484, %v1671
    %v1697 = vmul.f32 %v1485, %v1671
    %v1698 = vmul.f32 %v1486, %v1671
    %v1699 = vmul.f32 %v1487, %v1671
    %v1700 = vmul.f32 %v1488, %v1671
    %1702 = vset.pattern.permute.xlu0 0
    %1703 = vperm.xlu0 %1702, %v1649
    %v1704 = vpop.permute.xlu0 %1703
    %1707 = vset.pattern.permute.xlu0 0
    %1708 = vperm.xlu0 %1707, %v1650
    %v1709 = vpop.permute.xlu0 %1708
    %1712 = vset.pattern.permute.xlu0 0
    %1713 = vperm.xlu0 %1712, %v1651
    %v1714 = vpop.permute.xlu0 %1713
    %1717 = vset.pattern.permute.xlu0 0
    %1718 = vperm.xlu0 %1717, %v1652
    %v1719 = vpop.permute.xlu0 %1718
    %v1721 = vadd.f32 %v1673, %v1704
    %v1722 = vadd.f32 %v1674, %v1704
    %v1723 = vadd.f32 %v1675, %v1704
    %v1724 = vadd.f32 %v1676, %v1704
    %v1725 = vadd.f32 %v1677, %v1704
    %v1726 = vadd.f32 %v1678, %v1704
    %v1727 = vadd.f32 %v1679, %v1704
    %v1728 = vadd.f32 %v1680, %v1709
    %v1729 = vadd.f32 %v1681, %v1709
    %v1730 = vadd.f32 %v1682, %v1709
    %v1731 = vadd.f32 %v1683, %v1709
    %v1732 = vadd.f32 %v1684, %v1709
    %v1733 = vadd.f32 %v1685, %v1709
    %v1734 = vadd.f32 %v1686, %v1709
    %v1735 = vadd.f32 %v1687, %v1714
    %v1736 = vadd.f32 %v1688, %v1714
    %v1737 = vadd.f32 %v1689, %v1714
    %v1738 = vadd.f32 %v1690, %v1714
    %v1739 = vadd.f32 %v1691, %v1714
    %v1740 = vadd.f32 %v1692, %v1714
    %v1741 = vadd.f32 %v1693, %v1714
    %v1742 = vadd.f32 %v1694, %v1719
    %v1743 = vadd.f32 %v1695, %v1719
    %v1744 = vadd.f32 %v1696, %v1719
    %v1745 = vadd.f32 %v1697, %v1719
    %v1746 = vadd.f32 %v1698, %v1719
    %v1747 = vadd.f32 %v1699, %v1719
    %v1748 = vadd.f32 %v1700, %v1719
    %1749 = vst [vmem:[%s14 + $0x380] sm:$0xff] %v1721
    %1750 = vst [vmem:[%s14 + $0x388] sm:$0xff] %v1722
    %1751 = vst [vmem:[%s14 + $0x390] sm:$0xff] %v1723
    %1752 = vst [vmem:[%s14 + $0x398] sm:$0xff] %v1724
    %1753 = vst [vmem:[%s14 + $0x3a0] sm:$0xff] %v1725
    %1754 = vst [vmem:[%s14 + $0x3a8] sm:$0xff] %v1726
    %1755 = vst.msk [vmem:[%s14 + $0x3b0] sm:$0xff] %vm313, %v1727
    %1756 = vst [vmem:[%s14 + $0x3b8] sm:$0xff] %v1728
    %1757 = vst [vmem:[%s14 + $0x3c0] sm:$0xff] %v1729
    %1758 = vst [vmem:[%s14 + $0x3c8] sm:$0xff] %v1730
    %1759 = vst [vmem:[%s14 + $0x3d0] sm:$0xff] %v1731
    %1760 = vst [vmem:[%s14 + $0x3d8] sm:$0xff] %v1732
    %1761 = vst [vmem:[%s14 + $0x3e0] sm:$0xff] %v1733
    %1762 = vst.msk [vmem:[%s14 + $0x3e8] sm:$0xff] %vm313, %v1734
    %1763 = vst [vmem:[%s14 + $0x3f0] sm:$0xff] %v1735
    %1764 = vst [vmem:[%s14 + $0x3f8] sm:$0xff] %v1736
    %1765 = vst [vmem:[%s14 + $0x400] sm:$0xff] %v1737
    %1766 = vst [vmem:[%s14 + $0x408] sm:$0xff] %v1738
    %1767 = vst [vmem:[%s14 + $0x410] sm:$0xff] %v1739
    %1768 = vst [vmem:[%s14 + $0x418] sm:$0xff] %v1740
    %1769 = vst.msk [vmem:[%s14 + $0x420] sm:$0xff] %vm313, %v1741
    %1770 = vst [vmem:[%s14 + $0x428] sm:$0xff] %v1742
    %1771 = vst [vmem:[%s14 + $0x430] sm:$0xff] %v1743
    %1772 = vst [vmem:[%s14 + $0x438] sm:$0xff] %v1744
    %1773 = vst [vmem:[%s14 + $0x440] sm:$0xff] %v1745
    %1774 = vst [vmem:[%s14 + $0x448] sm:$0xff] %v1746
    %1775 = vst [vmem:[%s14 + $0x450] sm:$0xff] %v1747
    %1776 = vst.msk [vmem:[%s14 + $0x458] sm:$0xff] %vm313, %v1748
    %v1777 = vld [vmem:[#allocation4] sm:$0xff]
    %v1778 = vld [vmem:[#allocation4 + $0x8] sm:$0xff]
    %v1779 = vld [vmem:[#allocation4 + $0x10] sm:$0xff]
    %v1780 = vld [vmem:[#allocation4 + $0x18] sm:$0xff]
    %v1781 = vld [vmem:[#allocation4 + $0x20] sm:$0xff]
    %v1782 = vld [vmem:[#allocation4 + $0x28] sm:$0xff]
    %v1783 = vld [vmem:[#allocation4 + $0x30] sm:$0xff]
    %v1784 = vld [vmem:[#allocation4 + $0x38] sm:$0xff]
    %v1785 = vld [vmem:[#allocation4 + $0x40] sm:$0xff]
    %v1786 = vld [vmem:[#allocation4 + $0x48] sm:$0xff]
    %v1787 = vld [vmem:[#allocation4 + $0x50] sm:$0xff]
    %v1788 = vld [vmem:[#allocation4 + $0x58] sm:$0xff]
    %v1789 = vld [vmem:[#allocation4 + $0x60] sm:$0xff]
    %v1790 = vld [vmem:[#allocation4 + $0x68] sm:$0xff]
    %v1791 = vld [vmem:[#allocation4 + $0x70] sm:$0xff]
    %v1792 = vld [vmem:[#allocation4 + $0x78] sm:$0xff]
    %v1793 = vld [vmem:[#allocation4 + $0x80] sm:$0xff]
    %v1794 = vld [vmem:[#allocation4 + $0x88] sm:$0xff]
    %v1795 = vld [vmem:[#allocation4 + $0x90] sm:$0xff]
    %v1796 = vld [vmem:[#allocation4 + $0x98] sm:$0xff]
    %v1797 = vld [vmem:[#allocation4 + $0xa0] sm:$0xff]
    %v1798 = vld [vmem:[#allocation4 + $0xa8] sm:$0xff]
    %v1799 = vld [vmem:[#allocation4 + $0xb0] sm:$0xff]
    %v1800 = vld [vmem:[#allocation4 + $0xb8] sm:$0xff]
    %v1801 = vld [vmem:[#allocation4 + $0xc0] sm:$0xff]
    %v1802 = vld [vmem:[#allocation4 + $0xc8] sm:$0xff]
    %v1803 = vld [vmem:[#allocation4 + $0xd0] sm:$0xff]
    %v1804 = vld [vmem:[#allocation4 + $0xd8] sm:$0xff]
    %v1805 = vadd.f32 %v1777, %v1778
    %v1806 = vadd.f32 %v1805, %v1779
    %v1807 = vadd.f32 %v1806, %v1780
    %v1808 = vadd.f32 %v1807, %v1781
    %v1809 = vadd.f32 %v1808, %v1782
    %v1810 = vsel %vm313, %v1783, 0.0
    %v1811 = vadd.f32 %v1809, %v1810
    %1812 = vadd.xlane.f32.xlu0 %v1811
    %v1813 = vpop.xlane.xlu0 %1812
    %v1814 = vadd.f32 %v1784, %v1785
    %v1815 = vadd.f32 %v1814, %v1786
    %v1816 = vadd.f32 %v1815, %v1787
    %v1817 = vadd.f32 %v1816, %v1788
    %v1818 = vadd.f32 %v1817, %v1789
    %v1819 = vsel %vm313, %v1790, 0.0
    %v1820 = vadd.f32 %v1818, %v1819
    %1821 = vadd.xlane.f32.xlu0 %v1820
    %v1822 = vpop.xlane.xlu0 %1821
    %v1823 = vadd.f32 %v1791, %v1792
    %v1824 = vadd.f32 %v1823, %v1793
    %v1825 = vadd.f32 %v1824, %v1794
    %v1826 = vadd.f32 %v1825, %v1795
    %v1827 = vadd.f32 %v1826, %v1796
    %v1828 = vsel %vm313, %v1797, 0.0
    %v1829 = vadd.f32 %v1827, %v1828
    %1830 = vadd.xlane.f32.xlu0 %v1829
    %v1831 = vpop.xlane.xlu0 %1830
    %v1832 = vadd.f32 %v1798, %v1799
    %v1833 = vadd.f32 %v1832, %v1800
    %v1834 = vadd.f32 %v1833, %v1801
    %v1835 = vadd.f32 %v1834, %v1802
    %v1836 = vadd.f32 %v1835, %v1803
    %v1837 = vsel %vm313, %v1804, 0.0
    %v1838 = vadd.f32 %v1836, %v1837
    %1839 = vadd.xlane.f32.xlu0 %v1838
    %v1840 = vpop.xlane.xlu0 %1839
    %v1841 = vmul.f32 %v1813, 0.0012755102
    %v1842 = vmul.f32 %v1822, 0.0012755102
    %v1843 = vmul.f32 %v1831, 0.0012755102
    %v1844 = vmul.f32 %v1840, 0.0012755102
    %v1845 = vsub.f32 %v1777, %v1841
    %v1846 = vsub.f32 %v1778, %v1841
    %v1847 = vsub.f32 %v1779, %v1841
    %v1848 = vsub.f32 %v1780, %v1841
    %v1849 = vsub.f32 %v1781, %v1841
    %v1850 = vsub.f32 %v1782, %v1841
    %v1851 = vsub.f32 %v1783, %v1841
    %v1852 = vsub.f32 %v1784, %v1842
    %v1853 = vsub.f32 %v1785, %v1842
    %v1854 = vsub.f32 %v1786, %v1842
    %v1855 = vsub.f32 %v1787, %v1842
    %v1856 = vsub.f32 %v1788, %v1842
    %v1857 = vsub.f32 %v1789, %v1842
    %v1858 = vsub.f32 %v1790, %v1842
    %v1859 = vsub.f32 %v1791, %v1843
    %v1860 = vsub.f32 %v1792, %v1843
    %v1861 = vsub.f32 %v1793, %v1843
    %v1862 = vsub.f32 %v1794, %v1843
    %v1863 = vsub.f32 %v1795, %v1843
    %v1864 = vsub.f32 %v1796, %v1843
    %v1865 = vsub.f32 %v1797, %v1843
    %v1866 = vsub.f32 %v1798, %v1844
    %v1867 = vsub.f32 %v1799, %v1844
    %v1868 = vsub.f32 %v1800, %v1844
    %v1869 = vsub.f32 %v1801, %v1844
    %v1870 = vsub.f32 %v1802, %v1844
    %v1871 = vsub.f32 %v1803, %v1844
    %v1872 = vsub.f32 %v1804, %v1844
    %v1873 = vmul.f32 %v1845, %v1845
    %v1874 = vmul.f32 %v1846, %v1846
    %v1875 = vmul.f32 %v1847, %v1847
    %v1876 = vmul.f32 %v1848, %v1848
    %v1877 = vmul.f32 %v1849, %v1849
    %v1878 = vmul.f32 %v1850, %v1850
    %v1879 = vmul.f32 %v1851, %v1851
    %v1880 = vmul.f32 %v1852, %v1852
    %v1881 = vmul.f32 %v1853, %v1853
    %v1882 = vmul.f32 %v1854, %v1854
    %v1883 = vmul.f32 %v1855, %v1855
    %v1884 = vmul.f32 %v1856, %v1856
    %v1885 = vmul.f32 %v1857, %v1857
    %v1886 = vmul.f32 %v1858, %v1858
    %v1887 = vmul.f32 %v1859, %v1859
    %v1888 = vmul.f32 %v1860, %v1860
    %v1889 = vmul.f32 %v1861, %v1861
    %v1890 = vmul.f32 %v1862, %v1862
    %v1891 = vmul.f32 %v1863, %v1863
    %v1892 = vmul.f32 %v1864, %v1864
    %v1893 = vmul.f32 %v1865, %v1865
    %v1894 = vmul.f32 %v1866, %v1866
    %v1895 = vmul.f32 %v1867, %v1867
    %v1896 = vmul.f32 %v1868, %v1868
    %v1897 = vmul.f32 %v1869, %v1869
    %v1898 = vmul.f32 %v1870, %v1870
    %v1899 = vmul.f32 %v1871, %v1871
    %v1900 = vmul.f32 %v1872, %v1872
    %v1901 = vadd.f32 %v1873, %v1874
    %v1902 = vadd.f32 %v1901, %v1875
    %v1903 = vadd.f32 %v1902, %v1876
    %v1904 = vadd.f32 %v1903, %v1877
    %v1905 = vadd.f32 %v1904, %v1878
    %v1906 = vsel %vm313, %v1879, 0.0
    %v1907 = vadd.f32 %v1905, %v1906
    %1908 = vadd.xlane.f32.xlu0 %v1907
    %v1909 = vpop.xlane.xlu0 %1908
    %v1910 = vadd.f32 %v1880, %v1881
    %v1911 = vadd.f32 %v1910, %v1882
    %v1912 = vadd.f32 %v1911, %v1883
    %v1913 = vadd.f32 %v1912, %v1884
    %v1914 = vadd.f32 %v1913, %v1885
    %v1915 = vsel %vm313, %v1886, 0.0
    %v1916 = vadd.f32 %v1914, %v1915
    %1917 = vadd.xlane.f32.xlu0 %v1916
    %v1918 = vpop.xlane.xlu0 %1917
    %v1919 = vadd.f32 %v1887, %v1888
    %v1920 = vadd.f32 %v1919, %v1889
    %v1921 = vadd.f32 %v1920, %v1890
    %v1922 = vadd.f32 %v1921, %v1891
    %v1923 = vadd.f32 %v1922, %v1892
    %v1924 = vsel %vm313, %v1893, 0.0
    %v1925 = vadd.f32 %v1923, %v1924
    %1926 = vadd.xlane.f32.xlu0 %v1925
    %v1927 = vpop.xlane.xlu0 %1926
    %v1928 = vadd.f32 %v1894, %v1895
    %v1929 = vadd.f32 %v1928, %v1896
    %v1930 = vadd.f32 %v1929, %v1897
    %v1931 = vadd.f32 %v1930, %v1898
    %v1932 = vadd.f32 %v1931, %v1899
    %v1933 = vsel %vm313, %v1900, 0.0
    %v1934 = vadd.f32 %v1932, %v1933
    %1935 = vadd.xlane.f32.xlu0 %v1934
    %v1936 = vpop.xlane.xlu0 %1935
    %v1937 = vmul.f32 %v1909, 0.0012755102
    %v1938 = vmul.f32 %v1918, 0.0012755102
    %v1939 = vmul.f32 %v1927, 0.0012755102
    %v1940 = vmul.f32 %v1936, 0.0012755102
    %v1941 = vld [vmem:[%s12 + $0xa0] sm:$0xff]
    %v1942 = vld [vmem:[%s12 + $0xa8] sm:$0xff]
    %v1943 = vld [vmem:[%s12 + $0xb0] sm:$0xff]
    %v1944 = vld [vmem:[%s12 + $0xb8] sm:$0xff]
    %v1945 = vld [vmem:[%s13 + $0xa0] sm:$0xff]
    %v1946 = vld [vmem:[%s13 + $0xa8] sm:$0xff]
    %v1947 = vld [vmem:[%s13 + $0xb0] sm:$0xff]
    %v1948 = vld [vmem:[%s13 + $0xb8] sm:$0xff]
    %v1949 = vadd.f32 %v1937, 1e-05
    %v1950 = vadd.f32 %v1938, 1e-05
    %v1951 = vadd.f32 %v1939, 1e-05
    %v1952 = vadd.f32 %v1940, 1e-05
    %v1953 = vrsqrt.pop %v1949
    %v1954 = vrsqrt.pop %v1950
    %v1955 = vrsqrt.pop %v1951
    %v1956 = vrsqrt.pop %v1952
    %v1957 = vmul.f32 %v1953, %v1941
    %v1958 = vmul.f32 %v1954, %v1942
    %v1959 = vmul.f32 %v1955, %v1943
    %v1960 = vmul.f32 %v1956, %v1944
    %v1961 = vmul.f32 %v1841, %v1957
    %v1962 = vmul.f32 %v1842, %v1958
    %v1963 = vmul.f32 %v1843, %v1959
    %v1964 = vmul.f32 %v1844, %v1960
    %v1965 = vsub.f32 %v1945, %v1961
    %v1966 = vsub.f32 %v1946, %v1962
    %v1967 = vsub.f32 %v1947, %v1963
    %v1968 = vsub.f32 %v1948, %v1964
    %1970 = vset.pattern.permute.xlu0 0
    %1971 = vperm.xlu0 %1970, %v1957
    %v1972 = vpop.permute.xlu0 %1971
    %1975 = vset.pattern.permute.xlu0 0
    %1976 = vperm.xlu0 %1975, %v1958
    %v1977 = vpop.permute.xlu0 %1976
    %1980 = vset.pattern.permute.xlu0 0
    %1981 = vperm.xlu0 %1980, %v1959
    %v1982 = vpop.permute.xlu0 %1981
    %1985 = vset.pattern.permute.xlu0 0
    %1986 = vperm.xlu0 %1985, %v1960
    %v1987 = vpop.permute.xlu0 %1986
    %v1989 = vmul.f32 %v1777, %v1972
    %v1990 = vmul.f32 %v1778, %v1972
    %v1991 = vmul.f32 %v1779, %v1972
    %v1992 = vmul.f32 %v1780, %v1972
    %v1993 = vmul.f32 %v1781, %v1972
    %v1994 = vmul.f32 %v1782, %v1972
    %v1995 = vmul.f32 %v1783, %v1972
    %v1996 = vmul.f32 %v1784, %v1977
    %v1997 = vmul.f32 %v1785, %v1977
    %v1998 = vmul.f32 %v1786, %v1977
    %v1999 = vmul.f32 %v1787, %v1977
    %v2000 = vmul.f32 %v1788, %v1977
    %v2001 = vmul.f32 %v1789, %v1977
    %v2002 = vmul.f32 %v1790, %v1977
    %v2003 = vmul.f32 %v1791, %v1982
    %v2004 = vmul.f32 %v1792, %v1982
    %v2005 = vmul.f32 %v1793, %v1982
    %v2006 = vmul.f32 %v1794, %v1982
    %v2007 = vmul.f32 %v1795, %v1982
    %v2008 = vmul.f32 %v1796, %v1982
    %v2009 = vmul.f32 %v1797, %v1982
    %v2010 = vmul.f32 %v1798, %v1987
    %v2011 = vmul.f32 %v1799, %v1987
    %v2012 = vmul.f32 %v1800, %v1987
    %v2013 = vmul.f32 %v1801, %v1987
    %v2014 = vmul.f32 %v1802, %v1987
    %v2015 = vmul.f32 %v1803, %v1987
    %v2016 = vmul.f32 %v1804, %v1987
    %2018 = vset.pattern.permute.xlu0 0
    %2019 = vperm.xlu0 %2018, %v1965
    %v2020 = vpop.permute.xlu0 %2019
    %2023 = vset.pattern.permute.xlu0 0
    %2024 = vperm.xlu0 %2023, %v1966
    %v2025 = vpop.permute.xlu0 %2024
    %2028 = vset.pattern.permute.xlu0 0
    %2029 = vperm.xlu0 %2028, %v1967
    %v2030 = vpop.permute.xlu0 %2029
    %2033 = vset.pattern.permute.xlu0 0
    %2034 = vperm.xlu0 %2033, %v1968
    %v2035 = vpop.permute.xlu0 %2034
    %v2037 = vadd.f32 %v1989, %v2020
    %v2038 = vadd.f32 %v1990, %v2020
    %v2039 = vadd.f32 %v1991, %v2020
    %v2040 = vadd.f32 %v1992, %v2020
    %v2041 = vadd.f32 %v1993, %v2020
    %v2042 = vadd.f32 %v1994, %v2020
    %v2043 = vadd.f32 %v1995, %v2020
    %v2044 = vadd.f32 %v1996, %v2025
    %v2045 = vadd.f32 %v1997, %v2025
    %v2046 = vadd.f32 %v1998, %v2025
    %v2047 = vadd.f32 %v1999, %v2025
    %v2048 = vadd.f32 %v2000, %v2025
    %v2049 = vadd.f32 %v2001, %v2025
    %v2050 = vadd.f32 %v2002, %v2025
    %v2051 = vadd.f32 %v2003, %v2030
    %v2052 = vadd.f32 %v2004, %v2030
    %v2053 = vadd.f32 %v2005, %v2030
    %v2054 = vadd.f32 %v2006, %v2030
    %v2055 = vadd.f32 %v2007, %v2030
    %v2056 = vadd.f32 %v2008, %v2030
    %v2057 = vadd.f32 %v2009, %v2030
    %v2058 = vadd.f32 %v2010, %v2035
    %v2059 = vadd.f32 %v2011, %v2035
    %v2060 = vadd.f32 %v2012, %v2035
    %v2061 = vadd.f32 %v2013, %v2035
    %v2062 = vadd.f32 %v2014, %v2035
    %v2063 = vadd.f32 %v2015, %v2035
    %v2064 = vadd.f32 %v2016, %v2035
    %2065 = vst [vmem:[%s14 + $0x460] sm:$0xff] %v2037
    %2066 = vst [vmem:[%s14 + $0x468] sm:$0xff] %v2038
    %2067 = vst [vmem:[%s14 + $0x470] sm:$0xff] %v2039
    %2068 = vst [vmem:[%s14 + $0x478] sm:$0xff] %v2040
    %2069 = vst [vmem:[%s14 + $0x480] sm:$0xff] %v2041
    %2070 = vst [vmem:[%s14 + $0x488] sm:$0xff] %v2042
    %2071 = vst.msk [vmem:[%s14 + $0x490] sm:$0xff] %vm313, %v2043
    %2072 = vst [vmem:[%s14 + $0x498] sm:$0xff] %v2044
    %2073 = vst [vmem:[%s14 + $0x4a0] sm:$0xff] %v2045
    %2074 = vst [vmem:[%s14 + $0x4a8] sm:$0xff] %v2046
    %2075 = vst [vmem:[%s14 + $0x4b0] sm:$0xff] %v2047
    %2076 = vst [vmem:[%s14 + $0x4b8] sm:$0xff] %v2048
    %2077 = vst [vmem:[%s14 + $0x4c0] sm:$0xff] %v2049
    %2078 = vst.msk [vmem:[%s14 + $0x4c8] sm:$0xff] %vm313, %v2050
    %2079 = vst [vmem:[%s14 + $0x4d0] sm:$0xff] %v2051
    %2080 = vst [vmem:[%s14 + $0x4d8] sm:$0xff] %v2052
    %2081 = vst [vmem:[%s14 + $0x4e0] sm:$0xff] %v2053
    %2082 = vst [vmem:[%s14 + $0x4e8] sm:$0xff] %v2054
    %2083 = vst [vmem:[%s14 + $0x4f0] sm:$0xff] %v2055
    %2084 = vst [vmem:[%s14 + $0x4f8] sm:$0xff] %v2056
    %2085 = vst.msk [vmem:[%s14 + $0x500] sm:$0xff] %vm313, %v2057
    %2086 = vst [vmem:[%s14 + $0x508] sm:$0xff] %v2058
    %2087 = vst [vmem:[%s14 + $0x510] sm:$0xff] %v2059
    %2088 = vst [vmem:[%s14 + $0x518] sm:$0xff] %v2060
    %2089 = vst [vmem:[%s14 + $0x520] sm:$0xff] %v2061
    %2090 = vst [vmem:[%s14 + $0x528] sm:$0xff] %v2062
    %2091 = vst [vmem:[%s14 + $0x530] sm:$0xff] %v2063
    %2092 = vst.msk [vmem:[%s14 + $0x538] sm:$0xff] %vm313, %v2064
    %v2093 = vld [vmem:[#allocation6] sm:$0xff]
    %v2094 = vld [vmem:[#allocation6 + $0x8] sm:$0xff]
    %v2095 = vld [vmem:[#allocation6 + $0x10] sm:$0xff]
    %v2096 = vld [vmem:[#allocation6 + $0x18] sm:$0xff]
    %v2097 = vld [vmem:[#allocation6 + $0x20] sm:$0xff]
    %v2098 = vld [vmem:[#allocation6 + $0x28] sm:$0xff]
    %v2099 = vld [vmem:[#allocation6 + $0x30] sm:$0xff]
    %v2100 = vld [vmem:[#allocation6 + $0x38] sm:$0xff]
    %v2101 = vld [vmem:[#allocation6 + $0x40] sm:$0xff]
    %v2102 = vld [vmem:[#allocation6 + $0x48] sm:$0xff]
    %v2103 = vld [vmem:[#allocation6 + $0x50] sm:$0xff]
    %v2104 = vld [vmem:[#allocation6 + $0x58] sm:$0xff]
    %v2105 = vld [vmem:[#allocation6 + $0x60] sm:$0xff]
    %v2106 = vld [vmem:[#allocation6 + $0x68] sm:$0xff]
    %v2107 = vld [vmem:[#allocation6 + $0x70] sm:$0xff]
    %v2108 = vld [vmem:[#allocation6 + $0x78] sm:$0xff]
    %v2109 = vld [vmem:[#allocation6 + $0x80] sm:$0xff]
    %v2110 = vld [vmem:[#allocation6 + $0x88] sm:$0xff]
    %v2111 = vld [vmem:[#allocation6 + $0x90] sm:$0xff]
    %v2112 = vld [vmem:[#allocation6 + $0x98] sm:$0xff]
    %v2113 = vld [vmem:[#allocation6 + $0xa0] sm:$0xff]
    %v2114 = vld [vmem:[#allocation6 + $0xa8] sm:$0xff]
    %v2115 = vld [vmem:[#allocation6 + $0xb0] sm:$0xff]
    %v2116 = vld [vmem:[#allocation6 + $0xb8] sm:$0xff]
    %v2117 = vld [vmem:[#allocation6 + $0xc0] sm:$0xff]
    %v2118 = vld [vmem:[#allocation6 + $0xc8] sm:$0xff]
    %v2119 = vld [vmem:[#allocation6 + $0xd0] sm:$0xff]
    %v2120 = vld [vmem:[#allocation6 + $0xd8] sm:$0xff]
    %v2121 = vadd.f32 %v2093, %v2094
    %v2122 = vadd.f32 %v2121, %v2095
    %v2123 = vadd.f32 %v2122, %v2096
    %v2124 = vadd.f32 %v2123, %v2097
    %v2125 = vadd.f32 %v2124, %v2098
    %v2126 = vsel %vm313, %v2099, 0.0
    %v2127 = vadd.f32 %v2125, %v2126
    %2128 = vadd.xlane.f32.xlu0 %v2127
    %v2129 = vpop.xlane.xlu0 %2128
    %v2130 = vadd.f32 %v2100, %v2101
    %v2131 = vadd.f32 %v2130, %v2102
    %v2132 = vadd.f32 %v2131, %v2103
    %v2133 = vadd.f32 %v2132, %v2104
    %v2134 = vadd.f32 %v2133, %v2105
    %v2135 = vsel %vm313, %v2106, 0.0
    %v2136 = vadd.f32 %v2134, %v2135
    %2137 = vadd.xlane.f32.xlu0 %v2136
    %v2138 = vpop.xlane.xlu0 %2137
    %v2139 = vadd.f32 %v2107, %v2108
    %v2140 = vadd.f32 %v2139, %v2109
    %v2141 = vadd.f32 %v2140, %v2110
    %v2142 = vadd.f32 %v2141, %v2111
    %v2143 = vadd.f32 %v2142, %v2112
    %v2144 = vsel %vm313, %v2113, 0.0
    %v2145 = vadd.f32 %v2143, %v2144
    %2146 = vadd.xlane.f32.xlu0 %v2145
    %v2147 = vpop.xlane.xlu0 %2146
    %v2148 = vadd.f32 %v2114, %v2115
    %v2149 = vadd.f32 %v2148, %v2116
    %v2150 = vadd.f32 %v2149, %v2117
    %v2151 = vadd.f32 %v2150, %v2118
    %v2152 = vadd.f32 %v2151, %v2119
    %v2153 = vsel %vm313, %v2120, 0.0
    %v2154 = vadd.f32 %v2152, %v2153
    %2155 = vadd.xlane.f32.xlu0 %v2154
    %v2156 = vpop.xlane.xlu0 %2155
    %v2157 = vmul.f32 %v2129, 0.0012755102
    %v2158 = vmul.f32 %v2138, 0.0012755102
    %v2159 = vmul.f32 %v2147, 0.0012755102
    %v2160 = vmul.f32 %v2156, 0.0012755102
    %v2161 = vsub.f32 %v2093, %v2157
    %v2162 = vsub.f32 %v2094, %v2157
    %v2163 = vsub.f32 %v2095, %v2157
    %v2164 = vsub.f32 %v2096, %v2157
    %v2165 = vsub.f32 %v2097, %v2157
    %v2166 = vsub.f32 %v2098, %v2157
    %v2167 = vsub.f32 %v2099, %v2157
    %v2168 = vsub.f32 %v2100, %v2158
    %v2169 = vsub.f32 %v2101, %v2158
    %v2170 = vsub.f32 %v2102, %v2158
    %v2171 = vsub.f32 %v2103, %v2158
    %v2172 = vsub.f32 %v2104, %v2158
    %v2173 = vsub.f32 %v2105, %v2158
    %v2174 = vsub.f32 %v2106, %v2158
    %v2175 = vsub.f32 %v2107, %v2159
    %v2176 = vsub.f32 %v2108, %v2159
    %v2177 = vsub.f32 %v2109, %v2159
    %v2178 = vsub.f32 %v2110, %v2159
    %v2179 = vsub.f32 %v2111, %v2159
    %v2180 = vsub.f32 %v2112, %v2159
    %v2181 = vsub.f32 %v2113, %v2159
    %v2182 = vsub.f32 %v2114, %v2160
    %v2183 = vsub.f32 %v2115, %v2160
    %v2184 = vsub.f32 %v2116, %v2160
    %v2185 = vsub.f32 %v2117, %v2160
    %v2186 = vsub.f32 %v2118, %v2160
    %v2187 = vsub.f32 %v2119, %v2160
    %v2188 = vsub.f32 %v2120, %v2160
    %v2189 = vmul.f32 %v2161, %v2161
    %v2190 = vmul.f32 %v2162, %v2162
    %v2191 = vmul.f32 %v2163, %v2163
    %v2192 = vmul.f32 %v2164, %v2164
    %v2193 = vmul.f32 %v2165, %v2165
    %v2194 = vmul.f32 %v2166, %v2166
    %v2195 = vmul.f32 %v2167, %v2167
    %v2196 = vmul.f32 %v2168, %v2168
    %v2197 = vmul.f32 %v2169, %v2169
    %v2198 = vmul.f32 %v2170, %v2170
    %v2199 = vmul.f32 %v2171, %v2171
    %v2200 = vmul.f32 %v2172, %v2172
    %v2201 = vmul.f32 %v2173, %v2173
    %v2202 = vmul.f32 %v2174, %v2174
    %v2203 = vmul.f32 %v2175, %v2175
    %v2204 = vmul.f32 %v2176, %v2176
    %v2205 = vmul.f32 %v2177, %v2177
    %v2206 = vmul.f32 %v2178, %v2178
    %v2207 = vmul.f32 %v2179, %v2179
    %v2208 = vmul.f32 %v2180, %v2180
    %v2209 = vmul.f32 %v2181, %v2181
    %v2210 = vmul.f32 %v2182, %v2182
    %v2211 = vmul.f32 %v2183, %v2183
    %v2212 = vmul.f32 %v2184, %v2184
    %v2213 = vmul.f32 %v2185, %v2185
    %v2214 = vmul.f32 %v2186, %v2186
    %v2215 = vmul.f32 %v2187, %v2187
    %v2216 = vmul.f32 %v2188, %v2188
    %v2217 = vadd.f32 %v2189, %v2190
    %v2218 = vadd.f32 %v2217, %v2191
    %v2219 = vadd.f32 %v2218, %v2192
    %v2220 = vadd.f32 %v2219, %v2193
    %v2221 = vadd.f32 %v2220, %v2194
    %v2222 = vsel %vm313, %v2195, 0.0
    %v2223 = vadd.f32 %v2221, %v2222
    %2224 = vadd.xlane.f32.xlu0 %v2223
    %v2225 = vpop.xlane.xlu0 %2224
    %v2226 = vadd.f32 %v2196, %v2197
    %v2227 = vadd.f32 %v2226, %v2198
    %v2228 = vadd.f32 %v2227, %v2199
    %v2229 = vadd.f32 %v2228, %v2200
    %v2230 = vadd.f32 %v2229, %v2201
    %v2231 = vsel %vm313, %v2202, 0.0
    %v2232 = vadd.f32 %v2230, %v2231
    %2233 = vadd.xlane.f32.xlu0 %v2232
    %v2234 = vpop.xlane.xlu0 %2233
    %v2235 = vadd.f32 %v2203, %v2204
    %v2236 = vadd.f32 %v2235, %v2205
    %v2237 = vadd.f32 %v2236, %v2206
    %v2238 = vadd.f32 %v2237, %v2207
    %v2239 = vadd.f32 %v2238, %v2208
    %v2240 = vsel %vm313, %v2209, 0.0
    %v2241 = vadd.f32 %v2239, %v2240
    %2242 = vadd.xlane.f32.xlu0 %v2241
    %v2243 = vpop.xlane.xlu0 %2242
    %v2244 = vadd.f32 %v2210, %v2211
    %v2245 = vadd.f32 %v2244, %v2212
    %v2246 = vadd.f32 %v2245, %v2213
    %v2247 = vadd.f32 %v2246, %v2214
    %v2248 = vadd.f32 %v2247, %v2215
    %v2249 = vsel %vm313, %v2216, 0.0
    %v2250 = vadd.f32 %v2248, %v2249
    %2251 = vadd.xlane.f32.xlu0 %v2250
    %v2252 = vpop.xlane.xlu0 %2251
    %v2253 = vmul.f32 %v2225, 0.0012755102
    %v2254 = vmul.f32 %v2234, 0.0012755102
    %v2255 = vmul.f32 %v2243, 0.0012755102
    %v2256 = vmul.f32 %v2252, 0.0012755102
    %v2257 = vld [vmem:[%s12 + $0xc0] sm:$0xff]
    %v2258 = vld [vmem:[%s12 + $0xc8] sm:$0xff]
    %v2259 = vld [vmem:[%s12 + $0xd0] sm:$0xff]
    %v2260 = vld [vmem:[%s12 + $0xd8] sm:$0xff]
    %v2261 = vld [vmem:[%s13 + $0xc0] sm:$0xff]
    %v2262 = vld [vmem:[%s13 + $0xc8] sm:$0xff]
    %v2263 = vld [vmem:[%s13 + $0xd0] sm:$0xff]
    %v2264 = vld [vmem:[%s13 + $0xd8] sm:$0xff]
    %v2265 = vadd.f32 %v2253, 1e-05
    %v2266 = vadd.f32 %v2254, 1e-05
    %v2267 = vadd.f32 %v2255, 1e-05
    %v2268 = vadd.f32 %v2256, 1e-05
    %v2269 = vrsqrt.pop %v2265
    %v2270 = vrsqrt.pop %v2266
    %v2271 = vrsqrt.pop %v2267
    %v2272 = vrsqrt.pop %v2268
    %v2273 = vmul.f32 %v2269, %v2257
    %v2274 = vmul.f32 %v2270, %v2258
    %v2275 = vmul.f32 %v2271, %v2259
    %v2276 = vmul.f32 %v2272, %v2260
    %v2277 = vmul.f32 %v2157, %v2273
    %v2278 = vmul.f32 %v2158, %v2274
    %v2279 = vmul.f32 %v2159, %v2275
    %v2280 = vmul.f32 %v2160, %v2276
    %v2281 = vsub.f32 %v2261, %v2277
    %v2282 = vsub.f32 %v2262, %v2278
    %v2283 = vsub.f32 %v2263, %v2279
    %v2284 = vsub.f32 %v2264, %v2280
    %2286 = vset.pattern.permute.xlu0 0
    %2287 = vperm.xlu0 %2286, %v2273
    %v2288 = vpop.permute.xlu0 %2287
    %2291 = vset.pattern.permute.xlu0 0
    %2292 = vperm.xlu0 %2291, %v2274
    %v2293 = vpop.permute.xlu0 %2292
    %2296 = vset.pattern.permute.xlu0 0
    %2297 = vperm.xlu0 %2296, %v2275
    %v2298 = vpop.permute.xlu0 %2297
    %2301 = vset.pattern.permute.xlu0 0
    %2302 = vperm.xlu0 %2301, %v2276
    %v2303 = vpop.permute.xlu0 %2302
    %v2305 = vmul.f32 %v2093, %v2288
    %v2306 = vmul.f32 %v2094, %v2288
    %v2307 = vmul.f32 %v2095, %v2288
    %v2308 = vmul.f32 %v2096, %v2288
    %v2309 = vmul.f32 %v2097, %v2288
    %v2310 = vmul.f32 %v2098, %v2288
    %v2311 = vmul.f32 %v2099, %v2288
    %v2312 = vmul.f32 %v2100, %v2293
    %v2313 = vmul.f32 %v2101, %v2293
    %v2314 = vmul.f32 %v2102, %v2293
    %v2315 = vmul.f32 %v2103, %v2293
    %v2316 = vmul.f32 %v2104, %v2293
    %v2317 = vmul.f32 %v2105, %v2293
    %v2318 = vmul.f32 %v2106, %v2293
    %v2319 = vmul.f32 %v2107, %v2298
    %v2320 = vmul.f32 %v2108, %v2298
    %v2321 = vmul.f32 %v2109, %v2298
    %v2322 = vmul.f32 %v2110, %v2298
    %v2323 = vmul.f32 %v2111, %v2298
    %v2324 = vmul.f32 %v2112, %v2298
    %v2325 = vmul.f32 %v2113, %v2298
    %v2326 = vmul.f32 %v2114, %v2303
    %v2327 = vmul.f32 %v2115, %v2303
    %v2328 = vmul.f32 %v2116, %v2303
    %v2329 = vmul.f32 %v2117, %v2303
    %v2330 = vmul.f32 %v2118, %v2303
    %v2331 = vmul.f32 %v2119, %v2303
    %v2332 = vmul.f32 %v2120, %v2303
    %2334 = vset.pattern.permute.xlu0 0
    %2335 = vperm.xlu0 %2334, %v2281
    %v2336 = vpop.permute.xlu0 %2335
    %2339 = vset.pattern.permute.xlu0 0
    %2340 = vperm.xlu0 %2339, %v2282
    %v2341 = vpop.permute.xlu0 %2340
    %2344 = vset.pattern.permute.xlu0 0
    %2345 = vperm.xlu0 %2344, %v2283
    %v2346 = vpop.permute.xlu0 %2345
    %2349 = vset.pattern.permute.xlu0 0
    %2350 = vperm.xlu0 %2349, %v2284
    %v2351 = vpop.permute.xlu0 %2350
    %v2353 = vadd.f32 %v2305, %v2336
    %v2354 = vadd.f32 %v2306, %v2336
    %v2355 = vadd.f32 %v2307, %v2336
    %v2356 = vadd.f32 %v2308, %v2336
    %v2357 = vadd.f32 %v2309, %v2336
    %v2358 = vadd.f32 %v2310, %v2336
    %v2359 = vadd.f32 %v2311, %v2336
    %v2360 = vadd.f32 %v2312, %v2341
    %v2361 = vadd.f32 %v2313, %v2341
    %v2362 = vadd.f32 %v2314, %v2341
    %v2363 = vadd.f32 %v2315, %v2341
    %v2364 = vadd.f32 %v2316, %v2341
    %v2365 = vadd.f32 %v2317, %v2341
    %v2366 = vadd.f32 %v2318, %v2341
    %v2367 = vadd.f32 %v2319, %v2346
    %v2368 = vadd.f32 %v2320, %v2346
    %v2369 = vadd.f32 %v2321, %v2346
    %v2370 = vadd.f32 %v2322, %v2346
    %v2371 = vadd.f32 %v2323, %v2346
    %v2372 = vadd.f32 %v2324, %v2346
    %v2373 = vadd.f32 %v2325, %v2346
    %v2374 = vadd.f32 %v2326, %v2351
    %v2375 = vadd.f32 %v2327, %v2351
    %v2376 = vadd.f32 %v2328, %v2351
    %v2377 = vadd.f32 %v2329, %v2351
    %v2378 = vadd.f32 %v2330, %v2351
    %v2379 = vadd.f32 %v2331, %v2351
    %v2380 = vadd.f32 %v2332, %v2351
    %2381 = vst [vmem:[%s14 + $0x540] sm:$0xff] %v2353
    %2382 = vst [vmem:[%s14 + $0x548] sm:$0xff] %v2354
    %2383 = vst [vmem:[%s14 + $0x550] sm:$0xff] %v2355
    %2384 = vst [vmem:[%s14 + $0x558] sm:$0xff] %v2356
    %2385 = vst [vmem:[%s14 + $0x560] sm:$0xff] %v2357
    %2386 = vst [vmem:[%s14 + $0x568] sm:$0xff] %v2358
    %2387 = vst.msk [vmem:[%s14 + $0x570] sm:$0xff] %vm313, %v2359
    %2388 = vst [vmem:[%s14 + $0x578] sm:$0xff] %v2360
    %2389 = vst [vmem:[%s14 + $0x580] sm:$0xff] %v2361
    %2390 = vst [vmem:[%s14 + $0x588] sm:$0xff] %v2362
    %2391 = vst [vmem:[%s14 + $0x590] sm:$0xff] %v2363
    %2392 = vst [vmem:[%s14 + $0x598] sm:$0xff] %v2364
    %2393 = vst [vmem:[%s14 + $0x5a0] sm:$0xff] %v2365
    %2394 = vst.msk [vmem:[%s14 + $0x5a8] sm:$0xff] %vm313, %v2366
    %2395 = vst [vmem:[%s14 + $0x5b0] sm:$0xff] %v2367
    %2396 = vst [vmem:[%s14 + $0x5b8] sm:$0xff] %v2368
    %2397 = vst [vmem:[%s14 + $0x5c0] sm:$0xff] %v2369
    %2398 = vst [vmem:[%s14 + $0x5c8] sm:$0xff] %v2370
    %2399 = vst [vmem:[%s14 + $0x5d0] sm:$0xff] %v2371
    %2400 = vst [vmem:[%s14 + $0x5d8] sm:$0xff] %v2372
    %2401 = vst.msk [vmem:[%s14 + $0x5e0] sm:$0xff] %vm313, %v2373
    %2402 = vst [vmem:[%s14 + $0x5e8] sm:$0xff] %v2374
    %2403 = vst [vmem:[%s14 + $0x5f0] sm:$0xff] %v2375
    %2404 = vst [vmem:[%s14 + $0x5f8] sm:$0xff] %v2376
    %2405 = vst [vmem:[%s14 + $0x600] sm:$0xff] %v2377
    %2406 = vst [vmem:[%s14 + $0x608] sm:$0xff] %v2378
    %2407 = vst [vmem:[%s14 + $0x610] sm:$0xff] %v2379
    %2408 = vst.msk [vmem:[%s14 + $0x618] sm:$0xff] %vm313, %v2380
    %v2409 = vld [vmem:[#allocation7] sm:$0xff]
    %v2410 = vld [vmem:[#allocation7 + $0x8] sm:$0xff]
    %v2411 = vld [vmem:[#allocation7 + $0x10] sm:$0xff]
    %v2412 = vld [vmem:[#allocation7 + $0x18] sm:$0xff]
    %v2413 = vld [vmem:[#allocation7 + $0x20] sm:$0xff]
    %v2414 = vld [vmem:[#allocation7 + $0x28] sm:$0xff]
    %v2415 = vld [vmem:[#allocation7 + $0x30] sm:$0xff]
    %v2416 = vld [vmem:[#allocation7 + $0x38] sm:$0xff]
    %v2417 = vld [vmem:[#allocation7 + $0x40] sm:$0xff]
    %v2418 = vld [vmem:[#allocation7 + $0x48] sm:$0xff]
    %v2419 = vld [vmem:[#allocation7 + $0x50] sm:$0xff]
    %v2420 = vld [vmem:[#allocation7 + $0x58] sm:$0xff]
    %v2421 = vld [vmem:[#allocation7 + $0x60] sm:$0xff]
    %v2422 = vld [vmem:[#allocation7 + $0x68] sm:$0xff]
    %v2423 = vld [vmem:[#allocation7 + $0x70] sm:$0xff]
    %v2424 = vld [vmem:[#allocation7 + $0x78] sm:$0xff]
    %v2425 = vld [vmem:[#allocation7 + $0x80] sm:$0xff]
    %v2426 = vld [vmem:[#allocation7 + $0x88] sm:$0xff]
    %v2427 = vld [vmem:[#allocation7 + $0x90] sm:$0xff]
    %v2428 = vld [vmem:[#allocation7 + $0x98] sm:$0xff]
    %v2429 = vld [vmem:[#allocation7 + $0xa0] sm:$0xff]
    %v2430 = vld [vmem:[#allocation7 + $0xa8] sm:$0xff]
    %v2431 = vld [vmem:[#allocation7 + $0xb0] sm:$0xff]
    %v2432 = vld [vmem:[#allocation7 + $0xb8] sm:$0xff]
    %v2433 = vld [vmem:[#allocation7 + $0xc0] sm:$0xff]
    %v2434 = vld [vmem:[#allocation7 + $0xc8] sm:$0xff]
    %v2435 = vld [vmem:[#allocation7 + $0xd0] sm:$0xff]
    %v2436 = vld [vmem:[#allocation7 + $0xd8] sm:$0xff]
    %v2437 = vadd.f32 %v2409, %v2410
    %v2438 = vadd.f32 %v2437, %v2411
    %v2439 = vadd.f32 %v2438, %v2412
    %v2440 = vadd.f32 %v2439, %v2413
    %v2441 = vadd.f32 %v2440, %v2414
    %v2442 = vsel %vm313, %v2415, 0.0
    %v2443 = vadd.f32 %v2441, %v2442
    %2444 = vadd.xlane.f32.xlu0 %v2443
    %v2445 = vpop.xlane.xlu0 %2444
    %v2446 = vadd.f32 %v2416, %v2417
    %v2447 = vadd.f32 %v2446, %v2418
    %v2448 = vadd.f32 %v2447, %v2419
    %v2449 = vadd.f32 %v2448, %v2420
    %v2450 = vadd.f32 %v2449, %v2421
    %v2451 = vsel %vm313, %v2422, 0.0
    %v2452 = vadd.f32 %v2450, %v2451
    %2453 = vadd.xlane.f32.xlu0 %v2452
    %v2454 = vpop.xlane.xlu0 %2453
    %v2455 = vadd.f32 %v2423, %v2424
    %v2456 = vadd.f32 %v2455, %v2425
    %v2457 = vadd.f32 %v2456, %v2426
    %v2458 = vadd.f32 %v2457, %v2427
    %v2459 = vadd.f32 %v2458, %v2428
    %v2460 = vsel %vm313, %v2429, 0.0
    %v2461 = vadd.f32 %v2459, %v2460
    %2462 = vadd.xlane.f32.xlu0 %v2461
    %v2463 = vpop.xlane.xlu0 %2462
    %v2464 = vadd.f32 %v2430, %v2431
    %v2465 = vadd.f32 %v2464, %v2432
    %v2466 = vadd.f32 %v2465, %v2433
    %v2467 = vadd.f32 %v2466, %v2434
    %v2468 = vadd.f32 %v2467, %v2435
    %v2469 = vsel %vm313, %v2436, 0.0
    %v2470 = vadd.f32 %v2468, %v2469
    %2471 = vadd.xlane.f32.xlu0 %v2470
    %v2472 = vpop.xlane.xlu0 %2471
    %v2473 = vmul.f32 %v2445, 0.0012755102
    %v2474 = vmul.f32 %v2454, 0.0012755102
    %v2475 = vmul.f32 %v2463, 0.0012755102
    %v2476 = vmul.f32 %v2472, 0.0012755102
    %v2477 = vsub.f32 %v2409, %v2473
    %v2478 = vsub.f32 %v2410, %v2473
    %v2479 = vsub.f32 %v2411, %v2473
    %v2480 = vsub.f32 %v2412, %v2473
    %v2481 = vsub.f32 %v2413, %v2473
    %v2482 = vsub.f32 %v2414, %v2473
    %v2483 = vsub.f32 %v2415, %v2473
    %v2484 = vsub.f32 %v2416, %v2474
    %v2485 = vsub.f32 %v2417, %v2474
    %v2486 = vsub.f32 %v2418, %v2474
    %v2487 = vsub.f32 %v2419, %v2474
    %v2488 = vsub.f32 %v2420, %v2474
    %v2489 = vsub.f32 %v2421, %v2474
    %v2490 = vsub.f32 %v2422, %v2474
    %v2491 = vsub.f32 %v2423, %v2475
    %v2492 = vsub.f32 %v2424, %v2475
    %v2493 = vsub.f32 %v2425, %v2475
    %v2494 = vsub.f32 %v2426, %v2475
    %v2495 = vsub.f32 %v2427, %v2475
    %v2496 = vsub.f32 %v2428, %v2475
    %v2497 = vsub.f32 %v2429, %v2475
    %v2498 = vsub.f32 %v2430, %v2476
    %v2499 = vsub.f32 %v2431, %v2476
    %v2500 = vsub.f32 %v2432, %v2476
    %v2501 = vsub.f32 %v2433, %v2476
    %v2502 = vsub.f32 %v2434, %v2476
    %v2503 = vsub.f32 %v2435, %v2476
    %v2504 = vsub.f32 %v2436, %v2476
    %v2505 = vmul.f32 %v2477, %v2477
    %v2506 = vmul.f32 %v2478, %v2478
    %v2507 = vmul.f32 %v2479, %v2479
    %v2508 = vmul.f32 %v2480, %v2480
    %v2509 = vmul.f32 %v2481, %v2481
    %v2510 = vmul.f32 %v2482, %v2482
    %v2511 = vmul.f32 %v2483, %v2483
    %v2512 = vmul.f32 %v2484, %v2484
    %v2513 = vmul.f32 %v2485, %v2485
    %v2514 = vmul.f32 %v2486, %v2486
    %v2515 = vmul.f32 %v2487, %v2487
    %v2516 = vmul.f32 %v2488, %v2488
    %v2517 = vmul.f32 %v2489, %v2489
    %v2518 = vmul.f32 %v2490, %v2490
    %v2519 = vmul.f32 %v2491, %v2491
    %v2520 = vmul.f32 %v2492, %v2492
    %v2521 = vmul.f32 %v2493, %v2493
    %v2522 = vmul.f32 %v2494, %v2494
    %v2523 = vmul.f32 %v2495, %v2495
    %v2524 = vmul.f32 %v2496, %v2496
    %v2525 = vmul.f32 %v2497, %v2497
    %v2526 = vmul.f32 %v2498, %v2498
    %v2527 = vmul.f32 %v2499, %v2499
    %v2528 = vmul.f32 %v2500, %v2500
    %v2529 = vmul.f32 %v2501, %v2501
    %v2530 = vmul.f32 %v2502, %v2502
    %v2531 = vmul.f32 %v2503, %v2503
    %v2532 = vmul.f32 %v2504, %v2504
    %v2533 = vadd.f32 %v2505, %v2506
    %v2534 = vadd.f32 %v2533, %v2507
    %v2535 = vadd.f32 %v2534, %v2508
    %v2536 = vadd.f32 %v2535, %v2509
    %v2537 = vadd.f32 %v2536, %v2510
    %v2538 = vsel %vm313, %v2511, 0.0
    %v2539 = vadd.f32 %v2537, %v2538
    %2540 = vadd.xlane.f32.xlu0 %v2539
    %v2541 = vpop.xlane.xlu0 %2540
    %v2542 = vadd.f32 %v2512, %v2513
    %v2543 = vadd.f32 %v2542, %v2514
    %v2544 = vadd.f32 %v2543, %v2515
    %v2545 = vadd.f32 %v2544, %v2516
    %v2546 = vadd.f32 %v2545, %v2517
    %v2547 = vsel %vm313, %v2518, 0.0
    %v2548 = vadd.f32 %v2546, %v2547
    %2549 = vadd.xlane.f32.xlu0 %v2548
    %v2550 = vpop.xlane.xlu0 %2549
    %v2551 = vadd.f32 %v2519, %v2520
    %v2552 = vadd.f32 %v2551, %v2521
    %v2553 = vadd.f32 %v2552, %v2522
    %v2554 = vadd.f32 %v2553, %v2523
    %v2555 = vadd.f32 %v2554, %v2524
    %v2556 = vsel %vm313, %v2525, 0.0
    %v2557 = vadd.f32 %v2555, %v2556
    %2558 = vadd.xlane.f32.xlu0 %v2557
    %v2559 = vpop.xlane.xlu0 %2558
    %v2560 = vadd.f32 %v2526, %v2527
    %v2561 = vadd.f32 %v2560, %v2528
    %v2562 = vadd.f32 %v2561, %v2529
    %v2563 = vadd.f32 %v2562, %v2530
    %v2564 = vadd.f32 %v2563, %v2531
    %v2565 = vsel %vm313, %v2532, 0.0
    %v2566 = vadd.f32 %v2564, %v2565
    %2567 = vadd.xlane.f32.xlu0 %v2566
    %v2568 = vpop.xlane.xlu0 %2567
    %v2569 = vmul.f32 %v2541, 0.0012755102
    %v2570 = vmul.f32 %v2550, 0.0012755102
    %v2571 = vmul.f32 %v2559, 0.0012755102
    %v2572 = vmul.f32 %v2568, 0.0012755102
    %v2573 = vld [vmem:[%s12 + $0xe0] sm:$0xff]
    %v2574 = vld [vmem:[%s12 + $0xe8] sm:$0xff]
    %v2575 = vld [vmem:[%s12 + $0xf0] sm:$0xff]
    %v2576 = vld [vmem:[%s12 + $0xf8] sm:$0xff]
    %v2577 = vld [vmem:[%s13 + $0xe0] sm:$0xff]
    %v2578 = vld [vmem:[%s13 + $0xe8] sm:$0xff]
    %v2579 = vld [vmem:[%s13 + $0xf0] sm:$0xff]
    %v2580 = vld [vmem:[%s13 + $0xf8] sm:$0xff]
    %v2581 = vadd.f32 %v2569, 1e-05
    %v2582 = vadd.f32 %v2570, 1e-05
    %v2583 = vadd.f32 %v2571, 1e-05
    %v2584 = vadd.f32 %v2572, 1e-05
    %v2585 = vrsqrt.pop %v2581
    %v2586 = vrsqrt.pop %v2582
    %v2587 = vrsqrt.pop %v2583
    %v2588 = vrsqrt.pop %v2584
    %v2589 = vmul.f32 %v2585, %v2573
    %v2590 = vmul.f32 %v2586, %v2574
    %v2591 = vmul.f32 %v2587, %v2575
    %v2592 = vmul.f32 %v2588, %v2576
    %v2593 = vmul.f32 %v2473, %v2589
    %v2594 = vmul.f32 %v2474, %v2590
    %v2595 = vmul.f32 %v2475, %v2591
    %v2596 = vmul.f32 %v2476, %v2592
    %v2597 = vsub.f32 %v2577, %v2593
    %v2598 = vsub.f32 %v2578, %v2594
    %v2599 = vsub.f32 %v2579, %v2595
    %v2600 = vsub.f32 %v2580, %v2596
    %2602 = vset.pattern.permute.xlu0 0
    %2603 = vperm.xlu0 %2602, %v2589
    %v2604 = vpop.permute.xlu0 %2603
    %2607 = vset.pattern.permute.xlu0 0
    %2608 = vperm.xlu0 %2607, %v2590
    %v2609 = vpop.permute.xlu0 %2608
    %2612 = vset.pattern.permute.xlu0 0
    %2613 = vperm.xlu0 %2612, %v2591
    %v2614 = vpop.permute.xlu0 %2613
    %2617 = vset.pattern.permute.xlu0 0
    %2618 = vperm.xlu0 %2617, %v2592
    %v2619 = vpop.permute.xlu0 %2618
    %v2621 = vmul.f32 %v2409, %v2604
    %v2622 = vmul.f32 %v2410, %v2604
    %v2623 = vmul.f32 %v2411, %v2604
    %v2624 = vmul.f32 %v2412, %v2604
    %v2625 = vmul.f32 %v2413, %v2604
    %v2626 = vmul.f32 %v2414, %v2604
    %v2627 = vmul.f32 %v2415, %v2604
    %v2628 = vmul.f32 %v2416, %v2609
    %v2629 = vmul.f32 %v2417, %v2609
    %v2630 = vmul.f32 %v2418, %v2609
    %v2631 = vmul.f32 %v2419, %v2609
    %v2632 = vmul.f32 %v2420, %v2609
    %v2633 = vmul.f32 %v2421, %v2609
    %v2634 = vmul.f32 %v2422, %v2609
    %v2635 = vmul.f32 %v2423, %v2614
    %v2636 = vmul.f32 %v2424, %v2614
    %v2637 = vmul.f32 %v2425, %v2614
    %v2638 = vmul.f32 %v2426, %v2614
    %v2639 = vmul.f32 %v2427, %v2614
    %v2640 = vmul.f32 %v2428, %v2614
    %v2641 = vmul.f32 %v2429, %v2614
    %v2642 = vmul.f32 %v2430, %v2619
    %v2643 = vmul.f32 %v2431, %v2619
    %v2644 = vmul.f32 %v2432, %v2619
    %v2645 = vmul.f32 %v2433, %v2619
    %v2646 = vmul.f32 %v2434, %v2619
    %v2647 = vmul.f32 %v2435, %v2619
    %v2648 = vmul.f32 %v2436, %v2619
    %2650 = vset.pattern.permute.xlu0 0
    %2651 = vperm.xlu0 %2650, %v2597
    %v2652 = vpop.permute.xlu0 %2651
    %2655 = vset.pattern.permute.xlu0 0
    %2656 = vperm.xlu0 %2655, %v2598
    %v2657 = vpop.permute.xlu0 %2656
    %2660 = vset.pattern.permute.xlu0 0
    %2661 = vperm.xlu0 %2660, %v2599
    %v2662 = vpop.permute.xlu0 %2661
    %2665 = vset.pattern.permute.xlu0 0
    %2666 = vperm.xlu0 %2665, %v2600
    %v2667 = vpop.permute.xlu0 %2666
    %v2669 = vadd.f32 %v2621, %v2652
    %v2670 = vadd.f32 %v2622, %v2652
    %v2671 = vadd.f32 %v2623, %v2652
    %v2672 = vadd.f32 %v2624, %v2652
    %v2673 = vadd.f32 %v2625, %v2652
    %v2674 = vadd.f32 %v2626, %v2652
    %v2675 = vadd.f32 %v2627, %v2652
    %v2676 = vadd.f32 %v2628, %v2657
    %v2677 = vadd.f32 %v2629, %v2657
    %v2678 = vadd.f32 %v2630, %v2657
    %v2679 = vadd.f32 %v2631, %v2657
    %v2680 = vadd.f32 %v2632, %v2657
    %v2681 = vadd.f32 %v2633, %v2657
    %v2682 = vadd.f32 %v2634, %v2657
    %v2683 = vadd.f32 %v2635, %v2662
    %v2684 = vadd.f32 %v2636, %v2662
    %v2685 = vadd.f32 %v2637, %v2662
    %v2686 = vadd.f32 %v2638, %v2662
    %v2687 = vadd.f32 %v2639, %v2662
    %v2688 = vadd.f32 %v2640, %v2662
    %v2689 = vadd.f32 %v2641, %v2662
    %v2690 = vadd.f32 %v2642, %v2667
    %v2691 = vadd.f32 %v2643, %v2667
    %v2692 = vadd.f32 %v2644, %v2667
    %v2693 = vadd.f32 %v2645, %v2667
    %v2694 = vadd.f32 %v2646, %v2667
    %v2695 = vadd.f32 %v2647, %v2667
    %v2696 = vadd.f32 %v2648, %v2667
    %2697 = vst [vmem:[%s14 + $0x620] sm:$0xff] %v2669
    %2698 = vst [vmem:[%s14 + $0x628] sm:$0xff] %v2670
    %2699 = vst [vmem:[%s14 + $0x630] sm:$0xff] %v2671
    %2700 = vst [vmem:[%s14 + $0x638] sm:$0xff] %v2672
    %2701 = vst [vmem:[%s14 + $0x640] sm:$0xff] %v2673
    %2702 = vst [vmem:[%s14 + $0x648] sm:$0xff] %v2674
    %2703 = vst.msk [vmem:[%s14 + $0x650] sm:$0xff] %vm313, %v2675
    %2704 = vst [vmem:[%s14 + $0x658] sm:$0xff] %v2676
    %2705 = vst [vmem:[%s14 + $0x660] sm:$0xff] %v2677
    %2706 = vst [vmem:[%s14 + $0x668] sm:$0xff] %v2678
    %2707 = vst [vmem:[%s14 + $0x670] sm:$0xff] %v2679
    %2708 = vst [vmem:[%s14 + $0x678] sm:$0xff] %v2680
    %2709 = vst [vmem:[%s14 + $0x680] sm:$0xff] %v2681
    %2710 = vst.msk [vmem:[%s14 + $0x688] sm:$0xff] %vm313, %v2682
    %2711 = vst [vmem:[%s14 + $0x690] sm:$0xff] %v2683
    %2712 = vst [vmem:[%s14 + $0x698] sm:$0xff] %v2684
    %2713 = vst [vmem:[%s14 + $0x6a0] sm:$0xff] %v2685
    %2714 = vst [vmem:[%s14 + $0x6a8] sm:$0xff] %v2686
    %2715 = vst [vmem:[%s14 + $0x6b0] sm:$0xff] %v2687
    %2716 = vst [vmem:[%s14 + $0x6b8] sm:$0xff] %v2688
    %2717 = vst.msk [vmem:[%s14 + $0x6c0] sm:$0xff] %vm313, %v2689
    %2718 = vst [vmem:[%s14 + $0x6c8] sm:$0xff] %v2690
    %2719 = vst [vmem:[%s14 + $0x6d0] sm:$0xff] %v2691
    %2720 = vst [vmem:[%s14 + $0x6d8] sm:$0xff] %v2692
    %2721 = vst [vmem:[%s14 + $0x6e0] sm:$0xff] %v2693
    %2722 = vst [vmem:[%s14 + $0x6e8] sm:$0xff] %v2694
    %2723 = vst [vmem:[%s14 + $0x6f0] sm:$0xff] %v2695
    %2724 = vst.msk [vmem:[%s14 + $0x6f8] sm:$0xff] %vm313, %v2696
    %v2725 = vld [vmem:[#allocation9] sm:$0xff]
    %v2726 = vld [vmem:[#allocation9 + $0x8] sm:$0xff]
    %v2727 = vld [vmem:[#allocation9 + $0x10] sm:$0xff]
    %v2728 = vld [vmem:[#allocation9 + $0x18] sm:$0xff]
    %v2729 = vld [vmem:[#allocation9 + $0x20] sm:$0xff]
    %v2730 = vld [vmem:[#allocation9 + $0x28] sm:$0xff]
    %v2731 = vld [vmem:[#allocation9 + $0x30] sm:$0xff]
    %v2732 = vld [vmem:[#allocation9 + $0x38] sm:$0xff]
    %v2733 = vld [vmem:[#allocation9 + $0x40] sm:$0xff]
    %v2734 = vld [vmem:[#allocation9 + $0x48] sm:$0xff]
    %v2735 = vld [vmem:[#allocation9 + $0x50] sm:$0xff]
    %v2736 = vld [vmem:[#allocation9 + $0x58] sm:$0xff]
    %v2737 = vld [vmem:[#allocation9 + $0x60] sm:$0xff]
    %v2738 = vld [vmem:[#allocation9 + $0x68] sm:$0xff]
    %v2739 = vld [vmem:[#allocation9 + $0x70] sm:$0xff]
    %v2740 = vld [vmem:[#allocation9 + $0x78] sm:$0xff]
    %v2741 = vld [vmem:[#allocation9 + $0x80] sm:$0xff]
    %v2742 = vld [vmem:[#allocation9 + $0x88] sm:$0xff]
    %v2743 = vld [vmem:[#allocation9 + $0x90] sm:$0xff]
    %v2744 = vld [vmem:[#allocation9 + $0x98] sm:$0xff]
    %v2745 = vld [vmem:[#allocation9 + $0xa0] sm:$0xff]
    %v2746 = vld [vmem:[#allocation9 + $0xa8] sm:$0xff]
    %v2747 = vld [vmem:[#allocation9 + $0xb0] sm:$0xff]
    %v2748 = vld [vmem:[#allocation9 + $0xb8] sm:$0xff]
    %v2749 = vld [vmem:[#allocation9 + $0xc0] sm:$0xff]
    %v2750 = vld [vmem:[#allocation9 + $0xc8] sm:$0xff]
    %v2751 = vld [vmem:[#allocation9 + $0xd0] sm:$0xff]
    %v2752 = vld [vmem:[#allocation9 + $0xd8] sm:$0xff]
    %v2753 = vadd.f32 %v2725, %v2726
    %v2754 = vadd.f32 %v2753, %v2727
    %v2755 = vadd.f32 %v2754, %v2728
    %v2756 = vadd.f32 %v2755, %v2729
    %v2757 = vadd.f32 %v2756, %v2730
    %v2758 = vsel %vm313, %v2731, 0.0
    %v2759 = vadd.f32 %v2757, %v2758
    %2760 = vadd.xlane.f32.xlu0 %v2759
    %v2761 = vpop.xlane.xlu0 %2760
    %v2762 = vadd.f32 %v2732, %v2733
    %v2763 = vadd.f32 %v2762, %v2734
    %v2764 = vadd.f32 %v2763, %v2735
    %v2765 = vadd.f32 %v2764, %v2736
    %v2766 = vadd.f32 %v2765, %v2737
    %v2767 = vsel %vm313, %v2738, 0.0
    %v2768 = vadd.f32 %v2766, %v2767
    %2769 = vadd.xlane.f32.xlu0 %v2768
    %v2770 = vpop.xlane.xlu0 %2769
    %v2771 = vadd.f32 %v2739, %v2740
    %v2772 = vadd.f32 %v2771, %v2741
    %v2773 = vadd.f32 %v2772, %v2742
    %v2774 = vadd.f32 %v2773, %v2743
    %v2775 = vadd.f32 %v2774, %v2744
    %v2776 = vsel %vm313, %v2745, 0.0
    %v2777 = vadd.f32 %v2775, %v2776
    %2778 = vadd.xlane.f32.xlu0 %v2777
    %v2779 = vpop.xlane.xlu0 %2778
    %v2780 = vadd.f32 %v2746, %v2747
    %v2781 = vadd.f32 %v2780, %v2748
    %v2782 = vadd.f32 %v2781, %v2749
    %v2783 = vadd.f32 %v2782, %v2750
    %v2784 = vadd.f32 %v2783, %v2751
    %v2785 = vsel %vm313, %v2752, 0.0
    %v2786 = vadd.f32 %v2784, %v2785
    %2787 = vadd.xlane.f32.xlu0 %v2786
    %v2788 = vpop.xlane.xlu0 %2787
    %v2789 = vmul.f32 %v2761, 0.0012755102
    %v2790 = vmul.f32 %v2770, 0.0012755102
    %v2791 = vmul.f32 %v2779, 0.0012755102
    %v2792 = vmul.f32 %v2788, 0.0012755102
    %v2793 = vsub.f32 %v2725, %v2789
    %v2794 = vsub.f32 %v2726, %v2789
    %v2795 = vsub.f32 %v2727, %v2789
    %v2796 = vsub.f32 %v2728, %v2789
    %v2797 = vsub.f32 %v2729, %v2789
    %v2798 = vsub.f32 %v2730, %v2789
    %v2799 = vsub.f32 %v2731, %v2789
    %v2800 = vsub.f32 %v2732, %v2790
    %v2801 = vsub.f32 %v2733, %v2790
    %v2802 = vsub.f32 %v2734, %v2790
    %v2803 = vsub.f32 %v2735, %v2790
    %v2804 = vsub.f32 %v2736, %v2790
    %v2805 = vsub.f32 %v2737, %v2790
    %v2806 = vsub.f32 %v2738, %v2790
    %v2807 = vsub.f32 %v2739, %v2791
    %v2808 = vsub.f32 %v2740, %v2791
    %v2809 = vsub.f32 %v2741, %v2791
    %v2810 = vsub.f32 %v2742, %v2791
    %v2811 = vsub.f32 %v2743, %v2791
    %v2812 = vsub.f32 %v2744, %v2791
    %v2813 = vsub.f32 %v2745, %v2791
    %v2814 = vsub.f32 %v2746, %v2792
    %v2815 = vsub.f32 %v2747, %v2792
    %v2816 = vsub.f32 %v2748, %v2792
    %v2817 = vsub.f32 %v2749, %v2792
    %v2818 = vsub.f32 %v2750, %v2792
    %v2819 = vsub.f32 %v2751, %v2792
    %v2820 = vsub.f32 %v2752, %v2792
    %v2821 = vmul.f32 %v2793, %v2793
    %v2822 = vmul.f32 %v2794, %v2794
    %v2823 = vmul.f32 %v2795, %v2795
    %v2824 = vmul.f32 %v2796, %v2796
    %v2825 = vmul.f32 %v2797, %v2797
    %v2826 = vmul.f32 %v2798, %v2798
    %v2827 = vmul.f32 %v2799, %v2799
    %v2828 = vmul.f32 %v2800, %v2800
    %v2829 = vmul.f32 %v2801, %v2801
    %v2830 = vmul.f32 %v2802, %v2802
    %v2831 = vmul.f32 %v2803, %v2803
    %v2832 = vmul.f32 %v2804, %v2804
    %v2833 = vmul.f32 %v2805, %v2805
    %v2834 = vmul.f32 %v2806, %v2806
    %v2835 = vmul.f32 %v2807, %v2807
    %v2836 = vmul.f32 %v2808, %v2808
    %v2837 = vmul.f32 %v2809, %v2809
    %v2838 = vmul.f32 %v2810, %v2810
    %v2839 = vmul.f32 %v2811, %v2811
    %v2840 = vmul.f32 %v2812, %v2812
    %v2841 = vmul.f32 %v2813, %v2813
    %v2842 = vmul.f32 %v2814, %v2814
    %v2843 = vmul.f32 %v2815, %v2815
    %v2844 = vmul.f32 %v2816, %v2816
    %v2845 = vmul.f32 %v2817, %v2817
    %v2846 = vmul.f32 %v2818, %v2818
    %v2847 = vmul.f32 %v2819, %v2819
    %v2848 = vmul.f32 %v2820, %v2820
    %v2849 = vadd.f32 %v2821, %v2822
    %v2850 = vadd.f32 %v2849, %v2823
    %v2851 = vadd.f32 %v2850, %v2824
    %v2852 = vadd.f32 %v2851, %v2825
    %v2853 = vadd.f32 %v2852, %v2826
    %v2854 = vsel %vm313, %v2827, 0.0
    %v2855 = vadd.f32 %v2853, %v2854
    %2856 = vadd.xlane.f32.xlu0 %v2855
    %v2857 = vpop.xlane.xlu0 %2856
    %v2858 = vadd.f32 %v2828, %v2829
    %v2859 = vadd.f32 %v2858, %v2830
    %v2860 = vadd.f32 %v2859, %v2831
    %v2861 = vadd.f32 %v2860, %v2832
    %v2862 = vadd.f32 %v2861, %v2833
    %v2863 = vsel %vm313, %v2834, 0.0
    %v2864 = vadd.f32 %v2862, %v2863
    %2865 = vadd.xlane.f32.xlu0 %v2864
    %v2866 = vpop.xlane.xlu0 %2865
    %v2867 = vadd.f32 %v2835, %v2836
    %v2868 = vadd.f32 %v2867, %v2837
    %v2869 = vadd.f32 %v2868, %v2838
    %v2870 = vadd.f32 %v2869, %v2839
    %v2871 = vadd.f32 %v2870, %v2840
    %v2872 = vsel %vm313, %v2841, 0.0
    %v2873 = vadd.f32 %v2871, %v2872
    %2874 = vadd.xlane.f32.xlu0 %v2873
    %v2875 = vpop.xlane.xlu0 %2874
    %v2876 = vadd.f32 %v2842, %v2843
    %v2877 = vadd.f32 %v2876, %v2844
    %v2878 = vadd.f32 %v2877, %v2845
    %v2879 = vadd.f32 %v2878, %v2846
    %v2880 = vadd.f32 %v2879, %v2847
    %v2881 = vsel %vm313, %v2848, 0.0
    %v2882 = vadd.f32 %v2880, %v2881
    %2883 = vadd.xlane.f32.xlu0 %v2882
    %v2884 = vpop.xlane.xlu0 %2883
    %v2885 = vmul.f32 %v2857, 0.0012755102
    %v2886 = vmul.f32 %v2866, 0.0012755102
    %v2887 = vmul.f32 %v2875, 0.0012755102
    %v2888 = vmul.f32 %v2884, 0.0012755102
    %v2889 = vld [vmem:[%s12 + $0x100] sm:$0xff]
    %v2890 = vld [vmem:[%s12 + $0x108] sm:$0xff]
    %v2891 = vld [vmem:[%s12 + $0x110] sm:$0xff]
    %v2892 = vld [vmem:[%s12 + $0x118] sm:$0xff]
    %v2893 = vld [vmem:[%s13 + $0x100] sm:$0xff]
    %v2894 = vld [vmem:[%s13 + $0x108] sm:$0xff]
    %v2895 = vld [vmem:[%s13 + $0x110] sm:$0xff]
    %v2896 = vld [vmem:[%s13 + $0x118] sm:$0xff]
    %v2897 = vadd.f32 %v2885, 1e-05
    %v2898 = vadd.f32 %v2886, 1e-05
    %v2899 = vadd.f32 %v2887, 1e-05
    %v2900 = vadd.f32 %v2888, 1e-05
    %v2901 = vrsqrt.pop %v2897
    %v2902 = vrsqrt.pop %v2898
    %v2903 = vrsqrt.pop %v2899
    %v2904 = vrsqrt.pop %v2900
    %v2905 = vmul.f32 %v2901, %v2889
    %v2906 = vmul.f32 %v2902, %v2890
    %v2907 = vmul.f32 %v2903, %v2891
    %v2908 = vmul.f32 %v2904, %v2892
    %v2909 = vmul.f32 %v2789, %v2905
    %v2910 = vmul.f32 %v2790, %v2906
    %v2911 = vmul.f32 %v2791, %v2907
    %v2912 = vmul.f32 %v2792, %v2908
    %v2913 = vsub.f32 %v2893, %v2909
    %v2914 = vsub.f32 %v2894, %v2910
    %v2915 = vsub.f32 %v2895, %v2911
    %v2916 = vsub.f32 %v2896, %v2912
    %2918 = vset.pattern.permute.xlu0 0
    %2919 = vperm.xlu0 %2918, %v2905
    %v2920 = vpop.permute.xlu0 %2919
    %2923 = vset.pattern.permute.xlu0 0
    %2924 = vperm.xlu0 %2923, %v2906
    %v2925 = vpop.permute.xlu0 %2924
    %2928 = vset.pattern.permute.xlu0 0
    %2929 = vperm.xlu0 %2928, %v2907
    %v2930 = vpop.permute.xlu0 %2929
    %2933 = vset.pattern.permute.xlu0 0
    %2934 = vperm.xlu0 %2933, %v2908
    %v2935 = vpop.permute.xlu0 %2934
    %v2937 = vmul.f32 %v2725, %v2920
    %v2938 = vmul.f32 %v2726, %v2920
    %v2939 = vmul.f32 %v2727, %v2920
    %v2940 = vmul.f32 %v2728, %v2920
    %v2941 = vmul.f32 %v2729, %v2920
    %v2942 = vmul.f32 %v2730, %v2920
    %v2943 = vmul.f32 %v2731, %v2920
    %v2944 = vmul.f32 %v2732, %v2925
    %v2945 = vmul.f32 %v2733, %v2925
    %v2946 = vmul.f32 %v2734, %v2925
    %v2947 = vmul.f32 %v2735, %v2925
    %v2948 = vmul.f32 %v2736, %v2925
    %v2949 = vmul.f32 %v2737, %v2925
    %v2950 = vmul.f32 %v2738, %v2925
    %v2951 = vmul.f32 %v2739, %v2930
    %v2952 = vmul.f32 %v2740, %v2930
    %v2953 = vmul.f32 %v2741, %v2930
    %v2954 = vmul.f32 %v2742, %v2930
    %v2955 = vmul.f32 %v2743, %v2930
    %v2956 = vmul.f32 %v2744, %v2930
    %v2957 = vmul.f32 %v2745, %v2930
    %v2958 = vmul.f32 %v2746, %v2935
    %v2959 = vmul.f32 %v2747, %v2935
    %v2960 = vmul.f32 %v2748, %v2935
    %v2961 = vmul.f32 %v2749, %v2935
    %v2962 = vmul.f32 %v2750, %v2935
    %v2963 = vmul.f32 %v2751, %v2935
    %v2964 = vmul.f32 %v2752, %v2935
    %2966 = vset.pattern.permute.xlu0 0
    %2967 = vperm.xlu0 %2966, %v2913
    %v2968 = vpop.permute.xlu0 %2967
    %2971 = vset.pattern.permute.xlu0 0
    %2972 = vperm.xlu0 %2971, %v2914
    %v2973 = vpop.permute.xlu0 %2972
    %2976 = vset.pattern.permute.xlu0 0
    %2977 = vperm.xlu0 %2976, %v2915
    %v2978 = vpop.permute.xlu0 %2977
    %2981 = vset.pattern.permute.xlu0 0
    %2982 = vperm.xlu0 %2981, %v2916
    %v2983 = vpop.permute.xlu0 %2982
    %v2985 = vadd.f32 %v2937, %v2968
    %v2986 = vadd.f32 %v2938, %v2968
    %v2987 = vadd.f32 %v2939, %v2968
    %v2988 = vadd.f32 %v2940, %v2968
    %v2989 = vadd.f32 %v2941, %v2968
    %v2990 = vadd.f32 %v2942, %v2968
    %v2991 = vadd.f32 %v2943, %v2968
    %v2992 = vadd.f32 %v2944, %v2973
    %v2993 = vadd.f32 %v2945, %v2973
    %v2994 = vadd.f32 %v2946, %v2973
    %v2995 = vadd.f32 %v2947, %v2973
    %v2996 = vadd.f32 %v2948, %v2973
    %v2997 = vadd.f32 %v2949, %v2973
    %v2998 = vadd.f32 %v2950, %v2973
    %v2999 = vadd.f32 %v2951, %v2978
    %v3000 = vadd.f32 %v2952, %v2978
    %v3001 = vadd.f32 %v2953, %v2978
    %v3002 = vadd.f32 %v2954, %v2978
    %v3003 = vadd.f32 %v2955, %v2978
    %v3004 = vadd.f32 %v2956, %v2978
    %v3005 = vadd.f32 %v2957, %v2978
    %v3006 = vadd.f32 %v2958, %v2983
    %v3007 = vadd.f32 %v2959, %v2983
    %v3008 = vadd.f32 %v2960, %v2983
    %v3009 = vadd.f32 %v2961, %v2983
    %v3010 = vadd.f32 %v2962, %v2983
    %v3011 = vadd.f32 %v2963, %v2983
    %v3012 = vadd.f32 %v2964, %v2983
    %3013 = vst [vmem:[%s14 + $0x700] sm:$0xff] %v2985
    %3014 = vst [vmem:[%s14 + $0x708] sm:$0xff] %v2986
    %3015 = vst [vmem:[%s14 + $0x710] sm:$0xff] %v2987
    %3016 = vst [vmem:[%s14 + $0x718] sm:$0xff] %v2988
    %3017 = vst [vmem:[%s14 + $0x720] sm:$0xff] %v2989
    %3018 = vst [vmem:[%s14 + $0x728] sm:$0xff] %v2990
    %3019 = vst.msk [vmem:[%s14 + $0x730] sm:$0xff] %vm313, %v2991
    %3020 = vst [vmem:[%s14 + $0x738] sm:$0xff] %v2992
    %3021 = vst [vmem:[%s14 + $0x740] sm:$0xff] %v2993
    %3022 = vst [vmem:[%s14 + $0x748] sm:$0xff] %v2994
    %3023 = vst [vmem:[%s14 + $0x750] sm:$0xff] %v2995
    %3024 = vst [vmem:[%s14 + $0x758] sm:$0xff] %v2996
    %3025 = vst [vmem:[%s14 + $0x760] sm:$0xff] %v2997
    %3026 = vst.msk [vmem:[%s14 + $0x768] sm:$0xff] %vm313, %v2998
    %3027 = vst [vmem:[%s14 + $0x770] sm:$0xff] %v2999
    %3028 = vst [vmem:[%s14 + $0x778] sm:$0xff] %v3000
    %3029 = vst [vmem:[%s14 + $0x780] sm:$0xff] %v3001
    %3030 = vst [vmem:[%s14 + $0x788] sm:$0xff] %v3002
    %3031 = vst [vmem:[%s14 + $0x790] sm:$0xff] %v3003
    %3032 = vst [vmem:[%s14 + $0x798] sm:$0xff] %v3004
    %3033 = vst.msk [vmem:[%s14 + $0x7a0] sm:$0xff] %vm313, %v3005
    %3034 = vst [vmem:[%s14 + $0x7a8] sm:$0xff] %v3006
    %3035 = vst [vmem:[%s14 + $0x7b0] sm:$0xff] %v3007
    %3036 = vst [vmem:[%s14 + $0x7b8] sm:$0xff] %v3008
    %3037 = vst [vmem:[%s14 + $0x7c0] sm:$0xff] %v3009
    %3038 = vst [vmem:[%s14 + $0x7c8] sm:$0xff] %v3010
    %3039 = vst [vmem:[%s14 + $0x7d0] sm:$0xff] %v3011
    %3040 = vst.msk [vmem:[%s14 + $0x7d8] sm:$0xff] %vm313, %v3012
    %v3041 = vld [vmem:[#allocation10] sm:$0xff]
    %v3042 = vld [vmem:[#allocation10 + $0x8] sm:$0xff]
    %v3043 = vld [vmem:[#allocation10 + $0x10] sm:$0xff]
    %v3044 = vld [vmem:[#allocation10 + $0x18] sm:$0xff]
    %v3045 = vld [vmem:[#allocation10 + $0x20] sm:$0xff]
    %v3046 = vld [vmem:[#allocation10 + $0x28] sm:$0xff]
    %v3047 = vld [vmem:[#allocation10 + $0x30] sm:$0xff]
    %v3048 = vld [vmem:[#allocation10 + $0x38] sm:$0xff]
    %v3049 = vld [vmem:[#allocation10 + $0x40] sm:$0xff]
    %v3050 = vld [vmem:[#allocation10 + $0x48] sm:$0xff]
    %v3051 = vld [vmem:[#allocation10 + $0x50] sm:$0xff]
    %v3052 = vld [vmem:[#allocation10 + $0x58] sm:$0xff]
    %v3053 = vld [vmem:[#allocation10 + $0x60] sm:$0xff]
    %v3054 = vld [vmem:[#allocation10 + $0x68] sm:$0xff]
    %v3055 = vld [vmem:[#allocation10 + $0x70] sm:$0xff]
    %v3056 = vld [vmem:[#allocation10 + $0x78] sm:$0xff]
    %v3057 = vld [vmem:[#allocation10 + $0x80] sm:$0xff]
    %v3058 = vld [vmem:[#allocation10 + $0x88] sm:$0xff]
    %v3059 = vld [vmem:[#allocation10 + $0x90] sm:$0xff]
    %v3060 = vld [vmem:[#allocation10 + $0x98] sm:$0xff]
    %v3061 = vld [vmem:[#allocation10 + $0xa0] sm:$0xff]
    %v3062 = vld [vmem:[#allocation10 + $0xa8] sm:$0xff]
    %v3063 = vld [vmem:[#allocation10 + $0xb0] sm:$0xff]
    %v3064 = vld [vmem:[#allocation10 + $0xb8] sm:$0xff]
    %v3065 = vld [vmem:[#allocation10 + $0xc0] sm:$0xff]
    %v3066 = vld [vmem:[#allocation10 + $0xc8] sm:$0xff]
    %v3067 = vld [vmem:[#allocation10 + $0xd0] sm:$0xff]
    %v3068 = vld [vmem:[#allocation10 + $0xd8] sm:$0xff]
    %v3069 = vadd.f32 %v3041, %v3042
    %v3070 = vadd.f32 %v3069, %v3043
    %v3071 = vadd.f32 %v3070, %v3044
    %v3072 = vadd.f32 %v3071, %v3045
    %v3073 = vadd.f32 %v3072, %v3046
    %v3074 = vsel %vm313, %v3047, 0.0
    %v3075 = vadd.f32 %v3073, %v3074
    %3076 = vadd.xlane.f32.xlu0 %v3075
    %v3077 = vpop.xlane.xlu0 %3076
    %v3078 = vadd.f32 %v3048, %v3049
    %v3079 = vadd.f32 %v3078, %v3050
    %v3080 = vadd.f32 %v3079, %v3051
    %v3081 = vadd.f32 %v3080, %v3052
    %v3082 = vadd.f32 %v3081, %v3053
    %v3083 = vsel %vm313, %v3054, 0.0
    %v3084 = vadd.f32 %v3082, %v3083
    %3085 = vadd.xlane.f32.xlu0 %v3084
    %v3086 = vpop.xlane.xlu0 %3085
    %v3087 = vadd.f32 %v3055, %v3056
    %v3088 = vadd.f32 %v3087, %v3057
    %v3089 = vadd.f32 %v3088, %v3058
    %v3090 = vadd.f32 %v3089, %v3059
    %v3091 = vadd.f32 %v3090, %v3060
    %v3092 = vsel %vm313, %v3061, 0.0
    %v3093 = vadd.f32 %v3091, %v3092
    %3094 = vadd.xlane.f32.xlu0 %v3093
    %v3095 = vpop.xlane.xlu0 %3094
    %v3096 = vadd.f32 %v3062, %v3063
    %v3097 = vadd.f32 %v3096, %v3064
    %v3098 = vadd.f32 %v3097, %v3065
    %v3099 = vadd.f32 %v3098, %v3066
    %v3100 = vadd.f32 %v3099, %v3067
    %v3101 = vsel %vm313, %v3068, 0.0
    %v3102 = vadd.f32 %v3100, %v3101
    %3103 = vadd.xlane.f32.xlu0 %v3102
    %v3104 = vpop.xlane.xlu0 %3103
    %v3105 = vmul.f32 %v3077, 0.0012755102
    %v3106 = vmul.f32 %v3086, 0.0012755102
    %v3107 = vmul.f32 %v3095, 0.0012755102
    %v3108 = vmul.f32 %v3104, 0.0012755102
    %v3109 = vsub.f32 %v3041, %v3105
    %v3110 = vsub.f32 %v3042, %v3105
    %v3111 = vsub.f32 %v3043, %v3105
    %v3112 = vsub.f32 %v3044, %v3105
    %v3113 = vsub.f32 %v3045, %v3105
    %v3114 = vsub.f32 %v3046, %v3105
    %v3115 = vsub.f32 %v3047, %v3105
    %v3116 = vsub.f32 %v3048, %v3106
    %v3117 = vsub.f32 %v3049, %v3106
    %v3118 = vsub.f32 %v3050, %v3106
    %v3119 = vsub.f32 %v3051, %v3106
    %v3120 = vsub.f32 %v3052, %v3106
    %v3121 = vsub.f32 %v3053, %v3106
    %v3122 = vsub.f32 %v3054, %v3106
    %v3123 = vsub.f32 %v3055, %v3107
    %v3124 = vsub.f32 %v3056, %v3107
    %v3125 = vsub.f32 %v3057, %v3107
    %v3126 = vsub.f32 %v3058, %v3107
    %v3127 = vsub.f32 %v3059, %v3107
    %v3128 = vsub.f32 %v3060, %v3107
    %v3129 = vsub.f32 %v3061, %v3107
    %v3130 = vsub.f32 %v3062, %v3108
    %v3131 = vsub.f32 %v3063, %v3108
    %v3132 = vsub.f32 %v3064, %v3108
    %v3133 = vsub.f32 %v3065, %v3108
    %v3134 = vsub.f32 %v3066, %v3108
    %v3135 = vsub.f32 %v3067, %v3108
    %v3136 = vsub.f32 %v3068, %v3108
    %v3137 = vmul.f32 %v3109, %v3109
    %v3138 = vmul.f32 %v3110, %v3110
    %v3139 = vmul.f32 %v3111, %v3111
    %v3140 = vmul.f32 %v3112, %v3112
    %v3141 = vmul.f32 %v3113, %v3113
    %v3142 = vmul.f32 %v3114, %v3114
    %v3143 = vmul.f32 %v3115, %v3115
    %v3144 = vmul.f32 %v3116, %v3116
    %v3145 = vmul.f32 %v3117, %v3117
    %v3146 = vmul.f32 %v3118, %v3118
    %v3147 = vmul.f32 %v3119, %v3119
    %v3148 = vmul.f32 %v3120, %v3120
    %v3149 = vmul.f32 %v3121, %v3121
    %v3150 = vmul.f32 %v3122, %v3122
    %v3151 = vmul.f32 %v3123, %v3123
    %v3152 = vmul.f32 %v3124, %v3124
    %v3153 = vmul.f32 %v3125, %v3125
    %v3154 = vmul.f32 %v3126, %v3126
    %v3155 = vmul.f32 %v3127, %v3127
    %v3156 = vmul.f32 %v3128, %v3128
    %v3157 = vmul.f32 %v3129, %v3129
    %v3158 = vmul.f32 %v3130, %v3130
    %v3159 = vmul.f32 %v3131, %v3131
    %v3160 = vmul.f32 %v3132, %v3132
    %v3161 = vmul.f32 %v3133, %v3133
    %v3162 = vmul.f32 %v3134, %v3134
    %v3163 = vmul.f32 %v3135, %v3135
    %v3164 = vmul.f32 %v3136, %v3136
    %v3165 = vadd.f32 %v3137, %v3138
    %v3166 = vadd.f32 %v3165, %v3139
    %v3167 = vadd.f32 %v3166, %v3140
    %v3168 = vadd.f32 %v3167, %v3141
    %v3169 = vadd.f32 %v3168, %v3142
    %v3170 = vsel %vm313, %v3143, 0.0
    %v3171 = vadd.f32 %v3169, %v3170
    %3172 = vadd.xlane.f32.xlu0 %v3171
    %v3173 = vpop.xlane.xlu0 %3172
    %v3174 = vadd.f32 %v3144, %v3145
    %v3175 = vadd.f32 %v3174, %v3146
    %v3176 = vadd.f32 %v3175, %v3147
    %v3177 = vadd.f32 %v3176, %v3148
    %v3178 = vadd.f32 %v3177, %v3149
    %v3179 = vsel %vm313, %v3150, 0.0
    %v3180 = vadd.f32 %v3178, %v3179
    %3181 = vadd.xlane.f32.xlu0 %v3180
    %v3182 = vpop.xlane.xlu0 %3181
    %v3183 = vadd.f32 %v3151, %v3152
    %v3184 = vadd.f32 %v3183, %v3153
    %v3185 = vadd.f32 %v3184, %v3154
    %v3186 = vadd.f32 %v3185, %v3155
    %v3187 = vadd.f32 %v3186, %v3156
    %v3188 = vsel %vm313, %v3157, 0.0
    %v3189 = vadd.f32 %v3187, %v3188
    %3190 = vadd.xlane.f32.xlu0 %v3189
    %v3191 = vpop.xlane.xlu0 %3190
    %v3192 = vadd.f32 %v3158, %v3159
    %v3193 = vadd.f32 %v3192, %v3160
    %v3194 = vadd.f32 %v3193, %v3161
    %v3195 = vadd.f32 %v3194, %v3162
    %v3196 = vadd.f32 %v3195, %v3163
    %v3197 = vsel %vm313, %v3164, 0.0
    %v3198 = vadd.f32 %v3196, %v3197
    %3199 = vadd.xlane.f32.xlu0 %v3198
    %v3200 = vpop.xlane.xlu0 %3199
    %v3201 = vmul.f32 %v3173, 0.0012755102
    %v3202 = vmul.f32 %v3182, 0.0012755102
    %v3203 = vmul.f32 %v3191, 0.0012755102
    %v3204 = vmul.f32 %v3200, 0.0012755102
    %v3205 = vld [vmem:[%s12 + $0x120] sm:$0xff]
    %v3206 = vld [vmem:[%s12 + $0x128] sm:$0xff]
    %v3207 = vld [vmem:[%s12 + $0x130] sm:$0xff]
    %v3208 = vld [vmem:[%s12 + $0x138] sm:$0xff]
    %v3209 = vld [vmem:[%s13 + $0x120] sm:$0xff]
    %v3210 = vld [vmem:[%s13 + $0x128] sm:$0xff]
    %v3211 = vld [vmem:[%s13 + $0x130] sm:$0xff]
    %v3212 = vld [vmem:[%s13 + $0x138] sm:$0xff]
    %v3213 = vadd.f32 %v3201, 1e-05
    %v3214 = vadd.f32 %v3202, 1e-05
    %v3215 = vadd.f32 %v3203, 1e-05
    %v3216 = vadd.f32 %v3204, 1e-05
    %v3217 = vrsqrt.pop %v3213
    %v3218 = vrsqrt.pop %v3214
    %v3219 = vrsqrt.pop %v3215
    %v3220 = vrsqrt.pop %v3216
    %v3221 = vmul.f32 %v3217, %v3205
    %v3222 = vmul.f32 %v3218, %v3206
    %v3223 = vmul.f32 %v3219, %v3207
    %v3224 = vmul.f32 %v3220, %v3208
    %v3225 = vmul.f32 %v3105, %v3221
    %v3226 = vmul.f32 %v3106, %v3222
    %v3227 = vmul.f32 %v3107, %v3223
    %v3228 = vmul.f32 %v3108, %v3224
    %v3229 = vsub.f32 %v3209, %v3225
    %v3230 = vsub.f32 %v3210, %v3226
    %v3231 = vsub.f32 %v3211, %v3227
    %v3232 = vsub.f32 %v3212, %v3228
    %3234 = vset.pattern.permute.xlu0 0
    %3235 = vperm.xlu0 %3234, %v3221
    %v3236 = vpop.permute.xlu0 %3235
    %3239 = vset.pattern.permute.xlu0 0
    %3240 = vperm.xlu0 %3239, %v3222
    %v3241 = vpop.permute.xlu0 %3240
    %3244 = vset.pattern.permute.xlu0 0
    %3245 = vperm.xlu0 %3244, %v3223
    %v3246 = vpop.permute.xlu0 %3245
    %3249 = vset.pattern.permute.xlu0 0
    %3250 = vperm.xlu0 %3249, %v3224
    %v3251 = vpop.permute.xlu0 %3250
    %v3253 = vmul.f32 %v3041, %v3236
    %v3254 = vmul.f32 %v3042, %v3236
    %v3255 = vmul.f32 %v3043, %v3236
    %v3256 = vmul.f32 %v3044, %v3236
    %v3257 = vmul.f32 %v3045, %v3236
    %v3258 = vmul.f32 %v3046, %v3236
    %v3259 = vmul.f32 %v3047, %v3236
    %v3260 = vmul.f32 %v3048, %v3241
    %v3261 = vmul.f32 %v3049, %v3241
    %v3262 = vmul.f32 %v3050, %v3241
    %v3263 = vmul.f32 %v3051, %v3241
    %v3264 = vmul.f32 %v3052, %v3241
    %v3265 = vmul.f32 %v3053, %v3241
    %v3266 = vmul.f32 %v3054, %v3241
    %v3267 = vmul.f32 %v3055, %v3246
    %v3268 = vmul.f32 %v3056, %v3246
    %v3269 = vmul.f32 %v3057, %v3246
    %v3270 = vmul.f32 %v3058, %v3246
    %v3271 = vmul.f32 %v3059, %v3246
    %v3272 = vmul.f32 %v3060, %v3246
    %v3273 = vmul.f32 %v3061, %v3246
    %v3274 = vmul.f32 %v3062, %v3251
    %v3275 = vmul.f32 %v3063, %v3251
    %v3276 = vmul.f32 %v3064, %v3251
    %v3277 = vmul.f32 %v3065, %v3251
    %v3278 = vmul.f32 %v3066, %v3251
    %v3279 = vmul.f32 %v3067, %v3251
    %v3280 = vmul.f32 %v3068, %v3251
    %3282 = vset.pattern.permute.xlu0 0
    %3283 = vperm.xlu0 %3282, %v3229
    %v3284 = vpop.permute.xlu0 %3283
    %3287 = vset.pattern.permute.xlu0 0
    %3288 = vperm.xlu0 %3287, %v3230
    %v3289 = vpop.permute.xlu0 %3288
    %3292 = vset.pattern.permute.xlu0 0
    %3293 = vperm.xlu0 %3292, %v3231
    %v3294 = vpop.permute.xlu0 %3293
    %3297 = vset.pattern.permute.xlu0 0
    %3298 = vperm.xlu0 %3297, %v3232
    %v3299 = vpop.permute.xlu0 %3298
    %v3301 = vadd.f32 %v3253, %v3284
    %v3302 = vadd.f32 %v3254, %v3284
    %v3303 = vadd.f32 %v3255, %v3284
    %v3304 = vadd.f32 %v3256, %v3284
    %v3305 = vadd.f32 %v3257, %v3284
    %v3306 = vadd.f32 %v3258, %v3284
    %v3307 = vadd.f32 %v3259, %v3284
    %v3308 = vadd.f32 %v3260, %v3289
    %v3309 = vadd.f32 %v3261, %v3289
    %v3310 = vadd.f32 %v3262, %v3289
    %v3311 = vadd.f32 %v3263, %v3289
    %v3312 = vadd.f32 %v3264, %v3289
    %v3313 = vadd.f32 %v3265, %v3289
    %v3314 = vadd.f32 %v3266, %v3289
    %v3315 = vadd.f32 %v3267, %v3294
    %v3316 = vadd.f32 %v3268, %v3294
    %v3317 = vadd.f32 %v3269, %v3294
    %v3318 = vadd.f32 %v3270, %v3294
    %v3319 = vadd.f32 %v3271, %v3294
    %v3320 = vadd.f32 %v3272, %v3294
    %v3321 = vadd.f32 %v3273, %v3294
    %v3322 = vadd.f32 %v3274, %v3299
    %v3323 = vadd.f32 %v3275, %v3299
    %v3324 = vadd.f32 %v3276, %v3299
    %v3325 = vadd.f32 %v3277, %v3299
    %v3326 = vadd.f32 %v3278, %v3299
    %v3327 = vadd.f32 %v3279, %v3299
    %v3328 = vadd.f32 %v3280, %v3299
    %3329 = vst [vmem:[%s14 + $0x7e0] sm:$0xff] %v3301
    %3330 = vst [vmem:[%s14 + $0x7e8] sm:$0xff] %v3302
    %3331 = vst [vmem:[%s14 + $0x7f0] sm:$0xff] %v3303
    %3332 = vst [vmem:[%s14 + $0x7f8] sm:$0xff] %v3304
    %3333 = vst [vmem:[%s14 + $0x800] sm:$0xff] %v3305
    %3334 = vst [vmem:[%s14 + $0x808] sm:$0xff] %v3306
    %3335 = vst.msk [vmem:[%s14 + $0x810] sm:$0xff] %vm313, %v3307
    %3336 = vst [vmem:[%s14 + $0x818] sm:$0xff] %v3308
    %3337 = vst [vmem:[%s14 + $0x820] sm:$0xff] %v3309
    %3338 = vst [vmem:[%s14 + $0x828] sm:$0xff] %v3310
    %3339 = vst [vmem:[%s14 + $0x830] sm:$0xff] %v3311
    %3340 = vst [vmem:[%s14 + $0x838] sm:$0xff] %v3312
    %3341 = vst [vmem:[%s14 + $0x840] sm:$0xff] %v3313
    %3342 = vst.msk [vmem:[%s14 + $0x848] sm:$0xff] %vm313, %v3314
    %3343 = vst [vmem:[%s14 + $0x850] sm:$0xff] %v3315
    %3344 = vst [vmem:[%s14 + $0x858] sm:$0xff] %v3316
    %3345 = vst [vmem:[%s14 + $0x860] sm:$0xff] %v3317
    %3346 = vst [vmem:[%s14 + $0x868] sm:$0xff] %v3318
    %3347 = vst [vmem:[%s14 + $0x870] sm:$0xff] %v3319
    %3348 = vst [vmem:[%s14 + $0x878] sm:$0xff] %v3320
    %3349 = vst.msk [vmem:[%s14 + $0x880] sm:$0xff] %vm313, %v3321
    %3350 = vst [vmem:[%s14 + $0x888] sm:$0xff] %v3322
    %3351 = vst [vmem:[%s14 + $0x890] sm:$0xff] %v3323
    %3352 = vst [vmem:[%s14 + $0x898] sm:$0xff] %v3324
    %3353 = vst [vmem:[%s14 + $0x8a0] sm:$0xff] %v3325
    %3354 = vst [vmem:[%s14 + $0x8a8] sm:$0xff] %v3326
    %3355 = vst [vmem:[%s14 + $0x8b0] sm:$0xff] %v3327
    %3356 = vst.msk [vmem:[%s14 + $0x8b8] sm:$0xff] %vm313, %v3328
    %v3357 = vld [vmem:[#allocation12] sm:$0xff]
    %v3358 = vld [vmem:[#allocation12 + $0x8] sm:$0xff]
    %v3359 = vld [vmem:[#allocation12 + $0x10] sm:$0xff]
    %v3360 = vld [vmem:[#allocation12 + $0x18] sm:$0xff]
    %v3361 = vld [vmem:[#allocation12 + $0x20] sm:$0xff]
    %v3362 = vld [vmem:[#allocation12 + $0x28] sm:$0xff]
    %v3363 = vld [vmem:[#allocation12 + $0x30] sm:$0xff]
    %v3364 = vld [vmem:[#allocation12 + $0x38] sm:$0xff]
    %v3365 = vld [vmem:[#allocation12 + $0x40] sm:$0xff]
    %v3366 = vld [vmem:[#allocation12 + $0x48] sm:$0xff]
    %v3367 = vld [vmem:[#allocation12 + $0x50] sm:$0xff]
    %v3368 = vld [vmem:[#allocation12 + $0x58] sm:$0xff]
    %v3369 = vld [vmem:[#allocation12 + $0x60] sm:$0xff]
    %v3370 = vld [vmem:[#allocation12 + $0x68] sm:$0xff]
    %v3371 = vld [vmem:[#allocation12 + $0x70] sm:$0xff]
    %v3372 = vld [vmem:[#allocation12 + $0x78] sm:$0xff]
    %v3373 = vld [vmem:[#allocation12 + $0x80] sm:$0xff]
    %v3374 = vld [vmem:[#allocation12 + $0x88] sm:$0xff]
    %v3375 = vld [vmem:[#allocation12 + $0x90] sm:$0xff]
    %v3376 = vld [vmem:[#allocation12 + $0x98] sm:$0xff]
    %v3377 = vld [vmem:[#allocation12 + $0xa0] sm:$0xff]
    %v3378 = vld [vmem:[#allocation12 + $0xa8] sm:$0xff]
    %v3379 = vld [vmem:[#allocation12 + $0xb0] sm:$0xff]
    %v3380 = vld [vmem:[#allocation12 + $0xb8] sm:$0xff]
    %v3381 = vld [vmem:[#allocation12 + $0xc0] sm:$0xff]
    %v3382 = vld [vmem:[#allocation12 + $0xc8] sm:$0xff]
    %v3383 = vld [vmem:[#allocation12 + $0xd0] sm:$0xff]
    %v3384 = vld [vmem:[#allocation12 + $0xd8] sm:$0xff]
    %v3385 = vadd.f32 %v3357, %v3358
    %v3386 = vadd.f32 %v3385, %v3359
    %v3387 = vadd.f32 %v3386, %v3360
    %v3388 = vadd.f32 %v3387, %v3361
    %v3389 = vadd.f32 %v3388, %v3362
    %v3390 = vsel %vm313, %v3363, 0.0
    %v3391 = vadd.f32 %v3389, %v3390
    %3392 = vadd.xlane.f32.xlu0 %v3391
    %v3393 = vpop.xlane.xlu0 %3392
    %v3394 = vadd.f32 %v3364, %v3365
    %v3395 = vadd.f32 %v3394, %v3366
    %v3396 = vadd.f32 %v3395, %v3367
    %v3397 = vadd.f32 %v3396, %v3368
    %v3398 = vadd.f32 %v3397, %v3369
    %v3399 = vsel %vm313, %v3370, 0.0
    %v3400 = vadd.f32 %v3398, %v3399
    %3401 = vadd.xlane.f32.xlu0 %v3400
    %v3402 = vpop.xlane.xlu0 %3401
    %v3403 = vadd.f32 %v3371, %v3372
    %v3404 = vadd.f32 %v3403, %v3373
    %v3405 = vadd.f32 %v3404, %v3374
    %v3406 = vadd.f32 %v3405, %v3375
    %v3407 = vadd.f32 %v3406, %v3376
    %v3408 = vsel %vm313, %v3377, 0.0
    %v3409 = vadd.f32 %v3407, %v3408
    %3410 = vadd.xlane.f32.xlu0 %v3409
    %v3411 = vpop.xlane.xlu0 %3410
    %v3412 = vadd.f32 %v3378, %v3379
    %v3413 = vadd.f32 %v3412, %v3380
    %v3414 = vadd.f32 %v3413, %v3381
    %v3415 = vadd.f32 %v3414, %v3382
    %v3416 = vadd.f32 %v3415, %v3383
    %v3417 = vsel %vm313, %v3384, 0.0
    %v3418 = vadd.f32 %v3416, %v3417
    %3419 = vadd.xlane.f32.xlu0 %v3418
    %v3420 = vpop.xlane.xlu0 %3419
    %v3421 = vmul.f32 %v3393, 0.0012755102
    %v3422 = vmul.f32 %v3402, 0.0012755102
    %v3423 = vmul.f32 %v3411, 0.0012755102
    %v3424 = vmul.f32 %v3420, 0.0012755102
    %v3425 = vsub.f32 %v3357, %v3421
    %v3426 = vsub.f32 %v3358, %v3421
    %v3427 = vsub.f32 %v3359, %v3421
    %v3428 = vsub.f32 %v3360, %v3421
    %v3429 = vsub.f32 %v3361, %v3421
    %v3430 = vsub.f32 %v3362, %v3421
    %v3431 = vsub.f32 %v3363, %v3421
    %v3432 = vsub.f32 %v3364, %v3422
    %v3433 = vsub.f32 %v3365, %v3422
    %v3434 = vsub.f32 %v3366, %v3422
    %v3435 = vsub.f32 %v3367, %v3422
    %v3436 = vsub.f32 %v3368, %v3422
    %v3437 = vsub.f32 %v3369, %v3422
    %v3438 = vsub.f32 %v3370, %v3422
    %v3439 = vsub.f32 %v3371, %v3423
    %v3440 = vsub.f32 %v3372, %v3423
    %v3441 = vsub.f32 %v3373, %v3423
    %v3442 = vsub.f32 %v3374, %v3423
    %v3443 = vsub.f32 %v3375, %v3423
    %v3444 = vsub.f32 %v3376, %v3423
    %v3445 = vsub.f32 %v3377, %v3423
    %v3446 = vsub.f32 %v3378, %v3424
    %v3447 = vsub.f32 %v3379, %v3424
    %v3448 = vsub.f32 %v3380, %v3424
    %v3449 = vsub.f32 %v3381, %v3424
    %v3450 = vsub.f32 %v3382, %v3424
    %v3451 = vsub.f32 %v3383, %v3424
    %v3452 = vsub.f32 %v3384, %v3424
    %v3453 = vmul.f32 %v3425, %v3425
    %v3454 = vmul.f32 %v3426, %v3426
    %v3455 = vmul.f32 %v3427, %v3427
    %v3456 = vmul.f32 %v3428, %v3428
    %v3457 = vmul.f32 %v3429, %v3429
    %v3458 = vmul.f32 %v3430, %v3430
    %v3459 = vmul.f32 %v3431, %v3431
    %v3460 = vmul.f32 %v3432, %v3432
    %v3461 = vmul.f32 %v3433, %v3433
    %v3462 = vmul.f32 %v3434, %v3434
    %v3463 = vmul.f32 %v3435, %v3435
    %v3464 = vmul.f32 %v3436, %v3436
    %v3465 = vmul.f32 %v3437, %v3437
    %v3466 = vmul.f32 %v3438, %v3438
    %v3467 = vmul.f32 %v3439, %v3439
    %v3468 = vmul.f32 %v3440, %v3440
    %v3469 = vmul.f32 %v3441, %v3441
    %v3470 = vmul.f32 %v3442, %v3442
    %v3471 = vmul.f32 %v3443, %v3443
    %v3472 = vmul.f32 %v3444, %v3444
    %v3473 = vmul.f32 %v3445, %v3445
    %v3474 = vmul.f32 %v3446, %v3446
    %v3475 = vmul.f32 %v3447, %v3447
    %v3476 = vmul.f32 %v3448, %v3448
    %v3477 = vmul.f32 %v3449, %v3449
    %v3478 = vmul.f32 %v3450, %v3450
    %v3479 = vmul.f32 %v3451, %v3451
    %v3480 = vmul.f32 %v3452, %v3452
    %v3481 = vadd.f32 %v3453, %v3454
    %v3482 = vadd.f32 %v3481, %v3455
    %v3483 = vadd.f32 %v3482, %v3456
    %v3484 = vadd.f32 %v3483, %v3457
    %v3485 = vadd.f32 %v3484, %v3458
    %v3486 = vsel %vm313, %v3459, 0.0
    %v3487 = vadd.f32 %v3485, %v3486
    %3488 = vadd.xlane.f32.xlu0 %v3487
    %v3489 = vpop.xlane.xlu0 %3488
    %v3490 = vadd.f32 %v3460, %v3461
    %v3491 = vadd.f32 %v3490, %v3462
    %v3492 = vadd.f32 %v3491, %v3463
    %v3493 = vadd.f32 %v3492, %v3464
    %v3494 = vadd.f32 %v3493, %v3465
    %v3495 = vsel %vm313, %v3466, 0.0
    %v3496 = vadd.f32 %v3494, %v3495
    %3497 = vadd.xlane.f32.xlu0 %v3496
    %v3498 = vpop.xlane.xlu0 %3497
    %v3499 = vadd.f32 %v3467, %v3468
    %v3500 = vadd.f32 %v3499, %v3469
    %v3501 = vadd.f32 %v3500, %v3470
    %v3502 = vadd.f32 %v3501, %v3471
    %v3503 = vadd.f32 %v3502, %v3472
    %v3504 = vsel %vm313, %v3473, 0.0
    %v3505 = vadd.f32 %v3503, %v3504
    %3506 = vadd.xlane.f32.xlu0 %v3505
    %v3507 = vpop.xlane.xlu0 %3506
    %v3508 = vadd.f32 %v3474, %v3475
    %v3509 = vadd.f32 %v3508, %v3476
    %v3510 = vadd.f32 %v3509, %v3477
    %v3511 = vadd.f32 %v3510, %v3478
    %v3512 = vadd.f32 %v3511, %v3479
    %v3513 = vsel %vm313, %v3480, 0.0
    %v3514 = vadd.f32 %v3512, %v3513
    %3515 = vadd.xlane.f32.xlu0 %v3514
    %v3516 = vpop.xlane.xlu0 %3515
    %v3517 = vmul.f32 %v3489, 0.0012755102
    %v3518 = vmul.f32 %v3498, 0.0012755102
    %v3519 = vmul.f32 %v3507, 0.0012755102
    %v3520 = vmul.f32 %v3516, 0.0012755102
    %v3521 = vld [vmem:[%s12 + $0x140] sm:$0xff]
    %v3522 = vld [vmem:[%s12 + $0x148] sm:$0xff]
    %v3523 = vld [vmem:[%s12 + $0x150] sm:$0xff]
    %v3524 = vld [vmem:[%s12 + $0x158] sm:$0xff]
    %v3525 = vld [vmem:[%s13 + $0x140] sm:$0xff]
    %v3526 = vld [vmem:[%s13 + $0x148] sm:$0xff]
    %v3527 = vld [vmem:[%s13 + $0x150] sm:$0xff]
    %v3528 = vld [vmem:[%s13 + $0x158] sm:$0xff]
    %v3529 = vadd.f32 %v3517, 1e-05
    %v3530 = vadd.f32 %v3518, 1e-05
    %v3531 = vadd.f32 %v3519, 1e-05
    %v3532 = vadd.f32 %v3520, 1e-05
    %v3533 = vrsqrt.pop %v3529
    %v3534 = vrsqrt.pop %v3530
    %v3535 = vrsqrt.pop %v3531
    %v3536 = vrsqrt.pop %v3532
    %v3537 = vmul.f32 %v3533, %v3521
    %v3538 = vmul.f32 %v3534, %v3522
    %v3539 = vmul.f32 %v3535, %v3523
    %v3540 = vmul.f32 %v3536, %v3524
    %v3541 = vmul.f32 %v3421, %v3537
    %v3542 = vmul.f32 %v3422, %v3538
    %v3543 = vmul.f32 %v3423, %v3539
    %v3544 = vmul.f32 %v3424, %v3540
    %v3545 = vsub.f32 %v3525, %v3541
    %v3546 = vsub.f32 %v3526, %v3542
    %v3547 = vsub.f32 %v3527, %v3543
    %v3548 = vsub.f32 %v3528, %v3544
    %3550 = vset.pattern.permute.xlu0 0
    %3551 = vperm.xlu0 %3550, %v3537
    %v3552 = vpop.permute.xlu0 %3551
    %3555 = vset.pattern.permute.xlu0 0
    %3556 = vperm.xlu0 %3555, %v3538
    %v3557 = vpop.permute.xlu0 %3556
    %3560 = vset.pattern.permute.xlu0 0
    %3561 = vperm.xlu0 %3560, %v3539
    %v3562 = vpop.permute.xlu0 %3561
    %3565 = vset.pattern.permute.xlu0 0
    %3566 = vperm.xlu0 %3565, %v3540
    %v3567 = vpop.permute.xlu0 %3566
    %v3569 = vmul.f32 %v3357, %v3552
    %v3570 = vmul.f32 %v3358, %v3552
    %v3571 = vmul.f32 %v3359, %v3552
    %v3572 = vmul.f32 %v3360, %v3552
    %v3573 = vmul.f32 %v3361, %v3552
    %v3574 = vmul.f32 %v3362, %v3552
    %v3575 = vmul.f32 %v3363, %v3552
    %v3576 = vmul.f32 %v3364, %v3557
    %v3577 = vmul.f32 %v3365, %v3557
    %v3578 = vmul.f32 %v3366, %v3557
    %v3579 = vmul.f32 %v3367, %v3557
    %v3580 = vmul.f32 %v3368, %v3557
    %v3581 = vmul.f32 %v3369, %v3557
    %v3582 = vmul.f32 %v3370, %v3557
    %v3583 = vmul.f32 %v3371, %v3562
    %v3584 = vmul.f32 %v3372, %v3562
    %v3585 = vmul.f32 %v3373, %v3562
    %v3586 = vmul.f32 %v3374, %v3562
    %v3587 = vmul.f32 %v3375, %v3562
    %v3588 = vmul.f32 %v3376, %v3562
    %v3589 = vmul.f32 %v3377, %v3562
    %v3590 = vmul.f32 %v3378, %v3567
    %v3591 = vmul.f32 %v3379, %v3567
    %v3592 = vmul.f32 %v3380, %v3567
    %v3593 = vmul.f32 %v3381, %v3567
    %v3594 = vmul.f32 %v3382, %v3567
    %v3595 = vmul.f32 %v3383, %v3567
    %v3596 = vmul.f32 %v3384, %v3567
    %3598 = vset.pattern.permute.xlu0 0
    %3599 = vperm.xlu0 %3598, %v3545
    %v3600 = vpop.permute.xlu0 %3599
    %3603 = vset.pattern.permute.xlu0 0
    %3604 = vperm.xlu0 %3603, %v3546
    %v3605 = vpop.permute.xlu0 %3604
    %3608 = vset.pattern.permute.xlu0 0
    %3609 = vperm.xlu0 %3608, %v3547
    %v3610 = vpop.permute.xlu0 %3609
    %3613 = vset.pattern.permute.xlu0 0
    %3614 = vperm.xlu0 %3613, %v3548
    %v3615 = vpop.permute.xlu0 %3614
    %v3617 = vadd.f32 %v3569, %v3600
    %v3618 = vadd.f32 %v3570, %v3600
    %v3619 = vadd.f32 %v3571, %v3600
    %v3620 = vadd.f32 %v3572, %v3600
    %v3621 = vadd.f32 %v3573, %v3600
    %v3622 = vadd.f32 %v3574, %v3600
    %v3623 = vadd.f32 %v3575, %v3600
    %v3624 = vadd.f32 %v3576, %v3605
    %v3625 = vadd.f32 %v3577, %v3605
    %v3626 = vadd.f32 %v3578, %v3605
    %v3627 = vadd.f32 %v3579, %v3605
    %v3628 = vadd.f32 %v3580, %v3605
    %v3629 = vadd.f32 %v3581, %v3605
    %v3630 = vadd.f32 %v3582, %v3605
    %v3631 = vadd.f32 %v3583, %v3610
    %v3632 = vadd.f32 %v3584, %v3610
    %v3633 = vadd.f32 %v3585, %v3610
    %v3634 = vadd.f32 %v3586, %v3610
    %v3635 = vadd.f32 %v3587, %v3610
    %v3636 = vadd.f32 %v3588, %v3610
    %v3637 = vadd.f32 %v3589, %v3610
    %v3638 = vadd.f32 %v3590, %v3615
    %v3639 = vadd.f32 %v3591, %v3615
    %v3640 = vadd.f32 %v3592, %v3615
    %v3641 = vadd.f32 %v3593, %v3615
    %v3642 = vadd.f32 %v3594, %v3615
    %v3643 = vadd.f32 %v3595, %v3615
    %v3644 = vadd.f32 %v3596, %v3615
    %3645 = vst [vmem:[%s14 + $0x8c0] sm:$0xff] %v3617
    %3646 = vst [vmem:[%s14 + $0x8c8] sm:$0xff] %v3618
    %3647 = vst [vmem:[%s14 + $0x8d0] sm:$0xff] %v3619
    %3648 = vst [vmem:[%s14 + $0x8d8] sm:$0xff] %v3620
    %3649 = vst [vmem:[%s14 + $0x8e0] sm:$0xff] %v3621
    %3650 = vst [vmem:[%s14 + $0x8e8] sm:$0xff] %v3622
    %3651 = vst.msk [vmem:[%s14 + $0x8f0] sm:$0xff] %vm313, %v3623
    %3652 = vst [vmem:[%s14 + $0x8f8] sm:$0xff] %v3624
    %3653 = vst [vmem:[%s14 + $0x900] sm:$0xff] %v3625
    %3654 = vst [vmem:[%s14 + $0x908] sm:$0xff] %v3626
    %3655 = vst [vmem:[%s14 + $0x910] sm:$0xff] %v3627
    %3656 = vst [vmem:[%s14 + $0x918] sm:$0xff] %v3628
    %3657 = vst [vmem:[%s14 + $0x920] sm:$0xff] %v3629
    %3658 = vst.msk [vmem:[%s14 + $0x928] sm:$0xff] %vm313, %v3630
    %3659 = vst [vmem:[%s14 + $0x930] sm:$0xff] %v3631
    %3660 = vst [vmem:[%s14 + $0x938] sm:$0xff] %v3632
    %3661 = vst [vmem:[%s14 + $0x940] sm:$0xff] %v3633
    %3662 = vst [vmem:[%s14 + $0x948] sm:$0xff] %v3634
    %3663 = vst [vmem:[%s14 + $0x950] sm:$0xff] %v3635
    %3664 = vst [vmem:[%s14 + $0x958] sm:$0xff] %v3636
    %3665 = vst.msk [vmem:[%s14 + $0x960] sm:$0xff] %vm313, %v3637
    %3666 = vst [vmem:[%s14 + $0x968] sm:$0xff] %v3638
    %3667 = vst [vmem:[%s14 + $0x970] sm:$0xff] %v3639
    %3668 = vst [vmem:[%s14 + $0x978] sm:$0xff] %v3640
    %3669 = vst [vmem:[%s14 + $0x980] sm:$0xff] %v3641
    %3670 = vst [vmem:[%s14 + $0x988] sm:$0xff] %v3642
    %3671 = vst [vmem:[%s14 + $0x990] sm:$0xff] %v3643
    %3672 = vst.msk [vmem:[%s14 + $0x998] sm:$0xff] %vm313, %v3644
    %v3673 = vld [vmem:[#allocation13] sm:$0xff]
    %v3674 = vld [vmem:[#allocation13 + $0x8] sm:$0xff]
    %v3675 = vld [vmem:[#allocation13 + $0x10] sm:$0xff]
    %v3676 = vld [vmem:[#allocation13 + $0x18] sm:$0xff]
    %v3677 = vld [vmem:[#allocation13 + $0x20] sm:$0xff]
    %v3678 = vld [vmem:[#allocation13 + $0x28] sm:$0xff]
    %v3679 = vld [vmem:[#allocation13 + $0x30] sm:$0xff]
    %v3680 = vld [vmem:[#allocation13 + $0x38] sm:$0xff]
    %v3681 = vld [vmem:[#allocation13 + $0x40] sm:$0xff]
    %v3682 = vld [vmem:[#allocation13 + $0x48] sm:$0xff]
    %v3683 = vld [vmem:[#allocation13 + $0x50] sm:$0xff]
    %v3684 = vld [vmem:[#allocation13 + $0x58] sm:$0xff]
    %v3685 = vld [vmem:[#allocation13 + $0x60] sm:$0xff]
    %v3686 = vld [vmem:[#allocation13 + $0x68] sm:$0xff]
    %v3687 = vld [vmem:[#allocation13 + $0x70] sm:$0xff]
    %v3688 = vld [vmem:[#allocation13 + $0x78] sm:$0xff]
    %v3689 = vld [vmem:[#allocation13 + $0x80] sm:$0xff]
    %v3690 = vld [vmem:[#allocation13 + $0x88] sm:$0xff]
    %v3691 = vld [vmem:[#allocation13 + $0x90] sm:$0xff]
    %v3692 = vld [vmem:[#allocation13 + $0x98] sm:$0xff]
    %v3693 = vld [vmem:[#allocation13 + $0xa0] sm:$0xff]
    %v3694 = vld [vmem:[#allocation13 + $0xa8] sm:$0xff]
    %v3695 = vld [vmem:[#allocation13 + $0xb0] sm:$0xff]
    %v3696 = vld [vmem:[#allocation13 + $0xb8] sm:$0xff]
    %v3697 = vld [vmem:[#allocation13 + $0xc0] sm:$0xff]
    %v3698 = vld [vmem:[#allocation13 + $0xc8] sm:$0xff]
    %v3699 = vld [vmem:[#allocation13 + $0xd0] sm:$0xff]
    %v3700 = vld [vmem:[#allocation13 + $0xd8] sm:$0xff]
    %v3701 = vadd.f32 %v3673, %v3674
    %v3702 = vadd.f32 %v3701, %v3675
    %v3703 = vadd.f32 %v3702, %v3676
    %v3704 = vadd.f32 %v3703, %v3677
    %v3705 = vadd.f32 %v3704, %v3678
    %v3706 = vsel %vm313, %v3679, 0.0
    %v3707 = vadd.f32 %v3705, %v3706
    %3708 = vadd.xlane.f32.xlu0 %v3707
    %v3709 = vpop.xlane.xlu0 %3708
    %v3710 = vadd.f32 %v3680, %v3681
    %v3711 = vadd.f32 %v3710, %v3682
    %v3712 = vadd.f32 %v3711, %v3683
    %v3713 = vadd.f32 %v3712, %v3684
    %v3714 = vadd.f32 %v3713, %v3685
    %v3715 = vsel %vm313, %v3686, 0.0
    %v3716 = vadd.f32 %v3714, %v3715
    %3717 = vadd.xlane.f32.xlu0 %v3716
    %v3718 = vpop.xlane.xlu0 %3717
    %v3719 = vadd.f32 %v3687, %v3688
    %v3720 = vadd.f32 %v3719, %v3689
    %v3721 = vadd.f32 %v3720, %v3690
    %v3722 = vadd.f32 %v3721, %v3691
    %v3723 = vadd.f32 %v3722, %v3692
    %v3724 = vsel %vm313, %v3693, 0.0
    %v3725 = vadd.f32 %v3723, %v3724
    %3726 = vadd.xlane.f32.xlu0 %v3725
    %v3727 = vpop.xlane.xlu0 %3726
    %v3728 = vadd.f32 %v3694, %v3695
    %v3729 = vadd.f32 %v3728, %v3696
    %v3730 = vadd.f32 %v3729, %v3697
    %v3731 = vadd.f32 %v3730, %v3698
    %v3732 = vadd.f32 %v3731, %v3699
    %v3733 = vsel %vm313, %v3700, 0.0
    %v3734 = vadd.f32 %v3732, %v3733
    %3735 = vadd.xlane.f32.xlu0 %v3734
    %v3736 = vpop.xlane.xlu0 %3735
    %v3737 = vmul.f32 %v3709, 0.0012755102
    %v3738 = vmul.f32 %v3718, 0.0012755102
    %v3739 = vmul.f32 %v3727, 0.0012755102
    %v3740 = vmul.f32 %v3736, 0.0012755102
    %v3741 = vsub.f32 %v3673, %v3737
    %v3742 = vsub.f32 %v3674, %v3737
    %v3743 = vsub.f32 %v3675, %v3737
    %v3744 = vsub.f32 %v3676, %v3737
    %v3745 = vsub.f32 %v3677, %v3737
    %v3746 = vsub.f32 %v3678, %v3737
    %v3747 = vsub.f32 %v3679, %v3737
    %v3748 = vsub.f32 %v3680, %v3738
    %v3749 = vsub.f32 %v3681, %v3738
    %v3750 = vsub.f32 %v3682, %v3738
    %v3751 = vsub.f32 %v3683, %v3738
    %v3752 = vsub.f32 %v3684, %v3738
    %v3753 = vsub.f32 %v3685, %v3738
    %v3754 = vsub.f32 %v3686, %v3738
    %v3755 = vsub.f32 %v3687, %v3739
    %v3756 = vsub.f32 %v3688, %v3739
    %v3757 = vsub.f32 %v3689, %v3739
    %v3758 = vsub.f32 %v3690, %v3739
    %v3759 = vsub.f32 %v3691, %v3739
    %v3760 = vsub.f32 %v3692, %v3739
    %v3761 = vsub.f32 %v3693, %v3739
    %v3762 = vsub.f32 %v3694, %v3740
    %v3763 = vsub.f32 %v3695, %v3740
    %v3764 = vsub.f32 %v3696, %v3740
    %v3765 = vsub.f32 %v3697, %v3740
    %v3766 = vsub.f32 %v3698, %v3740
    %v3767 = vsub.f32 %v3699, %v3740
    %v3768 = vsub.f32 %v3700, %v3740
    %v3769 = vmul.f32 %v3741, %v3741
    %v3770 = vmul.f32 %v3742, %v3742
    %v3771 = vmul.f32 %v3743, %v3743
    %v3772 = vmul.f32 %v3744, %v3744
    %v3773 = vmul.f32 %v3745, %v3745
    %v3774 = vmul.f32 %v3746, %v3746
    %v3775 = vmul.f32 %v3747, %v3747
    %v3776 = vmul.f32 %v3748, %v3748
    %v3777 = vmul.f32 %v3749, %v3749
    %v3778 = vmul.f32 %v3750, %v3750
    %v3779 = vmul.f32 %v3751, %v3751
    %v3780 = vmul.f32 %v3752, %v3752
    %v3781 = vmul.f32 %v3753, %v3753
    %v3782 = vmul.f32 %v3754, %v3754
    %v3783 = vmul.f32 %v3755, %v3755
    %v3784 = vmul.f32 %v3756, %v3756
    %v3785 = vmul.f32 %v3757, %v3757
    %v3786 = vmul.f32 %v3758, %v3758
    %v3787 = vmul.f32 %v3759, %v3759
    %v3788 = vmul.f32 %v3760, %v3760
    %v3789 = vmul.f32 %v3761, %v3761
    %v3790 = vmul.f32 %v3762, %v3762
    %v3791 = vmul.f32 %v3763, %v3763
    %v3792 = vmul.f32 %v3764, %v3764
    %v3793 = vmul.f32 %v3765, %v3765
    %v3794 = vmul.f32 %v3766, %v3766
    %v3795 = vmul.f32 %v3767, %v3767
    %v3796 = vmul.f32 %v3768, %v3768
    %v3797 = vadd.f32 %v3769, %v3770
    %v3798 = vadd.f32 %v3797, %v3771
    %v3799 = vadd.f32 %v3798, %v3772
    %v3800 = vadd.f32 %v3799, %v3773
    %v3801 = vadd.f32 %v3800, %v3774
    %v3802 = vsel %vm313, %v3775, 0.0
    %v3803 = vadd.f32 %v3801, %v3802
    %3804 = vadd.xlane.f32.xlu0 %v3803
    %v3805 = vpop.xlane.xlu0 %3804
    %v3806 = vadd.f32 %v3776, %v3777
    %v3807 = vadd.f32 %v3806, %v3778
    %v3808 = vadd.f32 %v3807, %v3779
    %v3809 = vadd.f32 %v3808, %v3780
    %v3810 = vadd.f32 %v3809, %v3781
    %v3811 = vsel %vm313, %v3782, 0.0
    %v3812 = vadd.f32 %v3810, %v3811
    %3813 = vadd.xlane.f32.xlu0 %v3812
    %v3814 = vpop.xlane.xlu0 %3813
    %v3815 = vadd.f32 %v3783, %v3784
    %v3816 = vadd.f32 %v3815, %v3785
    %v3817 = vadd.f32 %v3816, %v3786
    %v3818 = vadd.f32 %v3817, %v3787
    %v3819 = vadd.f32 %v3818, %v3788
    %v3820 = vsel %vm313, %v3789, 0.0
    %v3821 = vadd.f32 %v3819, %v3820
    %3822 = vadd.xlane.f32.xlu0 %v3821
    %v3823 = vpop.xlane.xlu0 %3822
    %v3824 = vadd.f32 %v3790, %v3791
    %v3825 = vadd.f32 %v3824, %v3792
    %v3826 = vadd.f32 %v3825, %v3793
    %v3827 = vadd.f32 %v3826, %v3794
    %v3828 = vadd.f32 %v3827, %v3795
    %v3829 = vsel %vm313, %v3796, 0.0
    %v3830 = vadd.f32 %v3828, %v3829
    %3831 = vadd.xlane.f32.xlu0 %v3830
    %v3832 = vpop.xlane.xlu0 %3831
    %v3833 = vmul.f32 %v3805, 0.0012755102
    %v3834 = vmul.f32 %v3814, 0.0012755102
    %v3835 = vmul.f32 %v3823, 0.0012755102
    %v3836 = vmul.f32 %v3832, 0.0012755102
    %v3837 = vld [vmem:[%s12 + $0x160] sm:$0xff]
    %v3838 = vld [vmem:[%s12 + $0x168] sm:$0xff]
    %v3839 = vld [vmem:[%s12 + $0x170] sm:$0xff]
    %v3840 = vld [vmem:[%s12 + $0x178] sm:$0xff]
    %v3841 = vld [vmem:[%s13 + $0x160] sm:$0xff]
    %v3842 = vld [vmem:[%s13 + $0x168] sm:$0xff]
    %v3843 = vld [vmem:[%s13 + $0x170] sm:$0xff]
    %v3844 = vld [vmem:[%s13 + $0x178] sm:$0xff]
    %v3845 = vadd.f32 %v3833, 1e-05
    %v3846 = vadd.f32 %v3834, 1e-05
    %v3847 = vadd.f32 %v3835, 1e-05
    %v3848 = vadd.f32 %v3836, 1e-05
    %v3849 = vrsqrt.pop %v3845
    %v3850 = vrsqrt.pop %v3846
    %v3851 = vrsqrt.pop %v3847
    %v3852 = vrsqrt.pop %v3848
    %v3853 = vmul.f32 %v3849, %v3837
    %v3854 = vmul.f32 %v3850, %v3838
    %v3855 = vmul.f32 %v3851, %v3839
    %v3856 = vmul.f32 %v3852, %v3840
    %v3857 = vmul.f32 %v3737, %v3853
    %v3858 = vmul.f32 %v3738, %v3854
    %v3859 = vmul.f32 %v3739, %v3855
    %v3860 = vmul.f32 %v3740, %v3856
    %v3861 = vsub.f32 %v3841, %v3857
    %v3862 = vsub.f32 %v3842, %v3858
    %v3863 = vsub.f32 %v3843, %v3859
    %v3864 = vsub.f32 %v3844, %v3860
    %3866 = vset.pattern.permute.xlu0 0
    %3867 = vperm.xlu0 %3866, %v3853
    %v3868 = vpop.permute.xlu0 %3867
    %3871 = vset.pattern.permute.xlu0 0
    %3872 = vperm.xlu0 %3871, %v3854
    %v3873 = vpop.permute.xlu0 %3872
    %3876 = vset.pattern.permute.xlu0 0
    %3877 = vperm.xlu0 %3876, %v3855
    %v3878 = vpop.permute.xlu0 %3877
    %3881 = vset.pattern.permute.xlu0 0
    %3882 = vperm.xlu0 %3881, %v3856
    %v3883 = vpop.permute.xlu0 %3882
    %v3885 = vmul.f32 %v3673, %v3868
    %v3886 = vmul.f32 %v3674, %v3868
    %v3887 = vmul.f32 %v3675, %v3868
    %v3888 = vmul.f32 %v3676, %v3868
    %v3889 = vmul.f32 %v3677, %v3868
    %v3890 = vmul.f32 %v3678, %v3868
    %v3891 = vmul.f32 %v3679, %v3868
    %v3892 = vmul.f32 %v3680, %v3873
    %v3893 = vmul.f32 %v3681, %v3873
    %v3894 = vmul.f32 %v3682, %v3873
    %v3895 = vmul.f32 %v3683, %v3873
    %v3896 = vmul.f32 %v3684, %v3873
    %v3897 = vmul.f32 %v3685, %v3873
    %v3898 = vmul.f32 %v3686, %v3873
    %v3899 = vmul.f32 %v3687, %v3878
    %v3900 = vmul.f32 %v3688, %v3878
    %v3901 = vmul.f32 %v3689, %v3878
    %v3902 = vmul.f32 %v3690, %v3878
    %v3903 = vmul.f32 %v3691, %v3878
    %v3904 = vmul.f32 %v3692, %v3878
    %v3905 = vmul.f32 %v3693, %v3878
    %v3906 = vmul.f32 %v3694, %v3883
    %v3907 = vmul.f32 %v3695, %v3883
    %v3908 = vmul.f32 %v3696, %v3883
    %v3909 = vmul.f32 %v3697, %v3883
    %v3910 = vmul.f32 %v3698, %v3883
    %v3911 = vmul.f32 %v3699, %v3883
    %v3912 = vmul.f32 %v3700, %v3883
    %3914 = vset.pattern.permute.xlu0 0
    %3915 = vperm.xlu0 %3914, %v3861
    %v3916 = vpop.permute.xlu0 %3915
    %3919 = vset.pattern.permute.xlu0 0
    %3920 = vperm.xlu0 %3919, %v3862
    %v3921 = vpop.permute.xlu0 %3920
    %3924 = vset.pattern.permute.xlu0 0
    %3925 = vperm.xlu0 %3924, %v3863
    %v3926 = vpop.permute.xlu0 %3925
    %3929 = vset.pattern.permute.xlu0 0
    %3930 = vperm.xlu0 %3929, %v3864
    %v3931 = vpop.permute.xlu0 %3930
    %v3933 = vadd.f32 %v3885, %v3916
    %v3934 = vadd.f32 %v3886, %v3916
    %v3935 = vadd.f32 %v3887, %v3916
    %v3936 = vadd.f32 %v3888, %v3916
    %v3937 = vadd.f32 %v3889, %v3916
    %v3938 = vadd.f32 %v3890, %v3916
    %v3939 = vadd.f32 %v3891, %v3916
    %v3940 = vadd.f32 %v3892, %v3921
    %v3941 = vadd.f32 %v3893, %v3921
    %v3942 = vadd.f32 %v3894, %v3921
    %v3943 = vadd.f32 %v3895, %v3921
    %v3944 = vadd.f32 %v3896, %v3921
    %v3945 = vadd.f32 %v3897, %v3921
    %v3946 = vadd.f32 %v3898, %v3921
    %v3947 = vadd.f32 %v3899, %v3926
    %v3948 = vadd.f32 %v3900, %v3926
    %v3949 = vadd.f32 %v3901, %v3926
    %v3950 = vadd.f32 %v3902, %v3926
    %v3951 = vadd.f32 %v3903, %v3926
    %v3952 = vadd.f32 %v3904, %v3926
    %v3953 = vadd.f32 %v3905, %v3926
    %v3954 = vadd.f32 %v3906, %v3931
    %v3955 = vadd.f32 %v3907, %v3931
    %v3956 = vadd.f32 %v3908, %v3931
    %v3957 = vadd.f32 %v3909, %v3931
    %v3958 = vadd.f32 %v3910, %v3931
    %v3959 = vadd.f32 %v3911, %v3931
    %v3960 = vadd.f32 %v3912, %v3931
    %3961 = vst [vmem:[%s14 + $0x9a0] sm:$0xff] %v3933
    %3962 = vst [vmem:[%s14 + $0x9a8] sm:$0xff] %v3934
    %3963 = vst [vmem:[%s14 + $0x9b0] sm:$0xff] %v3935
    %3964 = vst [vmem:[%s14 + $0x9b8] sm:$0xff] %v3936
    %3965 = vst [vmem:[%s14 + $0x9c0] sm:$0xff] %v3937
    %3966 = vst [vmem:[%s14 + $0x9c8] sm:$0xff] %v3938
    %3967 = vst.msk [vmem:[%s14 + $0x9d0] sm:$0xff] %vm313, %v3939
    %3968 = vst [vmem:[%s14 + $0x9d8] sm:$0xff] %v3940
    %3969 = vst [vmem:[%s14 + $0x9e0] sm:$0xff] %v3941
    %3970 = vst [vmem:[%s14 + $0x9e8] sm:$0xff] %v3942
    %3971 = vst [vmem:[%s14 + $0x9f0] sm:$0xff] %v3943
    %3972 = vst [vmem:[%s14 + $0x9f8] sm:$0xff] %v3944
    %3973 = vst [vmem:[%s14 + $0xa00] sm:$0xff] %v3945
    %3974 = vst.msk [vmem:[%s14 + $0xa08] sm:$0xff] %vm313, %v3946
    %3975 = vst [vmem:[%s14 + $0xa10] sm:$0xff] %v3947
    %3976 = vst [vmem:[%s14 + $0xa18] sm:$0xff] %v3948
    %3977 = vst [vmem:[%s14 + $0xa20] sm:$0xff] %v3949
    %3978 = vst [vmem:[%s14 + $0xa28] sm:$0xff] %v3950
    %3979 = vst [vmem:[%s14 + $0xa30] sm:$0xff] %v3951
    %3980 = vst [vmem:[%s14 + $0xa38] sm:$0xff] %v3952
    %3981 = vst.msk [vmem:[%s14 + $0xa40] sm:$0xff] %vm313, %v3953
    %3982 = vst [vmem:[%s14 + $0xa48] sm:$0xff] %v3954
    %3983 = vst [vmem:[%s14 + $0xa50] sm:$0xff] %v3955
    %3984 = vst [vmem:[%s14 + $0xa58] sm:$0xff] %v3956
    %3985 = vst [vmem:[%s14 + $0xa60] sm:$0xff] %v3957
    %3986 = vst [vmem:[%s14 + $0xa68] sm:$0xff] %v3958
    %3987 = vst [vmem:[%s14 + $0xa70] sm:$0xff] %v3959
    %3988 = vst.msk [vmem:[%s14 + $0xa78] sm:$0xff] %vm313, %v3960
    %v3989 = vld [vmem:[#allocation15] sm:$0xff]
    %v3990 = vld [vmem:[#allocation15 + $0x8] sm:$0xff]
    %v3991 = vld [vmem:[#allocation15 + $0x10] sm:$0xff]
    %v3992 = vld [vmem:[#allocation15 + $0x18] sm:$0xff]
    %v3993 = vld [vmem:[#allocation15 + $0x20] sm:$0xff]
    %v3994 = vld [vmem:[#allocation15 + $0x28] sm:$0xff]
    %v3995 = vld [vmem:[#allocation15 + $0x30] sm:$0xff]
    %v3996 = vld [vmem:[#allocation15 + $0x38] sm:$0xff]
    %v3997 = vld [vmem:[#allocation15 + $0x40] sm:$0xff]
    %v3998 = vld [vmem:[#allocation15 + $0x48] sm:$0xff]
    %v3999 = vld [vmem:[#allocation15 + $0x50] sm:$0xff]
    %v4000 = vld [vmem:[#allocation15 + $0x58] sm:$0xff]
    %v4001 = vld [vmem:[#allocation15 + $0x60] sm:$0xff]
    %v4002 = vld [vmem:[#allocation15 + $0x68] sm:$0xff]
    %v4003 = vld [vmem:[#allocation15 + $0x70] sm:$0xff]
    %v4004 = vld [vmem:[#allocation15 + $0x78] sm:$0xff]
    %v4005 = vld [vmem:[#allocation15 + $0x80] sm:$0xff]
    %v4006 = vld [vmem:[#allocation15 + $0x88] sm:$0xff]
    %v4007 = vld [vmem:[#allocation15 + $0x90] sm:$0xff]
    %v4008 = vld [vmem:[#allocation15 + $0x98] sm:$0xff]
    %v4009 = vld [vmem:[#allocation15 + $0xa0] sm:$0xff]
    %v4010 = vld [vmem:[#allocation15 + $0xa8] sm:$0xff]
    %v4011 = vld [vmem:[#allocation15 + $0xb0] sm:$0xff]
    %v4012 = vld [vmem:[#allocation15 + $0xb8] sm:$0xff]
    %v4013 = vld [vmem:[#allocation15 + $0xc0] sm:$0xff]
    %v4014 = vld [vmem:[#allocation15 + $0xc8] sm:$0xff]
    %v4015 = vld [vmem:[#allocation15 + $0xd0] sm:$0xff]
    %v4016 = vld [vmem:[#allocation15 + $0xd8] sm:$0xff]
    %v4017 = vadd.f32 %v3989, %v3990
    %v4018 = vadd.f32 %v4017, %v3991
    %v4019 = vadd.f32 %v4018, %v3992
    %v4020 = vadd.f32 %v4019, %v3993
    %v4021 = vadd.f32 %v4020, %v3994
    %v4022 = vsel %vm313, %v3995, 0.0
    %v4023 = vadd.f32 %v4021, %v4022
    %4024 = vadd.xlane.f32.xlu0 %v4023
    %v4025 = vpop.xlane.xlu0 %4024
    %v4026 = vadd.f32 %v3996, %v3997
    %v4027 = vadd.f32 %v4026, %v3998
    %v4028 = vadd.f32 %v4027, %v3999
    %v4029 = vadd.f32 %v4028, %v4000
    %v4030 = vadd.f32 %v4029, %v4001
    %v4031 = vsel %vm313, %v4002, 0.0
    %v4032 = vadd.f32 %v4030, %v4031
    %4033 = vadd.xlane.f32.xlu0 %v4032
    %v4034 = vpop.xlane.xlu0 %4033
    %v4035 = vadd.f32 %v4003, %v4004
    %v4036 = vadd.f32 %v4035, %v4005
    %v4037 = vadd.f32 %v4036, %v4006
    %v4038 = vadd.f32 %v4037, %v4007
    %v4039 = vadd.f32 %v4038, %v4008
    %v4040 = vsel %vm313, %v4009, 0.0
    %v4041 = vadd.f32 %v4039, %v4040
    %4042 = vadd.xlane.f32.xlu0 %v4041
    %v4043 = vpop.xlane.xlu0 %4042
    %v4044 = vadd.f32 %v4010, %v4011
    %v4045 = vadd.f32 %v4044, %v4012
    %v4046 = vadd.f32 %v4045, %v4013
    %v4047 = vadd.f32 %v4046, %v4014
    %v4048 = vadd.f32 %v4047, %v4015
    %v4049 = vsel %vm313, %v4016, 0.0
    %v4050 = vadd.f32 %v4048, %v4049
    %4051 = vadd.xlane.f32.xlu0 %v4050
    %v4052 = vpop.xlane.xlu0 %4051
    %v4053 = vmul.f32 %v4025, 0.0012755102
    %v4054 = vmul.f32 %v4034, 0.0012755102
    %v4055 = vmul.f32 %v4043, 0.0012755102
    %v4056 = vmul.f32 %v4052, 0.0012755102
    %v4057 = vsub.f32 %v3989, %v4053
    %v4058 = vsub.f32 %v3990, %v4053
    %v4059 = vsub.f32 %v3991, %v4053
    %v4060 = vsub.f32 %v3992, %v4053
    %v4061 = vsub.f32 %v3993, %v4053
    %v4062 = vsub.f32 %v3994, %v4053
    %v4063 = vsub.f32 %v3995, %v4053
    %v4064 = vsub.f32 %v3996, %v4054
    %v4065 = vsub.f32 %v3997, %v4054
    %v4066 = vsub.f32 %v3998, %v4054
    %v4067 = vsub.f32 %v3999, %v4054
    %v4068 = vsub.f32 %v4000, %v4054
    %v4069 = vsub.f32 %v4001, %v4054
    %v4070 = vsub.f32 %v4002, %v4054
    %v4071 = vsub.f32 %v4003, %v4055
    %v4072 = vsub.f32 %v4004, %v4055
    %v4073 = vsub.f32 %v4005, %v4055
    %v4074 = vsub.f32 %v4006, %v4055
    %v4075 = vsub.f32 %v4007, %v4055
    %v4076 = vsub.f32 %v4008, %v4055
    %v4077 = vsub.f32 %v4009, %v4055
    %v4078 = vsub.f32 %v4010, %v4056
    %v4079 = vsub.f32 %v4011, %v4056
    %v4080 = vsub.f32 %v4012, %v4056
    %v4081 = vsub.f32 %v4013, %v4056
    %v4082 = vsub.f32 %v4014, %v4056
    %v4083 = vsub.f32 %v4015, %v4056
    %v4084 = vsub.f32 %v4016, %v4056
    %v4085 = vmul.f32 %v4057, %v4057
    %v4086 = vmul.f32 %v4058, %v4058
    %v4087 = vmul.f32 %v4059, %v4059
    %v4088 = vmul.f32 %v4060, %v4060
    %v4089 = vmul.f32 %v4061, %v4061
    %v4090 = vmul.f32 %v4062, %v4062
    %v4091 = vmul.f32 %v4063, %v4063
    %v4092 = vmul.f32 %v4064, %v4064
    %v4093 = vmul.f32 %v4065, %v4065
    %v4094 = vmul.f32 %v4066, %v4066
    %v4095 = vmul.f32 %v4067, %v4067
    %v4096 = vmul.f32 %v4068, %v4068
    %v4097 = vmul.f32 %v4069, %v4069
    %v4098 = vmul.f32 %v4070, %v4070
    %v4099 = vmul.f32 %v4071, %v4071
    %v4100 = vmul.f32 %v4072, %v4072
    %v4101 = vmul.f32 %v4073, %v4073
    %v4102 = vmul.f32 %v4074, %v4074
    %v4103 = vmul.f32 %v4075, %v4075
    %v4104 = vmul.f32 %v4076, %v4076
    %v4105 = vmul.f32 %v4077, %v4077
    %v4106 = vmul.f32 %v4078, %v4078
    %v4107 = vmul.f32 %v4079, %v4079
    %v4108 = vmul.f32 %v4080, %v4080
    %v4109 = vmul.f32 %v4081, %v4081
    %v4110 = vmul.f32 %v4082, %v4082
    %v4111 = vmul.f32 %v4083, %v4083
    %v4112 = vmul.f32 %v4084, %v4084
    %v4113 = vadd.f32 %v4085, %v4086
    %v4114 = vadd.f32 %v4113, %v4087
    %v4115 = vadd.f32 %v4114, %v4088
    %v4116 = vadd.f32 %v4115, %v4089
    %v4117 = vadd.f32 %v4116, %v4090
    %v4118 = vsel %vm313, %v4091, 0.0
    %v4119 = vadd.f32 %v4117, %v4118
    %4120 = vadd.xlane.f32.xlu0 %v4119
    %v4121 = vpop.xlane.xlu0 %4120
    %v4122 = vadd.f32 %v4092, %v4093
    %v4123 = vadd.f32 %v4122, %v4094
    %v4124 = vadd.f32 %v4123, %v4095
    %v4125 = vadd.f32 %v4124, %v4096
    %v4126 = vadd.f32 %v4125, %v4097
    %v4127 = vsel %vm313, %v4098, 0.0
    %v4128 = vadd.f32 %v4126, %v4127
    %4129 = vadd.xlane.f32.xlu0 %v4128
    %v4130 = vpop.xlane.xlu0 %4129
    %v4131 = vadd.f32 %v4099, %v4100
    %v4132 = vadd.f32 %v4131, %v4101
    %v4133 = vadd.f32 %v4132, %v4102
    %v4134 = vadd.f32 %v4133, %v4103
    %v4135 = vadd.f32 %v4134, %v4104
    %v4136 = vsel %vm313, %v4105, 0.0
    %v4137 = vadd.f32 %v4135, %v4136
    %4138 = vadd.xlane.f32.xlu0 %v4137
    %v4139 = vpop.xlane.xlu0 %4138
    %v4140 = vadd.f32 %v4106, %v4107
    %v4141 = vadd.f32 %v4140, %v4108
    %v4142 = vadd.f32 %v4141, %v4109
    %v4143 = vadd.f32 %v4142, %v4110
    %v4144 = vadd.f32 %v4143, %v4111
    %v4145 = vsel %vm313, %v4112, 0.0
    %v4146 = vadd.f32 %v4144, %v4145
    %4147 = vadd.xlane.f32.xlu0 %v4146
    %v4148 = vpop.xlane.xlu0 %4147
    %v4149 = vmul.f32 %v4121, 0.0012755102
    %v4150 = vmul.f32 %v4130, 0.0012755102
    %v4151 = vmul.f32 %v4139, 0.0012755102
    %v4152 = vmul.f32 %v4148, 0.0012755102
    %v4153 = vld [vmem:[%s12 + $0x180] sm:$0xff]
    %v4154 = vld [vmem:[%s12 + $0x188] sm:$0xff]
    %v4155 = vld [vmem:[%s12 + $0x190] sm:$0xff]
    %v4156 = vld [vmem:[%s12 + $0x198] sm:$0xff]
    %v4157 = vld [vmem:[%s13 + $0x180] sm:$0xff]
    %v4158 = vld [vmem:[%s13 + $0x188] sm:$0xff]
    %v4159 = vld [vmem:[%s13 + $0x190] sm:$0xff]
    %v4160 = vld [vmem:[%s13 + $0x198] sm:$0xff]
    %v4161 = vadd.f32 %v4149, 1e-05
    %v4162 = vadd.f32 %v4150, 1e-05
    %v4163 = vadd.f32 %v4151, 1e-05
    %v4164 = vadd.f32 %v4152, 1e-05
    %v4165 = vrsqrt.pop %v4161
    %v4166 = vrsqrt.pop %v4162
    %v4167 = vrsqrt.pop %v4163
    %v4168 = vrsqrt.pop %v4164
    %v4169 = vmul.f32 %v4165, %v4153
    %v4170 = vmul.f32 %v4166, %v4154
    %v4171 = vmul.f32 %v4167, %v4155
    %v4172 = vmul.f32 %v4168, %v4156
    %v4173 = vmul.f32 %v4053, %v4169
    %v4174 = vmul.f32 %v4054, %v4170
    %v4175 = vmul.f32 %v4055, %v4171
    %v4176 = vmul.f32 %v4056, %v4172
    %v4177 = vsub.f32 %v4157, %v4173
    %v4178 = vsub.f32 %v4158, %v4174
    %v4179 = vsub.f32 %v4159, %v4175
    %v4180 = vsub.f32 %v4160, %v4176
    %4182 = vset.pattern.permute.xlu0 0
    %4183 = vperm.xlu0 %4182, %v4169
    %v4184 = vpop.permute.xlu0 %4183
    %4187 = vset.pattern.permute.xlu0 0
    %4188 = vperm.xlu0 %4187, %v4170
    %v4189 = vpop.permute.xlu0 %4188
    %4192 = vset.pattern.permute.xlu0 0
    %4193 = vperm.xlu0 %4192, %v4171
    %v4194 = vpop.permute.xlu0 %4193
    %4197 = vset.pattern.permute.xlu0 0
    %4198 = vperm.xlu0 %4197, %v4172
    %v4199 = vpop.permute.xlu0 %4198
    %v4201 = vmul.f32 %v3989, %v4184
    %v4202 = vmul.f32 %v3990, %v4184
    %v4203 = vmul.f32 %v3991, %v4184
    %v4204 = vmul.f32 %v3992, %v4184
    %v4205 = vmul.f32 %v3993, %v4184
    %v4206 = vmul.f32 %v3994, %v4184
    %v4207 = vmul.f32 %v3995, %v4184
    %v4208 = vmul.f32 %v3996, %v4189
    %v4209 = vmul.f32 %v3997, %v4189
    %v4210 = vmul.f32 %v3998, %v4189
    %v4211 = vmul.f32 %v3999, %v4189
    %v4212 = vmul.f32 %v4000, %v4189
    %v4213 = vmul.f32 %v4001, %v4189
    %v4214 = vmul.f32 %v4002, %v4189
    %v4215 = vmul.f32 %v4003, %v4194
    %v4216 = vmul.f32 %v4004, %v4194
    %v4217 = vmul.f32 %v4005, %v4194
    %v4218 = vmul.f32 %v4006, %v4194
    %v4219 = vmul.f32 %v4007, %v4194
    %v4220 = vmul.f32 %v4008, %v4194
    %v4221 = vmul.f32 %v4009, %v4194
    %v4222 = vmul.f32 %v4010, %v4199
    %v4223 = vmul.f32 %v4011, %v4199
    %v4224 = vmul.f32 %v4012, %v4199
    %v4225 = vmul.f32 %v4013, %v4199
    %v4226 = vmul.f32 %v4014, %v4199
    %v4227 = vmul.f32 %v4015, %v4199
    %v4228 = vmul.f32 %v4016, %v4199
    %4230 = vset.pattern.permute.xlu0 0
    %4231 = vperm.xlu0 %4230, %v4177
    %v4232 = vpop.permute.xlu0 %4231
    %4235 = vset.pattern.permute.xlu0 0
    %4236 = vperm.xlu0 %4235, %v4178
    %v4237 = vpop.permute.xlu0 %4236
    %4240 = vset.pattern.permute.xlu0 0
    %4241 = vperm.xlu0 %4240, %v4179
    %v4242 = vpop.permute.xlu0 %4241
    %4245 = vset.pattern.permute.xlu0 0
    %4246 = vperm.xlu0 %4245, %v4180
    %v4247 = vpop.permute.xlu0 %4246
    %v4249 = vadd.f32 %v4201, %v4232
    %v4250 = vadd.f32 %v4202, %v4232
    %v4251 = vadd.f32 %v4203, %v4232
    %v4252 = vadd.f32 %v4204, %v4232
    %v4253 = vadd.f32 %v4205, %v4232
    %v4254 = vadd.f32 %v4206, %v4232
    %v4255 = vadd.f32 %v4207, %v4232
    %v4256 = vadd.f32 %v4208, %v4237
    %v4257 = vadd.f32 %v4209, %v4237
    %v4258 = vadd.f32 %v4210, %v4237
    %v4259 = vadd.f32 %v4211, %v4237
    %v4260 = vadd.f32 %v4212, %v4237
    %v4261 = vadd.f32 %v4213, %v4237
    %v4262 = vadd.f32 %v4214, %v4237
    %v4263 = vadd.f32 %v4215, %v4242
    %v4264 = vadd.f32 %v4216, %v4242
    %v4265 = vadd.f32 %v4217, %v4242
    %v4266 = vadd.f32 %v4218, %v4242
    %v4267 = vadd.f32 %v4219, %v4242
    %v4268 = vadd.f32 %v4220, %v4242
    %v4269 = vadd.f32 %v4221, %v4242
    %v4270 = vadd.f32 %v4222, %v4247
    %v4271 = vadd.f32 %v4223, %v4247
    %v4272 = vadd.f32 %v4224, %v4247
    %v4273 = vadd.f32 %v4225, %v4247
    %v4274 = vadd.f32 %v4226, %v4247
    %v4275 = vadd.f32 %v4227, %v4247
    %v4276 = vadd.f32 %v4228, %v4247
    %4277 = vst [vmem:[%s14 + $0xa80] sm:$0xff] %v4249
    %4278 = vst [vmem:[%s14 + $0xa88] sm:$0xff] %v4250
    %4279 = vst [vmem:[%s14 + $0xa90] sm:$0xff] %v4251
    %4280 = vst [vmem:[%s14 + $0xa98] sm:$0xff] %v4252
    %4281 = vst [vmem:[%s14 + $0xaa0] sm:$0xff] %v4253
    %4282 = vst [vmem:[%s14 + $0xaa8] sm:$0xff] %v4254
    %4283 = vst.msk [vmem:[%s14 + $0xab0] sm:$0xff] %vm313, %v4255
    %4284 = vst [vmem:[%s14 + $0xab8] sm:$0xff] %v4256
    %4285 = vst [vmem:[%s14 + $0xac0] sm:$0xff] %v4257
    %4286 = vst [vmem:[%s14 + $0xac8] sm:$0xff] %v4258
    %4287 = vst [vmem:[%s14 + $0xad0] sm:$0xff] %v4259
    %4288 = vst [vmem:[%s14 + $0xad8] sm:$0xff] %v4260
    %4289 = vst [vmem:[%s14 + $0xae0] sm:$0xff] %v4261
    %4290 = vst.msk [vmem:[%s14 + $0xae8] sm:$0xff] %vm313, %v4262
    %4291 = vst [vmem:[%s14 + $0xaf0] sm:$0xff] %v4263
    %4292 = vst [vmem:[%s14 + $0xaf8] sm:$0xff] %v4264
    %4293 = vst [vmem:[%s14 + $0xb00] sm:$0xff] %v4265
    %4294 = vst [vmem:[%s14 + $0xb08] sm:$0xff] %v4266
    %4295 = vst [vmem:[%s14 + $0xb10] sm:$0xff] %v4267
    %4296 = vst [vmem:[%s14 + $0xb18] sm:$0xff] %v4268
    %4297 = vst.msk [vmem:[%s14 + $0xb20] sm:$0xff] %vm313, %v4269
    %4298 = vst [vmem:[%s14 + $0xb28] sm:$0xff] %v4270
    %4299 = vst [vmem:[%s14 + $0xb30] sm:$0xff] %v4271
    %4300 = vst [vmem:[%s14 + $0xb38] sm:$0xff] %v4272
    %4301 = vst [vmem:[%s14 + $0xb40] sm:$0xff] %v4273
    %4302 = vst [vmem:[%s14 + $0xb48] sm:$0xff] %v4274
    %4303 = vst [vmem:[%s14 + $0xb50] sm:$0xff] %v4275
    %4304 = vst.msk [vmem:[%s14 + $0xb58] sm:$0xff] %vm313, %v4276
    %v4305 = vld [vmem:[#allocation16] sm:$0xff]
    %v4306 = vld [vmem:[#allocation16 + $0x8] sm:$0xff]
    %v4307 = vld [vmem:[#allocation16 + $0x10] sm:$0xff]
    %v4308 = vld [vmem:[#allocation16 + $0x18] sm:$0xff]
    %v4309 = vld [vmem:[#allocation16 + $0x20] sm:$0xff]
    %v4310 = vld [vmem:[#allocation16 + $0x28] sm:$0xff]
    %v4311 = vld [vmem:[#allocation16 + $0x30] sm:$0xff]
    %v4312 = vld [vmem:[#allocation16 + $0x38] sm:$0xff]
    %v4313 = vld [vmem:[#allocation16 + $0x40] sm:$0xff]
    %v4314 = vld [vmem:[#allocation16 + $0x48] sm:$0xff]
    %v4315 = vld [vmem:[#allocation16 + $0x50] sm:$0xff]
    %v4316 = vld [vmem:[#allocation16 + $0x58] sm:$0xff]
    %v4317 = vld [vmem:[#allocation16 + $0x60] sm:$0xff]
    %v4318 = vld [vmem:[#allocation16 + $0x68] sm:$0xff]
    %v4319 = vld [vmem:[#allocation16 + $0x70] sm:$0xff]
    %v4320 = vld [vmem:[#allocation16 + $0x78] sm:$0xff]
    %v4321 = vld [vmem:[#allocation16 + $0x80] sm:$0xff]
    %v4322 = vld [vmem:[#allocation16 + $0x88] sm:$0xff]
    %v4323 = vld [vmem:[#allocation16 + $0x90] sm:$0xff]
    %v4324 = vld [vmem:[#allocation16 + $0x98] sm:$0xff]
    %v4325 = vld [vmem:[#allocation16 + $0xa0] sm:$0xff]
    %v4326 = vld [vmem:[#allocation16 + $0xa8] sm:$0xff]
    %v4327 = vld [vmem:[#allocation16 + $0xb0] sm:$0xff]
    %v4328 = vld [vmem:[#allocation16 + $0xb8] sm:$0xff]
    %v4329 = vld [vmem:[#allocation16 + $0xc0] sm:$0xff]
    %v4330 = vld [vmem:[#allocation16 + $0xc8] sm:$0xff]
    %v4331 = vld [vmem:[#allocation16 + $0xd0] sm:$0xff]
    %v4332 = vld [vmem:[#allocation16 + $0xd8] sm:$0xff]
    %v4333 = vadd.f32 %v4305, %v4306
    %v4334 = vadd.f32 %v4333, %v4307
    %v4335 = vadd.f32 %v4334, %v4308
    %v4336 = vadd.f32 %v4335, %v4309
    %v4337 = vadd.f32 %v4336, %v4310
    %v4338 = vsel %vm313, %v4311, 0.0
    %v4339 = vadd.f32 %v4337, %v4338
    %4340 = vadd.xlane.f32.xlu0 %v4339
    %v4341 = vpop.xlane.xlu0 %4340
    %v4342 = vadd.f32 %v4312, %v4313
    %v4343 = vadd.f32 %v4342, %v4314
    %v4344 = vadd.f32 %v4343, %v4315
    %v4345 = vadd.f32 %v4344, %v4316
    %v4346 = vadd.f32 %v4345, %v4317
    %v4347 = vsel %vm313, %v4318, 0.0
    %v4348 = vadd.f32 %v4346, %v4347
    %4349 = vadd.xlane.f32.xlu0 %v4348
    %v4350 = vpop.xlane.xlu0 %4349
    %v4351 = vadd.f32 %v4319, %v4320
    %v4352 = vadd.f32 %v4351, %v4321
    %v4353 = vadd.f32 %v4352, %v4322
    %v4354 = vadd.f32 %v4353, %v4323
    %v4355 = vadd.f32 %v4354, %v4324
    %v4356 = vsel %vm313, %v4325, 0.0
    %v4357 = vadd.f32 %v4355, %v4356
    %4358 = vadd.xlane.f32.xlu0 %v4357
    %v4359 = vpop.xlane.xlu0 %4358
    %v4360 = vadd.f32 %v4326, %v4327
    %v4361 = vadd.f32 %v4360, %v4328
    %v4362 = vadd.f32 %v4361, %v4329
    %v4363 = vadd.f32 %v4362, %v4330
    %v4364 = vadd.f32 %v4363, %v4331
    %v4365 = vsel %vm313, %v4332, 0.0
    %v4366 = vadd.f32 %v4364, %v4365
    %4367 = vadd.xlane.f32.xlu0 %v4366
    %v4368 = vpop.xlane.xlu0 %4367
    %v4369 = vmul.f32 %v4341, 0.0012755102
    %v4370 = vmul.f32 %v4350, 0.0012755102
    %v4371 = vmul.f32 %v4359, 0.0012755102
    %v4372 = vmul.f32 %v4368, 0.0012755102
    %v4373 = vsub.f32 %v4305, %v4369
    %v4374 = vsub.f32 %v4306, %v4369
    %v4375 = vsub.f32 %v4307, %v4369
    %v4376 = vsub.f32 %v4308, %v4369
    %v4377 = vsub.f32 %v4309, %v4369
    %v4378 = vsub.f32 %v4310, %v4369
    %v4379 = vsub.f32 %v4311, %v4369
    %v4380 = vsub.f32 %v4312, %v4370
    %v4381 = vsub.f32 %v4313, %v4370
    %v4382 = vsub.f32 %v4314, %v4370
    %v4383 = vsub.f32 %v4315, %v4370
    %v4384 = vsub.f32 %v4316, %v4370
    %v4385 = vsub.f32 %v4317, %v4370
    %v4386 = vsub.f32 %v4318, %v4370
    %v4387 = vsub.f32 %v4319, %v4371
    %v4388 = vsub.f32 %v4320, %v4371
    %v4389 = vsub.f32 %v4321, %v4371
    %v4390 = vsub.f32 %v4322, %v4371
    %v4391 = vsub.f32 %v4323, %v4371
    %v4392 = vsub.f32 %v4324, %v4371
    %v4393 = vsub.f32 %v4325, %v4371
    %v4394 = vsub.f32 %v4326, %v4372
    %v4395 = vsub.f32 %v4327, %v4372
    %v4396 = vsub.f32 %v4328, %v4372
    %v4397 = vsub.f32 %v4329, %v4372
    %v4398 = vsub.f32 %v4330, %v4372
    %v4399 = vsub.f32 %v4331, %v4372
    %v4400 = vsub.f32 %v4332, %v4372
    %v4401 = vmul.f32 %v4373, %v4373
    %v4402 = vmul.f32 %v4374, %v4374
    %v4403 = vmul.f32 %v4375, %v4375
    %v4404 = vmul.f32 %v4376, %v4376
    %v4405 = vmul.f32 %v4377, %v4377
    %v4406 = vmul.f32 %v4378, %v4378
    %v4407 = vmul.f32 %v4379, %v4379
    %v4408 = vmul.f32 %v4380, %v4380
    %v4409 = vmul.f32 %v4381, %v4381
    %v4410 = vmul.f32 %v4382, %v4382
    %v4411 = vmul.f32 %v4383, %v4383
    %v4412 = vmul.f32 %v4384, %v4384
    %v4413 = vmul.f32 %v4385, %v4385
    %v4414 = vmul.f32 %v4386, %v4386
    %v4415 = vmul.f32 %v4387, %v4387
    %v4416 = vmul.f32 %v4388, %v4388
    %v4417 = vmul.f32 %v4389, %v4389
    %v4418 = vmul.f32 %v4390, %v4390
    %v4419 = vmul.f32 %v4391, %v4391
    %v4420 = vmul.f32 %v4392, %v4392
    %v4421 = vmul.f32 %v4393, %v4393
    %v4422 = vmul.f32 %v4394, %v4394
    %v4423 = vmul.f32 %v4395, %v4395
    %v4424 = vmul.f32 %v4396, %v4396
    %v4425 = vmul.f32 %v4397, %v4397
    %v4426 = vmul.f32 %v4398, %v4398
    %v4427 = vmul.f32 %v4399, %v4399
    %v4428 = vmul.f32 %v4400, %v4400
    %v4429 = vadd.f32 %v4401, %v4402
    %v4430 = vadd.f32 %v4429, %v4403
    %v4431 = vadd.f32 %v4430, %v4404
    %v4432 = vadd.f32 %v4431, %v4405
    %v4433 = vadd.f32 %v4432, %v4406
    %v4434 = vsel %vm313, %v4407, 0.0
    %v4435 = vadd.f32 %v4433, %v4434
    %4436 = vadd.xlane.f32.xlu0 %v4435
    %v4437 = vpop.xlane.xlu0 %4436
    %v4438 = vadd.f32 %v4408, %v4409
    %v4439 = vadd.f32 %v4438, %v4410
    %v4440 = vadd.f32 %v4439, %v4411
    %v4441 = vadd.f32 %v4440, %v4412
    %v4442 = vadd.f32 %v4441, %v4413
    %v4443 = vsel %vm313, %v4414, 0.0
    %v4444 = vadd.f32 %v4442, %v4443
    %4445 = vadd.xlane.f32.xlu0 %v4444
    %v4446 = vpop.xlane.xlu0 %4445
    %v4447 = vadd.f32 %v4415, %v4416
    %v4448 = vadd.f32 %v4447, %v4417
    %v4449 = vadd.f32 %v4448, %v4418
    %v4450 = vadd.f32 %v4449, %v4419
    %v4451 = vadd.f32 %v4450, %v4420
    %v4452 = vsel %vm313, %v4421, 0.0
    %v4453 = vadd.f32 %v4451, %v4452
    %4454 = vadd.xlane.f32.xlu0 %v4453
    %v4455 = vpop.xlane.xlu0 %4454
    %v4456 = vadd.f32 %v4422, %v4423
    %v4457 = vadd.f32 %v4456, %v4424
    %v4458 = vadd.f32 %v4457, %v4425
    %v4459 = vadd.f32 %v4458, %v4426
    %v4460 = vadd.f32 %v4459, %v4427
    %v4461 = vsel %vm313, %v4428, 0.0
    %v4462 = vadd.f32 %v4460, %v4461
    %4463 = vadd.xlane.f32.xlu0 %v4462
    %v4464 = vpop.xlane.xlu0 %4463
    %v4465 = vmul.f32 %v4437, 0.0012755102
    %v4466 = vmul.f32 %v4446, 0.0012755102
    %v4467 = vmul.f32 %v4455, 0.0012755102
    %v4468 = vmul.f32 %v4464, 0.0012755102
    %v4469 = vld [vmem:[%s12 + $0x1a0] sm:$0xff]
    %v4470 = vld [vmem:[%s12 + $0x1a8] sm:$0xff]
    %v4471 = vld [vmem:[%s12 + $0x1b0] sm:$0xff]
    %v4472 = vld [vmem:[%s12 + $0x1b8] sm:$0xff]
    %v4473 = vld [vmem:[%s13 + $0x1a0] sm:$0xff]
    %v4474 = vld [vmem:[%s13 + $0x1a8] sm:$0xff]
    %v4475 = vld [vmem:[%s13 + $0x1b0] sm:$0xff]
    %v4476 = vld [vmem:[%s13 + $0x1b8] sm:$0xff]
    %v4477 = vadd.f32 %v4465, 1e-05
    %v4478 = vadd.f32 %v4466, 1e-05
    %v4479 = vadd.f32 %v4467, 1e-05
    %v4480 = vadd.f32 %v4468, 1e-05
    %v4481 = vrsqrt.pop %v4477
    %v4482 = vrsqrt.pop %v4478
    %v4483 = vrsqrt.pop %v4479
    %v4484 = vrsqrt.pop %v4480
    %v4485 = vmul.f32 %v4481, %v4469
    %v4486 = vmul.f32 %v4482, %v4470
    %v4487 = vmul.f32 %v4483, %v4471
    %v4488 = vmul.f32 %v4484, %v4472
    %v4489 = vmul.f32 %v4369, %v4485
    %v4490 = vmul.f32 %v4370, %v4486
    %v4491 = vmul.f32 %v4371, %v4487
    %v4492 = vmul.f32 %v4372, %v4488
    %v4493 = vsub.f32 %v4473, %v4489
    %v4494 = vsub.f32 %v4474, %v4490
    %v4495 = vsub.f32 %v4475, %v4491
    %v4496 = vsub.f32 %v4476, %v4492
    %4498 = vset.pattern.permute.xlu0 0
    %4499 = vperm.xlu0 %4498, %v4485
    %v4500 = vpop.permute.xlu0 %4499
    %4503 = vset.pattern.permute.xlu0 0
    %4504 = vperm.xlu0 %4503, %v4486
    %v4505 = vpop.permute.xlu0 %4504
    %4508 = vset.pattern.permute.xlu0 0
    %4509 = vperm.xlu0 %4508, %v4487
    %v4510 = vpop.permute.xlu0 %4509
    %4513 = vset.pattern.permute.xlu0 0
    %4514 = vperm.xlu0 %4513, %v4488
    %v4515 = vpop.permute.xlu0 %4514
    %v4517 = vmul.f32 %v4305, %v4500
    %v4518 = vmul.f32 %v4306, %v4500
    %v4519 = vmul.f32 %v4307, %v4500
    %v4520 = vmul.f32 %v4308, %v4500
    %v4521 = vmul.f32 %v4309, %v4500
    %v4522 = vmul.f32 %v4310, %v4500
    %v4523 = vmul.f32 %v4311, %v4500
    %v4524 = vmul.f32 %v4312, %v4505
    %v4525 = vmul.f32 %v4313, %v4505
    %v4526 = vmul.f32 %v4314, %v4505
    %v4527 = vmul.f32 %v4315, %v4505
    %v4528 = vmul.f32 %v4316, %v4505
    %v4529 = vmul.f32 %v4317, %v4505
    %v4530 = vmul.f32 %v4318, %v4505
    %v4531 = vmul.f32 %v4319, %v4510
    %v4532 = vmul.f32 %v4320, %v4510
    %v4533 = vmul.f32 %v4321, %v4510
    %v4534 = vmul.f32 %v4322, %v4510
    %v4535 = vmul.f32 %v4323, %v4510
    %v4536 = vmul.f32 %v4324, %v4510
    %v4537 = vmul.f32 %v4325, %v4510
    %v4538 = vmul.f32 %v4326, %v4515
    %v4539 = vmul.f32 %v4327, %v4515
    %v4540 = vmul.f32 %v4328, %v4515
    %v4541 = vmul.f32 %v4329, %v4515
    %v4542 = vmul.f32 %v4330, %v4515
    %v4543 = vmul.f32 %v4331, %v4515
    %v4544 = vmul.f32 %v4332, %v4515
    %4546 = vset.pattern.permute.xlu0 0
    %4547 = vperm.xlu0 %4546, %v4493
    %v4548 = vpop.permute.xlu0 %4547
    %4551 = vset.pattern.permute.xlu0 0
    %4552 = vperm.xlu0 %4551, %v4494
    %v4553 = vpop.permute.xlu0 %4552
    %4556 = vset.pattern.permute.xlu0 0
    %4557 = vperm.xlu0 %4556, %v4495
    %v4558 = vpop.permute.xlu0 %4557
    %4561 = vset.pattern.permute.xlu0 0
    %4562 = vperm.xlu0 %4561, %v4496
    %v4563 = vpop.permute.xlu0 %4562
    %v4565 = vadd.f32 %v4517, %v4548
    %v4566 = vadd.f32 %v4518, %v4548
    %v4567 = vadd.f32 %v4519, %v4548
    %v4568 = vadd.f32 %v4520, %v4548
    %v4569 = vadd.f32 %v4521, %v4548
    %v4570 = vadd.f32 %v4522, %v4548
    %v4571 = vadd.f32 %v4523, %v4548
    %v4572 = vadd.f32 %v4524, %v4553
    %v4573 = vadd.f32 %v4525, %v4553
    %v4574 = vadd.f32 %v4526, %v4553
    %v4575 = vadd.f32 %v4527, %v4553
    %v4576 = vadd.f32 %v4528, %v4553
    %v4577 = vadd.f32 %v4529, %v4553
    %v4578 = vadd.f32 %v4530, %v4553
    %v4579 = vadd.f32 %v4531, %v4558
    %v4580 = vadd.f32 %v4532, %v4558
    %v4581 = vadd.f32 %v4533, %v4558
    %v4582 = vadd.f32 %v4534, %v4558
    %v4583 = vadd.f32 %v4535, %v4558
    %v4584 = vadd.f32 %v4536, %v4558
    %v4585 = vadd.f32 %v4537, %v4558
    %v4586 = vadd.f32 %v4538, %v4563
    %v4587 = vadd.f32 %v4539, %v4563
    %v4588 = vadd.f32 %v4540, %v4563
    %v4589 = vadd.f32 %v4541, %v4563
    %v4590 = vadd.f32 %v4542, %v4563
    %v4591 = vadd.f32 %v4543, %v4563
    %v4592 = vadd.f32 %v4544, %v4563
    %4593 = vst [vmem:[%s14 + $0xb60] sm:$0xff] %v4565
    %4594 = vst [vmem:[%s14 + $0xb68] sm:$0xff] %v4566
    %4595 = vst [vmem:[%s14 + $0xb70] sm:$0xff] %v4567
    %4596 = vst [vmem:[%s14 + $0xb78] sm:$0xff] %v4568
    %4597 = vst [vmem:[%s14 + $0xb80] sm:$0xff] %v4569
    %4598 = vst [vmem:[%s14 + $0xb88] sm:$0xff] %v4570
    %4599 = vst.msk [vmem:[%s14 + $0xb90] sm:$0xff] %vm313, %v4571
    %4600 = vst [vmem:[%s14 + $0xb98] sm:$0xff] %v4572
    %4601 = vst [vmem:[%s14 + $0xba0] sm:$0xff] %v4573
    %4602 = vst [vmem:[%s14 + $0xba8] sm:$0xff] %v4574
    %4603 = vst [vmem:[%s14 + $0xbb0] sm:$0xff] %v4575
    %4604 = vst [vmem:[%s14 + $0xbb8] sm:$0xff] %v4576
    %4605 = vst [vmem:[%s14 + $0xbc0] sm:$0xff] %v4577
    %4606 = vst.msk [vmem:[%s14 + $0xbc8] sm:$0xff] %vm313, %v4578
    %4607 = vst [vmem:[%s14 + $0xbd0] sm:$0xff] %v4579
    %4608 = vst [vmem:[%s14 + $0xbd8] sm:$0xff] %v4580
    %4609 = vst [vmem:[%s14 + $0xbe0] sm:$0xff] %v4581
    %4610 = vst [vmem:[%s14 + $0xbe8] sm:$0xff] %v4582
    %4611 = vst [vmem:[%s14 + $0xbf0] sm:$0xff] %v4583
    %4612 = vst [vmem:[%s14 + $0xbf8] sm:$0xff] %v4584
    %4613 = vst.msk [vmem:[%s14 + $0xc00] sm:$0xff] %vm313, %v4585
    %4614 = vst [vmem:[%s14 + $0xc08] sm:$0xff] %v4586
    %4615 = vst [vmem:[%s14 + $0xc10] sm:$0xff] %v4587
    %4616 = vst [vmem:[%s14 + $0xc18] sm:$0xff] %v4588
    %4617 = vst [vmem:[%s14 + $0xc20] sm:$0xff] %v4589
    %4618 = vst [vmem:[%s14 + $0xc28] sm:$0xff] %v4590
    %4619 = vst [vmem:[%s14 + $0xc30] sm:$0xff] %v4591
    %4620 = vst.msk [vmem:[%s14 + $0xc38] sm:$0xff] %vm313, %v4592
    %v4621 = vld [vmem:[#allocation18] sm:$0xff]
    %v4622 = vld [vmem:[#allocation18 + $0x8] sm:$0xff]
    %v4623 = vld [vmem:[#allocation18 + $0x10] sm:$0xff]
    %v4624 = vld [vmem:[#allocation18 + $0x18] sm:$0xff]
    %v4625 = vld [vmem:[#allocation18 + $0x20] sm:$0xff]
    %v4626 = vld [vmem:[#allocation18 + $0x28] sm:$0xff]
    %v4627 = vld [vmem:[#allocation18 + $0x30] sm:$0xff]
    %v4628 = vld [vmem:[#allocation18 + $0x38] sm:$0xff]
    %v4629 = vld [vmem:[#allocation18 + $0x40] sm:$0xff]
    %v4630 = vld [vmem:[#allocation18 + $0x48] sm:$0xff]
    %v4631 = vld [vmem:[#allocation18 + $0x50] sm:$0xff]
    %v4632 = vld [vmem:[#allocation18 + $0x58] sm:$0xff]
    %v4633 = vld [vmem:[#allocation18 + $0x60] sm:$0xff]
    %v4634 = vld [vmem:[#allocation18 + $0x68] sm:$0xff]
    %v4635 = vld [vmem:[#allocation18 + $0x70] sm:$0xff]
    %v4636 = vld [vmem:[#allocation18 + $0x78] sm:$0xff]
    %v4637 = vld [vmem:[#allocation18 + $0x80] sm:$0xff]
    %v4638 = vld [vmem:[#allocation18 + $0x88] sm:$0xff]
    %v4639 = vld [vmem:[#allocation18 + $0x90] sm:$0xff]
    %v4640 = vld [vmem:[#allocation18 + $0x98] sm:$0xff]
    %v4641 = vld [vmem:[#allocation18 + $0xa0] sm:$0xff]
    %v4642 = vld [vmem:[#allocation18 + $0xa8] sm:$0xff]
    %v4643 = vld [vmem:[#allocation18 + $0xb0] sm:$0xff]
    %v4644 = vld [vmem:[#allocation18 + $0xb8] sm:$0xff]
    %v4645 = vld [vmem:[#allocation18 + $0xc0] sm:$0xff]
    %v4646 = vld [vmem:[#allocation18 + $0xc8] sm:$0xff]
    %v4647 = vld [vmem:[#allocation18 + $0xd0] sm:$0xff]
    %v4648 = vld [vmem:[#allocation18 + $0xd8] sm:$0xff]
    %v4649 = vadd.f32 %v4621, %v4622
    %v4650 = vadd.f32 %v4649, %v4623
    %v4651 = vadd.f32 %v4650, %v4624
    %v4652 = vadd.f32 %v4651, %v4625
    %v4653 = vadd.f32 %v4652, %v4626
    %v4654 = vsel %vm313, %v4627, 0.0
    %v4655 = vadd.f32 %v4653, %v4654
    %4656 = vadd.xlane.f32.xlu0 %v4655
    %v4657 = vpop.xlane.xlu0 %4656
    %v4658 = vadd.f32 %v4628, %v4629
    %v4659 = vadd.f32 %v4658, %v4630
    %v4660 = vadd.f32 %v4659, %v4631
    %v4661 = vadd.f32 %v4660, %v4632
    %v4662 = vadd.f32 %v4661, %v4633
    %v4663 = vsel %vm313, %v4634, 0.0
    %v4664 = vadd.f32 %v4662, %v4663
    %4665 = vadd.xlane.f32.xlu0 %v4664
    %v4666 = vpop.xlane.xlu0 %4665
    %v4667 = vadd.f32 %v4635, %v4636
    %v4668 = vadd.f32 %v4667, %v4637
    %v4669 = vadd.f32 %v4668, %v4638
    %v4670 = vadd.f32 %v4669, %v4639
    %v4671 = vadd.f32 %v4670, %v4640
    %v4672 = vsel %vm313, %v4641, 0.0
    %v4673 = vadd.f32 %v4671, %v4672
    %4674 = vadd.xlane.f32.xlu0 %v4673
    %v4675 = vpop.xlane.xlu0 %4674
    %v4676 = vadd.f32 %v4642, %v4643
    %v4677 = vadd.f32 %v4676, %v4644
    %v4678 = vadd.f32 %v4677, %v4645
    %v4679 = vadd.f32 %v4678, %v4646
    %v4680 = vadd.f32 %v4679, %v4647
    %v4681 = vsel %vm313, %v4648, 0.0
    %v4682 = vadd.f32 %v4680, %v4681
    %4683 = vadd.xlane.f32.xlu0 %v4682
    %v4684 = vpop.xlane.xlu0 %4683
    %v4685 = vmul.f32 %v4657, 0.0012755102
    %v4686 = vmul.f32 %v4666, 0.0012755102
    %v4687 = vmul.f32 %v4675, 0.0012755102
    %v4688 = vmul.f32 %v4684, 0.0012755102
    %v4689 = vsub.f32 %v4621, %v4685
    %v4690 = vsub.f32 %v4622, %v4685
    %v4691 = vsub.f32 %v4623, %v4685
    %v4692 = vsub.f32 %v4624, %v4685
    %v4693 = vsub.f32 %v4625, %v4685
    %v4694 = vsub.f32 %v4626, %v4685
    %v4695 = vsub.f32 %v4627, %v4685
    %v4696 = vsub.f32 %v4628, %v4686
    %v4697 = vsub.f32 %v4629, %v4686
    %v4698 = vsub.f32 %v4630, %v4686
    %v4699 = vsub.f32 %v4631, %v4686
    %v4700 = vsub.f32 %v4632, %v4686
    %v4701 = vsub.f32 %v4633, %v4686
    %v4702 = vsub.f32 %v4634, %v4686
    %v4703 = vsub.f32 %v4635, %v4687
    %v4704 = vsub.f32 %v4636, %v4687
    %v4705 = vsub.f32 %v4637, %v4687
    %v4706 = vsub.f32 %v4638, %v4687
    %v4707 = vsub.f32 %v4639, %v4687
    %v4708 = vsub.f32 %v4640, %v4687
    %v4709 = vsub.f32 %v4641, %v4687
    %v4710 = vsub.f32 %v4642, %v4688
    %v4711 = vsub.f32 %v4643, %v4688
    %v4712 = vsub.f32 %v4644, %v4688
    %v4713 = vsub.f32 %v4645, %v4688
    %v4714 = vsub.f32 %v4646, %v4688
    %v4715 = vsub.f32 %v4647, %v4688
    %v4716 = vsub.f32 %v4648, %v4688
    %v4717 = vmul.f32 %v4689, %v4689
    %v4718 = vmul.f32 %v4690, %v4690
    %v4719 = vmul.f32 %v4691, %v4691
    %v4720 = vmul.f32 %v4692, %v4692
    %v4721 = vmul.f32 %v4693, %v4693
    %v4722 = vmul.f32 %v4694, %v4694
    %v4723 = vmul.f32 %v4695, %v4695
    %v4724 = vmul.f32 %v4696, %v4696
    %v4725 = vmul.f32 %v4697, %v4697
    %v4726 = vmul.f32 %v4698, %v4698
    %v4727 = vmul.f32 %v4699, %v4699
    %v4728 = vmul.f32 %v4700, %v4700
    %v4729 = vmul.f32 %v4701, %v4701
    %v4730 = vmul.f32 %v4702, %v4702
    %v4731 = vmul.f32 %v4703, %v4703
    %v4732 = vmul.f32 %v4704, %v4704
    %v4733 = vmul.f32 %v4705, %v4705
    %v4734 = vmul.f32 %v4706, %v4706
    %v4735 = vmul.f32 %v4707, %v4707
    %v4736 = vmul.f32 %v4708, %v4708
    %v4737 = vmul.f32 %v4709, %v4709
    %v4738 = vmul.f32 %v4710, %v4710
    %v4739 = vmul.f32 %v4711, %v4711
    %v4740 = vmul.f32 %v4712, %v4712
    %v4741 = vmul.f32 %v4713, %v4713
    %v4742 = vmul.f32 %v4714, %v4714
    %v4743 = vmul.f32 %v4715, %v4715
    %v4744 = vmul.f32 %v4716, %v4716
    %v4745 = vadd.f32 %v4717, %v4718
    %v4746 = vadd.f32 %v4745, %v4719
    %v4747 = vadd.f32 %v4746, %v4720
    %v4748 = vadd.f32 %v4747, %v4721
    %v4749 = vadd.f32 %v4748, %v4722
    %v4750 = vsel %vm313, %v4723, 0.0
    %v4751 = vadd.f32 %v4749, %v4750
    %4752 = vadd.xlane.f32.xlu0 %v4751
    %v4753 = vpop.xlane.xlu0 %4752
    %v4754 = vadd.f32 %v4724, %v4725
    %v4755 = vadd.f32 %v4754, %v4726
    %v4756 = vadd.f32 %v4755, %v4727
    %v4757 = vadd.f32 %v4756, %v4728
    %v4758 = vadd.f32 %v4757, %v4729
    %v4759 = vsel %vm313, %v4730, 0.0
    %v4760 = vadd.f32 %v4758, %v4759
    %4761 = vadd.xlane.f32.xlu0 %v4760
    %v4762 = vpop.xlane.xlu0 %4761
    %v4763 = vadd.f32 %v4731, %v4732
    %v4764 = vadd.f32 %v4763, %v4733
    %v4765 = vadd.f32 %v4764, %v4734
    %v4766 = vadd.f32 %v4765, %v4735
    %v4767 = vadd.f32 %v4766, %v4736
    %v4768 = vsel %vm313, %v4737, 0.0
    %v4769 = vadd.f32 %v4767, %v4768
    %4770 = vadd.xlane.f32.xlu0 %v4769
    %v4771 = vpop.xlane.xlu0 %4770
    %v4772 = vadd.f32 %v4738, %v4739
    %v4773 = vadd.f32 %v4772, %v4740
    %v4774 = vadd.f32 %v4773, %v4741
    %v4775 = vadd.f32 %v4774, %v4742
    %v4776 = vadd.f32 %v4775, %v4743
    %v4777 = vsel %vm313, %v4744, 0.0
    %v4778 = vadd.f32 %v4776, %v4777
    %4779 = vadd.xlane.f32.xlu0 %v4778
    %v4780 = vpop.xlane.xlu0 %4779
    %v4781 = vmul.f32 %v4753, 0.0012755102
    %v4782 = vmul.f32 %v4762, 0.0012755102
    %v4783 = vmul.f32 %v4771, 0.0012755102
    %v4784 = vmul.f32 %v4780, 0.0012755102
    %v4785 = vld [vmem:[%s12 + $0x1c0] sm:$0xff]
    %v4786 = vld [vmem:[%s12 + $0x1c8] sm:$0xff]
    %v4787 = vld [vmem:[%s12 + $0x1d0] sm:$0xff]
    %v4788 = vld [vmem:[%s12 + $0x1d8] sm:$0xff]
    %v4789 = vld [vmem:[%s13 + $0x1c0] sm:$0xff]
    %v4790 = vld [vmem:[%s13 + $0x1c8] sm:$0xff]
    %v4791 = vld [vmem:[%s13 + $0x1d0] sm:$0xff]
    %v4792 = vld [vmem:[%s13 + $0x1d8] sm:$0xff]
    %v4793 = vadd.f32 %v4781, 1e-05
    %v4794 = vadd.f32 %v4782, 1e-05
    %v4795 = vadd.f32 %v4783, 1e-05
    %v4796 = vadd.f32 %v4784, 1e-05
    %v4797 = vrsqrt.pop %v4793
    %v4798 = vrsqrt.pop %v4794
    %v4799 = vrsqrt.pop %v4795
    %v4800 = vrsqrt.pop %v4796
    %v4801 = vmul.f32 %v4797, %v4785
    %v4802 = vmul.f32 %v4798, %v4786
    %v4803 = vmul.f32 %v4799, %v4787
    %v4804 = vmul.f32 %v4800, %v4788
    %v4805 = vmul.f32 %v4685, %v4801
    %v4806 = vmul.f32 %v4686, %v4802
    %v4807 = vmul.f32 %v4687, %v4803
    %v4808 = vmul.f32 %v4688, %v4804
    %v4809 = vsub.f32 %v4789, %v4805
    %v4810 = vsub.f32 %v4790, %v4806
    %v4811 = vsub.f32 %v4791, %v4807
    %v4812 = vsub.f32 %v4792, %v4808
    %4814 = vset.pattern.permute.xlu0 0
    %4815 = vperm.xlu0 %4814, %v4801
    %v4816 = vpop.permute.xlu0 %4815
    %4819 = vset.pattern.permute.xlu0 0
    %4820 = vperm.xlu0 %4819, %v4802
    %v4821 = vpop.permute.xlu0 %4820
    %4824 = vset.pattern.permute.xlu0 0
    %4825 = vperm.xlu0 %4824, %v4803
    %v4826 = vpop.permute.xlu0 %4825
    %4829 = vset.pattern.permute.xlu0 0
    %4830 = vperm.xlu0 %4829, %v4804
    %v4831 = vpop.permute.xlu0 %4830
    %v4833 = vmul.f32 %v4621, %v4816
    %v4834 = vmul.f32 %v4622, %v4816
    %v4835 = vmul.f32 %v4623, %v4816
    %v4836 = vmul.f32 %v4624, %v4816
    %v4837 = vmul.f32 %v4625, %v4816
    %v4838 = vmul.f32 %v4626, %v4816
    %v4839 = vmul.f32 %v4627, %v4816
    %v4840 = vmul.f32 %v4628, %v4821
    %v4841 = vmul.f32 %v4629, %v4821
    %v4842 = vmul.f32 %v4630, %v4821
    %v4843 = vmul.f32 %v4631, %v4821
    %v4844 = vmul.f32 %v4632, %v4821
    %v4845 = vmul.f32 %v4633, %v4821
    %v4846 = vmul.f32 %v4634, %v4821
    %v4847 = vmul.f32 %v4635, %v4826
    %v4848 = vmul.f32 %v4636, %v4826
    %v4849 = vmul.f32 %v4637, %v4826
    %v4850 = vmul.f32 %v4638, %v4826
    %v4851 = vmul.f32 %v4639, %v4826
    %v4852 = vmul.f32 %v4640, %v4826
    %v4853 = vmul.f32 %v4641, %v4826
    %v4854 = vmul.f32 %v4642, %v4831
    %v4855 = vmul.f32 %v4643, %v4831
    %v4856 = vmul.f32 %v4644, %v4831
    %v4857 = vmul.f32 %v4645, %v4831
    %v4858 = vmul.f32 %v4646, %v4831
    %v4859 = vmul.f32 %v4647, %v4831
    %v4860 = vmul.f32 %v4648, %v4831
    %4862 = vset.pattern.permute.xlu0 0
    %4863 = vperm.xlu0 %4862, %v4809
    %v4864 = vpop.permute.xlu0 %4863
    %4867 = vset.pattern.permute.xlu0 0
    %4868 = vperm.xlu0 %4867, %v4810
    %v4869 = vpop.permute.xlu0 %4868
    %4872 = vset.pattern.permute.xlu0 0
    %4873 = vperm.xlu0 %4872, %v4811
    %v4874 = vpop.permute.xlu0 %4873
    %4877 = vset.pattern.permute.xlu0 0
    %4878 = vperm.xlu0 %4877, %v4812
    %v4879 = vpop.permute.xlu0 %4878
    %v4881 = vadd.f32 %v4833, %v4864
    %v4882 = vadd.f32 %v4834, %v4864
    %v4883 = vadd.f32 %v4835, %v4864
    %v4884 = vadd.f32 %v4836, %v4864
    %v4885 = vadd.f32 %v4837, %v4864
    %v4886 = vadd.f32 %v4838, %v4864
    %v4887 = vadd.f32 %v4839, %v4864
    %v4888 = vadd.f32 %v4840, %v4869
    %v4889 = vadd.f32 %v4841, %v4869
    %v4890 = vadd.f32 %v4842, %v4869
    %v4891 = vadd.f32 %v4843, %v4869
    %v4892 = vadd.f32 %v4844, %v4869
    %v4893 = vadd.f32 %v4845, %v4869
    %v4894 = vadd.f32 %v4846, %v4869
    %v4895 = vadd.f32 %v4847, %v4874
    %v4896 = vadd.f32 %v4848, %v4874
    %v4897 = vadd.f32 %v4849, %v4874
    %v4898 = vadd.f32 %v4850, %v4874
    %v4899 = vadd.f32 %v4851, %v4874
    %v4900 = vadd.f32 %v4852, %v4874
    %v4901 = vadd.f32 %v4853, %v4874
    %v4902 = vadd.f32 %v4854, %v4879
    %v4903 = vadd.f32 %v4855, %v4879
    %v4904 = vadd.f32 %v4856, %v4879
    %v4905 = vadd.f32 %v4857, %v4879
    %v4906 = vadd.f32 %v4858, %v4879
    %v4907 = vadd.f32 %v4859, %v4879
    %v4908 = vadd.f32 %v4860, %v4879
    %4909 = vst [vmem:[%s14 + $0xc40] sm:$0xff] %v4881
    %4910 = vst [vmem:[%s14 + $0xc48] sm:$0xff] %v4882
    %4911 = vst [vmem:[%s14 + $0xc50] sm:$0xff] %v4883
    %4912 = vst [vmem:[%s14 + $0xc58] sm:$0xff] %v4884
    %4913 = vst [vmem:[%s14 + $0xc60] sm:$0xff] %v4885
    %4914 = vst [vmem:[%s14 + $0xc68] sm:$0xff] %v4886
    %4915 = vst.msk [vmem:[%s14 + $0xc70] sm:$0xff] %vm313, %v4887
    %4916 = vst [vmem:[%s14 + $0xc78] sm:$0xff] %v4888
    %4917 = vst [vmem:[%s14 + $0xc80] sm:$0xff] %v4889
    %4918 = vst [vmem:[%s14 + $0xc88] sm:$0xff] %v4890
    %4919 = vst [vmem:[%s14 + $0xc90] sm:$0xff] %v4891
    %4920 = vst [vmem:[%s14 + $0xc98] sm:$0xff] %v4892
    %4921 = vst [vmem:[%s14 + $0xca0] sm:$0xff] %v4893
    %4922 = vst.msk [vmem:[%s14 + $0xca8] sm:$0xff] %vm313, %v4894
    %4923 = vst [vmem:[%s14 + $0xcb0] sm:$0xff] %v4895
    %4924 = vst [vmem:[%s14 + $0xcb8] sm:$0xff] %v4896
    %4925 = vst [vmem:[%s14 + $0xcc0] sm:$0xff] %v4897
    %4926 = vst [vmem:[%s14 + $0xcc8] sm:$0xff] %v4898
    %4927 = vst [vmem:[%s14 + $0xcd0] sm:$0xff] %v4899
    %4928 = vst [vmem:[%s14 + $0xcd8] sm:$0xff] %v4900
    %4929 = vst.msk [vmem:[%s14 + $0xce0] sm:$0xff] %vm313, %v4901
    %4930 = vst [vmem:[%s14 + $0xce8] sm:$0xff] %v4902
    %4931 = vst [vmem:[%s14 + $0xcf0] sm:$0xff] %v4903
    %4932 = vst [vmem:[%s14 + $0xcf8] sm:$0xff] %v4904
    %4933 = vst [vmem:[%s14 + $0xd00] sm:$0xff] %v4905
    %4934 = vst [vmem:[%s14 + $0xd08] sm:$0xff] %v4906
    %4935 = vst [vmem:[%s14 + $0xd10] sm:$0xff] %v4907
    %4936 = vst.msk [vmem:[%s14 + $0xd18] sm:$0xff] %vm313, %v4908
    // Predicated region
    $region102: #{tpu_custom_call.1} parent=1 // pred_check
      _
    $region103: #{tpu_custom_call.1} parent=1 // pred_check_branch
      %4938 = sbr.rel (0) target = $region105
    $region104: #{tpu_custom_call.1} parent=1 // pred_region
      _
    $region105: #{tpu_custom_call.1} parent=1 // pred_fallthru
      _
    // Predicated region
    $region106: #{tpu_custom_call.1} parent=1 // pred_check
      _
    $region107: #{tpu_custom_call.1} parent=1 // pred_check_branch
      %4940 = sbr.rel (0) target = $region109
    $region108: #{tpu_custom_call.1} parent=1 // pred_region
      _
    $region109: #{tpu_custom_call.1} parent=1 // pred_fallthru
      _
    %4941 = vsyncpa [#allocation3], 1
    %4942 = vsyncpa [#allocation5], 1
    %4943 = vsyncpa [#allocation8], 1
    %4944 = vsyncpa [#allocation11], 1
    %4945 = vsyncpa [#allocation14], 1
    %4946 = vsyncpa [#allocation17], 1

</llo_original>
